<compile_context>
chip_gen: v7x
topology: tpu7x:2x2x1
jax: 0.10.0
libtpu: 0.0.40
codegen_flags: <defaults>
</compile_context>

<pallas_src>
import numpy as np

import jax
import jax.numpy as jnp
from jax.experimental import pallas as pl
from jax.experimental.pallas import tpu as pltpu


# ---------------------------------------------------------------------------
# Fused kernel for one batch tile of `bt` images.
#
# x_ref layout (built by the wrapper):
#   row  phase*6*bt + m*bt + b ,  lane  kh*28 + jin
#     = x[b, 4*m + 2*s + p + kh, jin]          with phase = 2*s + p
# so one matmul against the banded conv1 weight produces, for every pool
# phase, every pooled-H-row parity s, every image and every (pooled W, chan)
# lane, the pre-pool conv1 output.  All later stages stay 2-D and in VMEM.
# ---------------------------------------------------------------------------
def _net_kernel(x_ref, w1_ref, b1_ref, w2_ref, b2_ref,
                wfc1_ref, bfc1_ref, wfc2_ref, bfc2_ref, o_ref):
    bt = o_ref.shape[0]              # batch-tile size (multiple of 16)
    f32 = jnp.float32
    cdt = w1_ref.dtype               # matmul operand dtype (bf16 or f32)

    # ---- conv1 (1->10, k=5) + 2x2 max-pool + ReLU: ONE matmul ---------------
    # acc columns: q*128 + j2*10 + c   (q = pool phase along W, lanes >=120 pad)
    acc = jnp.dot(x_ref[...], w1_ref[...], preferred_element_type=f32)  # (24bt,256)
    wmax = jnp.maximum(acc[:, :128], acc[:, 128:])        # pool along W (aligned)
    b1 = b1_ref[...]                                      # (1, 128), pad lanes 0
    h1 = []                                               # h1[s]: (6*bt, 128)
    for s in range(2):                                    # parity of pooled H row
        blk = wmax[s * 12 * bt:(s + 1) * 12 * bt]
        pooled = jnp.maximum(blk[:6 * bt], blk[6 * bt:])  # pool along H (over p)
        # relu(max_pool(conv1)+bias): bias/relu commute with the max
        h1.append(jnp.maximum(pooled + b1, 0.0).astype(cdt))
    # h1[s][m*bt + b, j2*10 + c] == pooled conv1 activation at H-row 2m+s

    # ---- conv2 (10->20, k=5) + 2x2 max-pool + ReLU; K = 128 -----------------
    # acc2 columns: q*128 + no*20 + co   (lanes 80..127 / 208..255 are padding)
    b2 = b2_ref[...]                                      # (1, 128), pad lanes 0
    pooled2 = None
    for p in range(2):                                    # pool phase along H
        acc2 = None
        for kh in range(5):                               # conv kernel row
            t = p + kh                                    # pre-pool H offset
            g = h1[t % 2][(t // 2) * bt:(t // 2 + 4) * bt, :]    # (4*bt, 128)
            d = jnp.dot(g, w2_ref[kh], preferred_element_type=f32)  # (4*bt, 256)
            acc2 = d if acc2 is None else acc2 + d
        wmax2 = jnp.maximum(acc2[:, :128], acc2[:, 128:])
        pooled2 = wmax2 if pooled2 is None else jnp.maximum(pooled2, wmax2)
    h2 = jnp.maximum(pooled2 + b2, 0.0).astype(cdt)       # (4*bt, 128)
    # h2[mo*bt + b, no*20 + co] == pooled conv2 activation (dropout2d = id)

    # ---- fc1 (320->50) + ReLU  (torch NCHW flatten folded into the weight) --
    z1 = None
    for mo in range(4):
        d = jnp.dot(h2[mo * bt:(mo + 1) * bt, :], wfc1_ref[mo],
                    preferred_element_type=f32)
        z1 = d if z1 is None else z1 + d
    a1 = jnp.maximum(z1 + bfc1_ref[...], 0.0)             # (bt, 50); dropout=id

    # ---- fc2 (50->10) + log_softmax (all-f32, negligible FLOPs) -------------
    z2 = jnp.dot(a1, wfc2_ref[...], preferred_element_type=f32) + bfc2_ref[...]
    zmax = jnp.max(z2, axis=-1, keepdims=True)
    lse = zmax + jnp.log(jnp.sum(jnp.exp(z2 - zmax), axis=-1, keepdims=True))
    o_ref[...] = (z2 - lse).astype(o_ref.dtype)


# ---------------------------------------------------------------------------
# Parameter preparation (one-time, at init): torch layout -> kernel layout.
# ---------------------------------------------------------------------------
def init_raw_params(key):
    """Random parameters in the exact PyTorch layouts of `Net`."""
    ks = jax.random.split(key, 8)
    return {
        "conv1_w": jax.random.normal(ks[0], (10, 1, 5, 5), jnp.float32) * 0.1,
        "conv1_b": jax.random.normal(ks[1], (10,), jnp.float32) * 0.1,
        "conv2_w": jax.random.normal(ks[2], (20, 10, 5, 5), jnp.float32) * 0.05,
        "conv2_b": jax.random.normal(ks[3], (20,), jnp.float32) * 0.1,
        "fc1_w": jax.random.normal(ks[4], (50, 320), jnp.float32) * 0.05,
        "fc1_b": jax.random.normal(ks[5], (50,), jnp.float32) * 0.1,
        "fc2_w": jax.random.normal(ks[6], (10, 50), jnp.float32) * 0.1,
        "fc2_b": jax.random.normal(ks[7], (10,), jnp.float32) * 0.1,
    }


def prepare_params(raw, dtype=jnp.bfloat16):
    """Fold im2col, 2x2-pool phases, 128-lane padding and the NCHW flatten
    into the weights.  `dtype` is the MXU operand dtype (bf16 or f32)."""
    w1 = np.asarray(raw["conv1_w"], np.float32)   # (10, 1, 5, 5)
    b1 = np.asarray(raw["conv1_b"], np.float32)
    w2 = np.asarray(raw["conv2_w"], np.float32)   # (20, 10, 5, 5)
    b2 = np.asarray(raw["conv2_b"], np.float32)
    wf1 = np.asarray(raw["fc1_w"], np.float32)    # (50, 320)
    bf1 = np.asarray(raw["fc1_b"], np.float32)
    wf2 = np.asarray(raw["fc2_w"], np.float32)    # (10, 50)
    bf2 = np.asarray(raw["fc2_b"], np.float32)

    # conv1 banded weight, all 5 taps concatenated along rows: (140, 256)
    #   row = kh*28 + jin ; col = q*128 + j2*10 + c  (col%128 >= 120 is padding)
    col = np.arange(256)
    q1, rem1 = col // 128, col % 128
    j21, c1 = rem1 // 10, rem1 % 10
    vcol1 = rem1 < 120
    jin = np.arange(28)[:, None]                           # (28, 1)
    kw1 = jin - 2 * j21[None, :] - q1[None, :]              # (28, 256)
    ok1 = (kw1 >= 0) & (kw1 < 5) & vcol1[None, :]
    kw1c = np.clip(kw1, 0, 4)
    w1cat = np.zeros((140, 256), np.float32)
    for kh in range(5):
        tap = w1[:, 0, kh, :]                               # (10, 5) = [c, kw]
        w1cat[kh * 28:(kh + 1) * 28, :] = np.where(ok1, tap[c1[None, :], kw1c], 0.0)

    # conv2 banded weight: (5, 128, 256)
    #   row = j2*10 + ci (rows >= 120 padding) ; col = q*128 + no*20 + co
    row = np.arange(128)
    j22, ci2 = row // 10, row % 10
    vrow2 = row < 120
    col2 = np.arange(256)
    q2, rem2 = col2 // 128, col2 % 128
    no2, co2 = rem2 // 20, rem2 % 20
    vcol2 = rem2 < 80
    kw2 = j22[:, None] - 2 * no2[None, :] - q2[None, :]     # (128, 256)
    ok2 = (kw2 >= 0) & (kw2 < 5) & vrow2[:, None] & vcol2[None, :]
    kw2c = np.clip(kw2, 0, 4)
    w2k = np.zeros((5, 128, 256), np.float32)
    for kh in range(5):
        tap = w2[:, :, kh, :]                               # (20, 10, 5)
        w2k[kh] = np.where(ok2, tap[co2[None, :], ci2[:, None], kw2c], 0.0)

    # fc1: torch flatten index f = co*16 + mo*4 + no ; kernel lane = no*20 + co
    # (rows 80..127 of each block are padding and stay zero)
    r = np.arange(80)
    no3, co3 = r // 20, r % 20
    wfc1k = np.zeros((4, 128, 50), np.float32)
    for mo in range(4):
        feat = co3 * 16 + mo * 4 + no3
        wfc1k[mo, :80, :] = wf1[:, feat].T

    # biases, tiled per lane group and zero-padded to 128 lanes
    b1p = np.zeros((1, 128), np.float32); b1p[0, :120] = np.tile(b1, 12)
    b2p = np.zeros((1, 128), np.float32); b2p[0, :80] = np.tile(b2, 4)

    return {
        "w1": jnp.asarray(w1cat, dtype=dtype),
        "b1": jnp.asarray(b1p),                             # (1, 128) f32
        "w2": jnp.asarray(w2k, dtype=dtype),
        "b2": jnp.asarray(b2p),                             # (1, 128) f32
        "wfc1": jnp.asarray(wfc1k, dtype=dtype),
        "bfc1": jnp.asarray(bf1[None, :]),                  # (1, 50) f32
        "wfc2": jnp.asarray(wf2.T.copy()),                  # (50, 10) f32
        "bfc2": jnp.asarray(bf2[None, :]),                  # (1, 10) f32
    }


def _pick_bt(B):
    """Batch tile: multiple of 16 (bf16 sublane alignment), capped at 128,
    and >= 2 grid tiles for moderate/large B (keeps both v7x cores busy)."""
    if B >= 256:
        return 128
    if B >= 32:
        return 16 * ((B + 31) // 32)
    return 16 * ((B + 15) // 16)


# ---------------------------------------------------------------------------
# Forward pass (eval semantics of Net.forward)
# ---------------------------------------------------------------------------
@jax.jit
def net_forward(x_nchw, kp):
    B = x_nchw.shape[0]
    bt = _pick_bt(B)
    nt = (B + bt - 1) // bt
    bp = nt * bt
    cdt = kp["w1"].dtype            # matmul operand dtype (bf16 or f32)

    x = x_nchw.reshape(B, 28, 28).astype(cdt)
    if bp != B:
        x = jnp.pad(x, ((0, bp - B), (0, 0), (0, 0)))

    # Banded conv1 LHS (cheap XLA shuffle of the raw input only, in bf16):
    #   xr[tile*24*bt + (2s+p)*6*bt + m*bt + b, kh*28 + jin]
    #       = x[tile*bt + b, 4*m + 2*s + p + kh, jin]
    planes = [x[:, t:t + 24:4, :] for t in range(8)]        # each (bp, 6, 28)
    phases = []
    for s in range(2):
        for p in range(2):
            base = 2 * s + p
            phases.append(jnp.concatenate([planes[base + kh] for kh in range(5)],
                                          axis=-1))          # (bp, 6, 140)
    xp = jnp.stack(phases, axis=0)                            # (4, bp, 6, 140)
    xp = xp.reshape(4, nt, bt, 6, 140).transpose(1, 0, 3, 2, 4)  # (nt,4,6,bt,140)
    xr = xp.reshape(nt * 24 * bt, 140)

    out = pl.pallas_call(
        _net_kernel,
        out_shape=jax.ShapeDtypeStruct((bp, 10), jnp.float32),
        grid=(nt,),
        in_specs=[
            pl.BlockSpec((24 * bt, 140), lambda i: (i, 0)),   # banded input
            pl.BlockSpec((140, 256), lambda i: (0, 0)),       # conv1 banded (cat)
            pl.BlockSpec((1, 128), lambda i: (0, 0)),         # conv1 bias
            pl.BlockSpec((5, 128, 256), lambda i: (0, 0, 0)), # conv2 banded
            pl.BlockSpec((1, 128), lambda i: (0, 0)),         # conv2 bias
            pl.BlockSpec((4, 128, 50), lambda i: (0, 0, 0)),  # fc1 (permuted)
            pl.BlockSpec((1, 50), lambda i: (0, 0)),          # fc1 bias
            pl.BlockSpec((50, 10), lambda i: (0, 0)),         # fc2
            pl.BlockSpec((1, 10), lambda i: (0, 0)),          # fc2 bias
        ],
        out_specs=pl.BlockSpec((bt, 10), lambda i: (i, 0)),
        compiler_params=pltpu.CompilerParams(
            dimension_semantics=("parallel",),
            vmem_limit_bytes=48 * 1024 * 1024),
    )(xr, kp["w1"], kp["b1"], kp["w2"], kp["b2"],
      kp["wfc1"], kp["bfc1"], kp["wfc2"], kp["bfc2"])
    return out[:B]


# ---------------------------------------------------------------------------
# Plain-XLA reference of the same forward pass (for correctness cross-checks)
# ---------------------------------------------------------------------------
def net_forward_reference(x_nchw, raw):
    x = x_nchw.astype(jnp.float32)
    y = jax.lax.conv_general_dilated(
        x, raw["conv1_w"], window_strides=(1, 1), padding="VALID",
        dimension_numbers=("NCHW", "OIHW", "NCHW"))
    y = y + raw["conv1_b"][None, :, None, None]
    y = jax.lax.reduce_window(y, -jnp.inf, jax.lax.max,
                              (1, 1, 2, 2), (1, 1, 2, 2), "VALID")
    y = jnp.maximum(y, 0.0)
    y = jax.lax.conv_general_dilated(
        y, raw["conv2_w"], window_strides=(1, 1), padding="VALID",
        dimension_numbers=("NCHW", "OIHW", "NCHW"))
    y = y + raw["conv2_b"][None, :, None, None]
    y = jax.lax.reduce_window(y, -jnp.inf, jax.lax.max,
                              (1, 1, 2, 2), (1, 1, 2, 2), "VALID")
    y = jnp.maximum(y, 0.0)
    y = y.reshape(y.shape[0], 320)                       # torch x.view(-1, 320)
    y = jnp.maximum(y @ raw["fc1_w"].T + raw["fc1_b"], 0.0)
    y = y @ raw["fc2_w"].T + raw["fc2_b"]
    return jax.nn.log_softmax(y, axis=-1)


if __name__ == "__main__":
    key = jax.random.PRNGKey(0)
    k_param, k_input = jax.random.split(key)
    raw = init_raw_params(k_param)

    # MNIST-shaped input is forced by fc1's 320 = 20 * 4 * 4
    x = jax.random.normal(k_input, (2, 1, 28, 28), jnp.float32)
    ref = jax.block_until_ready(net_forward_reference(x, raw))

    # (a) all-f32 kernel path: tight tolerance validates the 128-padded banded
    #     layouts / flatten permutation independently of bf16 rounding.
    kp_f32 = prepare_params(raw, dtype=jnp.float32)
    out_f32 = jax.block_until_ready(net_forward(x, kp_f32))
    assert out_f32.shape == (2, 10), out_f32.shape
    np.testing.assert_allclose(np.asarray(out_f32), np.asarray(ref),
                               atol=5e-4, rtol=5e-4)

    # (b) bf16-operand production path: loose tolerance.
    kp = prepare_params(raw, dtype=jnp.bfloat16)
    out = jax.block_until_ready(net_forward(x, kp))
    assert out.shape == (2, 10), out.shape
    row_sums = jnp.sum(jnp.exp(out), axis=1)          # log_softmax sanity
    assert jnp.allclose(row_sums, 1.0, atol=1e-3), row_sums
    np.testing.assert_allclose(np.asarray(out), np.asarray(ref),
                               atol=5e-2, rtol=5e-2)

    print("KERNEL_OK")
</pallas_src>

<mosaic_0001>
module attributes {stable_mosaic.version = 11 : i64} {
  func.func @_net_kernel(%arg0: i32, %arg1: memref<384x140xf32, #tpu.memory_space<vmem>>, %arg2: memref<140x256xf32, #tpu.memory_space<vmem>>, %arg3: memref<1x128xf32, #tpu.memory_space<vmem>>, %arg4: memref<5x128x256xf32, #tpu.memory_space<vmem>>, %arg5: memref<1x128xf32, #tpu.memory_space<vmem>>, %arg6: memref<4x128x50xf32, #tpu.memory_space<vmem>>, %arg7: memref<1x50xf32, #tpu.memory_space<vmem>>, %arg8: memref<50x10xf32, #tpu.memory_space<vmem>>, %arg9: memref<1x10xf32, #tpu.memory_space<vmem>>, %arg10: memref<16x10xf32, #tpu.memory_space<vmem>>) attributes {dimension_semantics = [#tpu.dimension_semantics<parallel>], iteration_bounds = array<i64: 1>, scalar_prefetch = 0 : i64, scratch_operands = 0 : i64, tpu.core_type = #tpu.core_type<tc>, window_params = [{transform_indices = @transform_0, window_bounds = array<i64: 384, 140>}, {pipeline_mode = #tpu.pipeline_mode<synchronous>, transform_indices = @transform_1, window_bounds = array<i64: 140, 256>}, {pipeline_mode = #tpu.pipeline_mode<synchronous>, transform_indices = @transform_2, window_bounds = array<i64: 1, 128>}, {pipeline_mode = #tpu.pipeline_mode<synchronous>, transform_indices = @transform_3, window_bounds = array<i64: 5, 128, 256>}, {pipeline_mode = #tpu.pipeline_mode<synchronous>, transform_indices = @transform_4, window_bounds = array<i64: 1, 128>}, {pipeline_mode = #tpu.pipeline_mode<synchronous>, transform_indices = @transform_5, window_bounds = array<i64: 4, 128, 50>}, {pipeline_mode = #tpu.pipeline_mode<synchronous>, transform_indices = @transform_6, window_bounds = array<i64: 1, 50>}, {pipeline_mode = #tpu.pipeline_mode<synchronous>, transform_indices = @transform_7, window_bounds = array<i64: 50, 10>}, {pipeline_mode = #tpu.pipeline_mode<synchronous>, transform_indices = @transform_8, window_bounds = array<i64: 1, 10>}, {transform_indices = @transform_9, window_bounds = array<i64: 16, 10>}]} {
    %c0 = arith.constant 0 : index
    %c0_0 = arith.constant 0 : index
    %0 = vector.load %arg1[%c0, %c0_0] : memref<384x140xf32, #tpu.memory_space<vmem>>, vector<384x140xf32>
    %c0_1 = arith.constant 0 : index
    %c0_2 = arith.constant 0 : index
    %1 = vector.load %arg2[%c0_1, %c0_2] : memref<140x256xf32, #tpu.memory_space<vmem>>, vector<140x256xf32>
    %cst = arith.constant dense<0.000000e+00> : vector<384x256xf32>
    %2 = tpu.matmul %0, %1, %cst {dimension_numbers = #tpu.dot_dimension_numbers<[1], [0], [0], [1], [0, 0, 1, 1], [], []>} : vector<384x140xf32>, vector<140x256xf32>, vector<384x256xf32> -> vector<384x256xf32>
    %3 = vector.extract_strided_slice %2 {offsets = [0, 0], sizes = [384, 128], strides = [1, 1]} : vector<384x256xf32> to vector<384x128xf32>
    %4 = vector.extract_strided_slice %2 {offsets = [0, 128], sizes = [384, 128], strides = [1, 1]} : vector<384x256xf32> to vector<384x128xf32>
    %5 = arith.maximumf %3, %4 : vector<384x128xf32>
    %c0_3 = arith.constant 0 : index
    %c0_4 = arith.constant 0 : index
    %6 = vector.load %arg3[%c0_3, %c0_4] : memref<1x128xf32, #tpu.memory_space<vmem>>, vector<1x128xf32>
    %7 = vector.extract_strided_slice %5 {offsets = [0, 0], sizes = [192, 128], strides = [1, 1]} : vector<384x128xf32> to vector<192x128xf32>
    %8 = vector.extract_strided_slice %7 {offsets = [0, 0], sizes = [96, 128], strides = [1, 1]} : vector<192x128xf32> to vector<96x128xf32>
    %9 = vector.extract_strided_slice %7 {offsets = [96, 0], sizes = [96, 128], strides = [1, 1]} : vector<192x128xf32> to vector<96x128xf32>
    %10 = arith.maximumf %8, %9 : vector<96x128xf32>
    %11 = vector.broadcast %6 : vector<1x128xf32> to vector<96x128xf32>
    %12 = arith.addf %10, %11 : vector<96x128xf32>
    %cst_5 = arith.constant 0.000000e+00 : f32
    %13 = vector.broadcast %cst_5 : f32 to vector<96x128xf32>
    %14 = arith.maximumf %12, %13 : vector<96x128xf32>
    %15 = vector.extract_strided_slice %5 {offsets = [192, 0], sizes = [192, 128], strides = [1, 1]} : vector<384x128xf32> to vector<192x128xf32>
    %16 = vector.extract_strided_slice %15 {offsets = [0, 0], sizes = [96, 128], strides = [1, 1]} : vector<192x128xf32> to vector<96x128xf32>
    %17 = vector.extract_strided_slice %15 {offsets = [96, 0], sizes = [96, 128], strides = [1, 1]} : vector<192x128xf32> to vector<96x128xf32>
    %18 = arith.maximumf %16, %17 : vector<96x128xf32>
    %19 = vector.broadcast %6 : vector<1x128xf32> to vector<96x128xf32>
    %20 = arith.addf %18, %19 : vector<96x128xf32>
    %cst_6 = arith.constant 0.000000e+00 : f32
    %21 = vector.broadcast %cst_6 : f32 to vector<96x128xf32>
    %22 = arith.maximumf %20, %21 : vector<96x128xf32>
    %c0_7 = arith.constant 0 : index
    %c0_8 = arith.constant 0 : index
    %23 = vector.load %arg5[%c0_7, %c0_8] : memref<1x128xf32, #tpu.memory_space<vmem>>, vector<1x128xf32>
    %24 = vector.extract_strided_slice %14 {offsets = [0, 0], sizes = [64, 128], strides = [1, 1]} : vector<96x128xf32> to vector<64x128xf32>
    %c0_9 = arith.constant 0 : index
    %c0_10 = arith.constant 0 : index
    %c0_11 = arith.constant 0 : index
    %25 = vector.load %arg4[%c0_9, %c0_10, %c0_11] : memref<5x128x256xf32, #tpu.memory_space<vmem>>, vector<1x128x256xf32>
    %26 = vector.shape_cast %25 : vector<1x128x256xf32> to vector<128x256xf32>
    %cst_12 = arith.constant dense<0.000000e+00> : vector<64x256xf32>
    %27 = tpu.matmul %24, %26, %cst_12 {dimension_numbers = #tpu.dot_dimension_numbers<[1], [0], [0], [1], [0, 0, 1, 1], [], []>} : vector<64x128xf32>, vector<128x256xf32>, vector<64x256xf32> -> vector<64x256xf32>
    %28 = vector.extract_strided_slice %22 {offsets = [0, 0], sizes = [64, 128], strides = [1, 1]} : vector<96x128xf32> to vector<64x128xf32>
    %c1 = arith.constant 1 : index
    %c0_13 = arith.constant 0 : index
    %c0_14 = arith.constant 0 : index
    %29 = vector.load %arg4[%c1, %c0_13, %c0_14] : memref<5x128x256xf32, #tpu.memory_space<vmem>>, vector<1x128x256xf32>
    %30 = vector.shape_cast %29 : vector<1x128x256xf32> to vector<128x256xf32>
    %cst_15 = arith.constant dense<0.000000e+00> : vector<64x256xf32>
    %31 = tpu.matmul %28, %30, %cst_15 {dimension_numbers = #tpu.dot_dimension_numbers<[1], [0], [0], [1], [0, 0, 1, 1], [], []>} : vector<64x128xf32>, vector<128x256xf32>, vector<64x256xf32> -> vector<64x256xf32>
    %32 = arith.addf %27, %31 : vector<64x256xf32>
    %33 = vector.extract_strided_slice %14 {offsets = [16, 0], sizes = [64, 128], strides = [1, 1]} : vector<96x128xf32> to vector<64x128xf32>
    %c2 = arith.constant 2 : index
    %c0_16 = arith.constant 0 : index
    %c0_17 = arith.constant 0 : index
    %34 = vector.load %arg4[%c2, %c0_16, %c0_17] : memref<5x128x256xf32, #tpu.memory_space<vmem>>, vector<1x128x256xf32>
    %35 = vector.shape_cast %34 : vector<1x128x256xf32> to vector<128x256xf32>
    %cst_18 = arith.constant dense<0.000000e+00> : vector<64x256xf32>
    %36 = tpu.matmul %33, %35, %cst_18 {dimension_numbers = #tpu.dot_dimension_numbers<[1], [0], [0], [1], [0, 0, 1, 1], [], []>} : vector<64x128xf32>, vector<128x256xf32>, vector<64x256xf32> -> vector<64x256xf32>
    %37 = arith.addf %32, %36 : vector<64x256xf32>
    %38 = vector.extract_strided_slice %22 {offsets = [16, 0], sizes = [64, 128], strides = [1, 1]} : vector<96x128xf32> to vector<64x128xf32>
    %c3 = arith.constant 3 : index
    %c0_19 = arith.constant 0 : index
    %c0_20 = arith.constant 0 : index
    %39 = vector.load %arg4[%c3, %c0_19, %c0_20] : memref<5x128x256xf32, #tpu.memory_space<vmem>>, vector<1x128x256xf32>
    %40 = vector.shape_cast %39 : vector<1x128x256xf32> to vector<128x256xf32>
    %cst_21 = arith.constant dense<0.000000e+00> : vector<64x256xf32>
    %41 = tpu.matmul %38, %40, %cst_21 {dimension_numbers = #tpu.dot_dimension_numbers<[1], [0], [0], [1], [0, 0, 1, 1], [], []>} : vector<64x128xf32>, vector<128x256xf32>, vector<64x256xf32> -> vector<64x256xf32>
    %42 = arith.addf %37, %41 : vector<64x256xf32>
    %43 = vector.extract_strided_slice %14 {offsets = [32, 0], sizes = [64, 128], strides = [1, 1]} : vector<96x128xf32> to vector<64x128xf32>
    %c4 = arith.constant 4 : index
    %c0_22 = arith.constant 0 : index
    %c0_23 = arith.constant 0 : index
    %44 = vector.load %arg4[%c4, %c0_22, %c0_23] : memref<5x128x256xf32, #tpu.memory_space<vmem>>, vector<1x128x256xf32>
    %45 = vector.shape_cast %44 : vector<1x128x256xf32> to vector<128x256xf32>
    %cst_24 = arith.constant dense<0.000000e+00> : vector<64x256xf32>
    %46 = tpu.matmul %43, %45, %cst_24 {dimension_numbers = #tpu.dot_dimension_numbers<[1], [0], [0], [1], [0, 0, 1, 1], [], []>} : vector<64x128xf32>, vector<128x256xf32>, vector<64x256xf32> -> vector<64x256xf32>
    %47 = arith.addf %42, %46 : vector<64x256xf32>
    %48 = vector.extract_strided_slice %47 {offsets = [0, 0], sizes = [64, 128], strides = [1, 1]} : vector<64x256xf32> to vector<64x128xf32>
    %49 = vector.extract_strided_slice %47 {offsets = [0, 128], sizes = [64, 128], strides = [1, 1]} : vector<64x256xf32> to vector<64x128xf32>
    %50 = arith.maximumf %48, %49 : vector<64x128xf32>
    %51 = vector.extract_strided_slice %22 {offsets = [0, 0], sizes = [64, 128], strides = [1, 1]} : vector<96x128xf32> to vector<64x128xf32>
    %c0_25 = arith.constant 0 : index
    %c0_26 = arith.constant 0 : index
    %c0_27 = arith.constant 0 : index
    %52 = vector.load %arg4[%c0_25, %c0_26, %c0_27] : memref<5x128x256xf32, #tpu.memory_space<vmem>>, vector<1x128x256xf32>
    %53 = vector.shape_cast %52 : vector<1x128x256xf32> to vector<128x256xf32>
    %cst_28 = arith.constant dense<0.000000e+00> : vector<64x256xf32>
    %54 = tpu.matmul %51, %53, %cst_28 {dimension_numbers = #tpu.dot_dimension_numbers<[1], [0], [0], [1], [0, 0, 1, 1], [], []>} : vector<64x128xf32>, vector<128x256xf32>, vector<64x256xf32> -> vector<64x256xf32>
    %55 = vector.extract_strided_slice %14 {offsets = [16, 0], sizes = [64, 128], strides = [1, 1]} : vector<96x128xf32> to vector<64x128xf32>
    %c1_29 = arith.constant 1 : index
    %c0_30 = arith.constant 0 : index
    %c0_31 = arith.constant 0 : index
    %56 = vector.load %arg4[%c1_29, %c0_30, %c0_31] : memref<5x128x256xf32, #tpu.memory_space<vmem>>, vector<1x128x256xf32>
    %57 = vector.shape_cast %56 : vector<1x128x256xf32> to vector<128x256xf32>
    %cst_32 = arith.constant dense<0.000000e+00> : vector<64x256xf32>
    %58 = tpu.matmul %55, %57, %cst_32 {dimension_numbers = #tpu.dot_dimension_numbers<[1], [0], [0], [1], [0, 0, 1, 1], [], []>} : vector<64x128xf32>, vector<128x256xf32>, vector<64x256xf32> -> vector<64x256xf32>
    %59 = arith.addf %54, %58 : vector<64x256xf32>
    %60 = vector.extract_strided_slice %22 {offsets = [16, 0], sizes = [64, 128], strides = [1, 1]} : vector<96x128xf32> to vector<64x128xf32>
    %c2_33 = arith.constant 2 : index
    %c0_34 = arith.constant 0 : index
    %c0_35 = arith.constant 0 : index
    %61 = vector.load %arg4[%c2_33, %c0_34, %c0_35] : memref<5x128x256xf32, #tpu.memory_space<vmem>>, vector<1x128x256xf32>
    %62 = vector.shape_cast %61 : vector<1x128x256xf32> to vector<128x256xf32>
    %cst_36 = arith.constant dense<0.000000e+00> : vector<64x256xf32>
    %63 = tpu.matmul %60, %62, %cst_36 {dimension_numbers = #tpu.dot_dimension_numbers<[1], [0], [0], [1], [0, 0, 1, 1], [], []>} : vector<64x128xf32>, vector<128x256xf32>, vector<64x256xf32> -> vector<64x256xf32>
    %64 = arith.addf %59, %63 : vector<64x256xf32>
    %65 = vector.extract_strided_slice %14 {offsets = [32, 0], sizes = [64, 128], strides = [1, 1]} : vector<96x128xf32> to vector<64x128xf32>
    %c3_37 = arith.constant 3 : index
    %c0_38 = arith.constant 0 : index
    %c0_39 = arith.constant 0 : index
    %66 = vector.load %arg4[%c3_37, %c0_38, %c0_39] : memref<5x128x256xf32, #tpu.memory_space<vmem>>, vector<1x128x256xf32>
    %67 = vector.shape_cast %66 : vector<1x128x256xf32> to vector<128x256xf32>
    %cst_40 = arith.constant dense<0.000000e+00> : vector<64x256xf32>
    %68 = tpu.matmul %65, %67, %cst_40 {dimension_numbers = #tpu.dot_dimension_numbers<[1], [0], [0], [1], [0, 0, 1, 1], [], []>} : vector<64x128xf32>, vector<128x256xf32>, vector<64x256xf32> -> vector<64x256xf32>
    %69 = arith.addf %64, %68 : vector<64x256xf32>
    %70 = vector.extract_strided_slice %22 {offsets = [32, 0], sizes = [64, 128], strides = [1, 1]} : vector<96x128xf32> to vector<64x128xf32>
    %c4_41 = arith.constant 4 : index
    %c0_42 = arith.constant 0 : index
    %c0_43 = arith.constant 0 : index
    %71 = vector.load %arg4[%c4_41, %c0_42, %c0_43] : memref<5x128x256xf32, #tpu.memory_space<vmem>>, vector<1x128x256xf32>
    %72 = vector.shape_cast %71 : vector<1x128x256xf32> to vector<128x256xf32>
    %cst_44 = arith.constant dense<0.000000e+00> : vector<64x256xf32>
    %73 = tpu.matmul %70, %72, %cst_44 {dimension_numbers = #tpu.dot_dimension_numbers<[1], [0], [0], [1], [0, 0, 1, 1], [], []>} : vector<64x128xf32>, vector<128x256xf32>, vector<64x256xf32> -> vector<64x256xf32>
    %74 = arith.addf %69, %73 : vector<64x256xf32>
    %75 = vector.extract_strided_slice %74 {offsets = [0, 0], sizes = [64, 128], strides = [1, 1]} : vector<64x256xf32> to vector<64x128xf32>
    %76 = vector.extract_strided_slice %74 {offsets = [0, 128], sizes = [64, 128], strides = [1, 1]} : vector<64x256xf32> to vector<64x128xf32>
    %77 = arith.maximumf %75, %76 : vector<64x128xf32>
    %78 = arith.maximumf %50, %77 : vector<64x128xf32>
    %79 = vector.broadcast %23 : vector<1x128xf32> to vector<64x128xf32>
    %80 = arith.addf %78, %79 : vector<64x128xf32>
    %cst_45 = arith.constant 0.000000e+00 : f32
    %81 = vector.broadcast %cst_45 : f32 to vector<64x128xf32>
    %82 = arith.maximumf %80, %81 : vector<64x128xf32>
    %83 = vector.extract_strided_slice %82 {offsets = [0, 0], sizes = [16, 128], strides = [1, 1]} : vector<64x128xf32> to vector<16x128xf32>
    %c0_46 = arith.constant 0 : index
    %c0_47 = arith.constant 0 : index
    %c0_48 = arith.constant 0 : index
    %84 = vector.load %arg6[%c0_46, %c0_47, %c0_48] : memref<4x128x50xf32, #tpu.memory_space<vmem>>, vector<1x128x50xf32>
    %85 = vector.shape_cast %84 : vector<1x128x50xf32> to vector<128x50xf32>
    %cst_49 = arith.constant dense<0.000000e+00> : vector<16x50xf32>
    %86 = tpu.matmul %83, %85, %cst_49 {dimension_numbers = #tpu.dot_dimension_numbers<[1], [0], [0], [1], [0, 0, 1, 1], [], []>} : vector<16x128xf32>, vector<128x50xf32>, vector<16x50xf32> -> vector<16x50xf32>
    %87 = vector.extract_strided_slice %82 {offsets = [16, 0], sizes = [16, 128], strides = [1, 1]} : vector<64x128xf32> to vector<16x128xf32>
    %c1_50 = arith.constant 1 : index
    %c0_51 = arith.constant 0 : index
    %c0_52 = arith.constant 0 : index
    %88 = vector.load %arg6[%c1_50, %c0_51, %c0_52] : memref<4x128x50xf32, #tpu.memory_space<vmem>>, vector<1x128x50xf32>
    %89 = vector.shape_cast %88 : vector<1x128x50xf32> to vector<128x50xf32>
    %cst_53 = arith.constant dense<0.000000e+00> : vector<16x50xf32>
    %90 = tpu.matmul %87, %89, %cst_53 {dimension_numbers = #tpu.dot_dimension_numbers<[1], [0], [0], [1], [0, 0, 1, 1], [], []>} : vector<16x128xf32>, vector<128x50xf32>, vector<16x50xf32> -> vector<16x50xf32>
    %91 = arith.addf %86, %90 : vector<16x50xf32>
    %92 = vector.extract_strided_slice %82 {offsets = [32, 0], sizes = [16, 128], strides = [1, 1]} : vector<64x128xf32> to vector<16x128xf32>
    %c2_54 = arith.constant 2 : index
    %c0_55 = arith.constant 0 : index
    %c0_56 = arith.constant 0 : index
    %93 = vector.load %arg6[%c2_54, %c0_55, %c0_56] : memref<4x128x50xf32, #tpu.memory_space<vmem>>, vector<1x128x50xf32>
    %94 = vector.shape_cast %93 : vector<1x128x50xf32> to vector<128x50xf32>
    %cst_57 = arith.constant dense<0.000000e+00> : vector<16x50xf32>
    %95 = tpu.matmul %92, %94, %cst_57 {dimension_numbers = #tpu.dot_dimension_numbers<[1], [0], [0], [1], [0, 0, 1, 1], [], []>} : vector<16x128xf32>, vector<128x50xf32>, vector<16x50xf32> -> vector<16x50xf32>
    %96 = arith.addf %91, %95 : vector<16x50xf32>
    %97 = vector.extract_strided_slice %82 {offsets = [48, 0], sizes = [16, 128], strides = [1, 1]} : vector<64x128xf32> to vector<16x128xf32>
    %c3_58 = arith.constant 3 : index
    %c0_59 = arith.constant 0 : index
    %c0_60 = arith.constant 0 : index
    %98 = vector.load %arg6[%c3_58, %c0_59, %c0_60] : memref<4x128x50xf32, #tpu.memory_space<vmem>>, vector<1x128x50xf32>
    %99 = vector.shape_cast %98 : vector<1x128x50xf32> to vector<128x50xf32>
    %cst_61 = arith.constant dense<0.000000e+00> : vector<16x50xf32>
    %100 = tpu.matmul %97, %99, %cst_61 {dimension_numbers = #tpu.dot_dimension_numbers<[1], [0], [0], [1], [0, 0, 1, 1], [], []>} : vector<16x128xf32>, vector<128x50xf32>, vector<16x50xf32> -> vector<16x50xf32>
    %101 = arith.addf %96, %100 : vector<16x50xf32>
    %c0_62 = arith.constant 0 : index
    %c0_63 = arith.constant 0 : index
    %102 = vector.load %arg7[%c0_62, %c0_63] : memref<1x50xf32, #tpu.memory_space<vmem>>, vector<1x50xf32>
    %103 = vector.broadcast %102 : vector<1x50xf32> to vector<16x50xf32>
    %104 = arith.addf %101, %103 : vector<16x50xf32>
    %cst_64 = arith.constant 0.000000e+00 : f32
    %105 = vector.broadcast %cst_64 : f32 to vector<16x50xf32>
    %106 = arith.maximumf %104, %105 : vector<16x50xf32>
    %c0_65 = arith.constant 0 : index
    %c0_66 = arith.constant 0 : index
    %107 = vector.load %arg8[%c0_65, %c0_66] : memref<50x10xf32, #tpu.memory_space<vmem>>, vector<50x10xf32>
    %cst_67 = arith.constant dense<0.000000e+00> : vector<16x10xf32>
    %108 = tpu.matmul %106, %107, %cst_67 {dimension_numbers = #tpu.dot_dimension_numbers<[1], [0], [0], [1], [0, 0, 1, 1], [], []>} : vector<16x50xf32>, vector<50x10xf32>, vector<16x10xf32> -> vector<16x10xf32>
    %c0_68 = arith.constant 0 : index
    %c0_69 = arith.constant 0 : index
    %109 = vector.load %arg9[%c0_68, %c0_69] : memref<1x10xf32, #tpu.memory_space<vmem>>, vector<1x10xf32>
    %110 = vector.broadcast %109 : vector<1x10xf32> to vector<16x10xf32>
    %111 = arith.addf %108, %110 : vector<16x10xf32>
    %cst_70 = arith.constant dense<0xFF800000> : vector<16xf32>
    %112 = vector.multi_reduction <maximumf>, %111, %cst_70 [1] : vector<16x10xf32> to vector<16xf32>
    %113 = vector.shape_cast %112 : vector<16xf32> to vector<16x1xf32>
    %114 = vector.broadcast %113 : vector<16x1xf32> to vector<16x10xf32>
    %115 = arith.subf %111, %114 : vector<16x10xf32>
    %116 = math.exp %115 : vector<16x10xf32>
    %cst_71 = arith.constant dense<0.000000e+00> : vector<16xf32>
    %117 = vector.multi_reduction <add>, %116, %cst_71 [1] : vector<16x10xf32> to vector<16xf32>
    %118 = vector.shape_cast %117 : vector<16xf32> to vector<16x1xf32>
    %119 = math.log %118 : vector<16x1xf32>
    %120 = arith.addf %113, %119 : vector<16x1xf32>
    %121 = vector.broadcast %120 : vector<16x1xf32> to vector<16x10xf32>
    %122 = arith.subf %111, %121 : vector<16x10xf32>
    %c0_72 = arith.constant 0 : index
    %c0_73 = arith.constant 0 : index
    %123 = vector.load %arg10[%c0_72, %c0_73] : memref<16x10xf32, #tpu.memory_space<vmem>>, vector<16x10xf32>
    tpu.vector_store %arg10[%c0_72, %c0_73], %122 {strides = array<i32>} : memref<16x10xf32, #tpu.memory_space<vmem>>, vector<16x10xf32>,
    return
  }
  func.func @transform_0(%arg0: i32) -> (i32, i32) {
    %c0_i32 = arith.constant 0 : i32
    %c0_i32_0 = arith.constant 0 : i32
    return %arg0, %c0_i32 : i32, i32
  }
  func.func @transform_1(%arg0: i32) -> (i32, i32) {
    %c0_i32 = arith.constant 0 : i32
    %c0_i32_0 = arith.constant 0 : i32
    %c0_i32_1 = arith.constant 0 : i32
    return %c0_i32, %c0_i32_0 : i32, i32
  }
  func.func @transform_2(%arg0: i32) -> (i32, i32) {
    %c0_i32 = arith.constant 0 : i32
    %c0_i32_0 = arith.constant 0 : i32
    %c0_i32_1 = arith.constant 0 : i32
    return %c0_i32, %c0_i32_0 : i32, i32
  }
  func.func @transform_3(%arg0: i32) -> (i32, i32, i32) {
    %c0_i32 = arith.constant 0 : i32
    %c0_i32_0 = arith.constant 0 : i32
    %c0_i32_1 = arith.constant 0 : i32
    %c0_i32_2 = arith.constant 0 : i32
    return %c0_i32, %c0_i32_0, %c0_i32_1 : i32, i32, i32
  }
  func.func @transform_4(%arg0: i32) -> (i32, i32) {
    %c0_i32 = arith.constant 0 : i32
    %c0_i32_0 = arith.constant 0 : i32
    %c0_i32_1 = arith.constant 0 : i32
    return %c0_i32, %c0_i32_0 : i32, i32
  }
  func.func @transform_5(%arg0: i32) -> (i32, i32, i32) {
    %c0_i32 = arith.constant 0 : i32
    %c0_i32_0 = arith.constant 0 : i32
    %c0_i32_1 = arith.constant 0 : i32
    %c0_i32_2 = arith.constant 0 : i32
    return %c0_i32, %c0_i32_0, %c0_i32_1 : i32, i32, i32
  }
  func.func @transform_6(%arg0: i32) -> (i32, i32) {
    %c0_i32 = arith.constant 0 : i32
    %c0_i32_0 = arith.constant 0 : i32
    %c0_i32_1 = arith.constant 0 : i32
    return %c0_i32, %c0_i32_0 : i32, i32
  }
  func.func @transform_7(%arg0: i32) -> (i32, i32) {
    %c0_i32 = arith.constant 0 : i32
    %c0_i32_0 = arith.constant 0 : i32
    %c0_i32_1 = arith.constant 0 : i32
    return %c0_i32, %c0_i32_0 : i32, i32
  }
  func.func @transform_8(%arg0: i32) -> (i32, i32) {
    %c0_i32 = arith.constant 0 : i32
    %c0_i32_0 = arith.constant 0 : i32
    %c0_i32_1 = arith.constant 0 : i32
    return %c0_i32, %c0_i32_0 : i32, i32
  }
  func.func @transform_9(%arg0: i32) -> (i32, i32) {
    %c0_i32 = arith.constant 0 : i32
    %c0_i32_0 = arith.constant 0 : i32
    return %arg0, %c0_i32 : i32, i32
  }
}

</mosaic_0001>

<llo_original>
// kernel: net_forward.1
$region0: #{net_forward.1}
  #allocation0 [shape = 'u32[]', space=smem, size = 0x4, offset = 0x4, fixed_abs, tag = 'smem constant byte address 0x4 - core index']
  #allocation1 [shape = 'u32[144,128]{1,0:T(1,128)}', space=vmem, size = 0x12000, scoped, tag = 'internal scratch']
  %s0 = inlined_call_operand.vmem [shape: f32[384,140], index: 0, kind: input, shape index: {}]
  %s1 = inlined_call_operand.vmem [shape: f32[140,256], index: 1, kind: input, shape index: {}]
  %s2 = inlined_call_operand.vmem [shape: f32[1,128], index: 2, kind: input, shape index: {}]
  %s3 = inlined_call_operand.vmem [shape: f32[5,128,256], index: 3, kind: input, shape index: {}]
  %s4 = inlined_call_operand.vmem [shape: f32[1,128], index: 4, kind: input, shape index: {}]
  %s5 = inlined_call_operand.vmem [shape: f32[4,128,50], index: 5, kind: input, shape index: {}]
  %s6 = inlined_call_operand.vmem [shape: f32[1,50], index: 6, kind: input, shape index: {}]
  %s7 = inlined_call_operand.vmem [shape: f32[50,10], index: 7, kind: input, shape index: {}]
  %s8 = inlined_call_operand.vmem [shape: f32[1,10], index: 8, kind: input, shape index: {}]
  %s9 = inlined_call_operand.vmem [shape: f32[16,10], index: 9, kind: output, shape index: {}]
  %s10 = sld [smem:[#allocation0]]
  $region46: #{net_forward.1} parent=0
    _
  %s12 = ssub.s32 1, %s10
  %s13 = scalar_select 0, %s12, %s10
  // Predicated region
  $region2: #{net_forward.1} parent=0 // pred_check
    _
  $region3: #{net_forward.1} parent=0 // pred_check_branch
    %15 = sbr.rel (0) target = $region5
  $region4: #{net_forward.1} parent=0 // pred_region
    _
  $region5: #{net_forward.1} parent=0 // pred_fallthru
    _
  // Predicated region
  $region6: #{net_forward.1} parent=0 // pred_check
    _
  $region7: #{net_forward.1} parent=0 // pred_check_branch
    %17 = sbr.rel (0) target = $region9
  $region8: #{net_forward.1} parent=0 // pred_region
    _
  $region9: #{net_forward.1} parent=0 // pred_fallthru
    _
  // Predicated region
  $region10: #{net_forward.1} parent=0 // pred_check
    _
  $region11: #{net_forward.1} parent=0 // pred_check_branch
    %19 = sbr.rel (0) target = $region13
  $region12: #{net_forward.1} parent=0 // pred_region
    _
  $region13: #{net_forward.1} parent=0 // pred_fallthru
    _
  // Predicated region
  $region14: #{net_forward.1} parent=0 // pred_check
    _
  $region15: #{net_forward.1} parent=0 // pred_check_branch
    %21 = sbr.rel (0) target = $region17
  $region16: #{net_forward.1} parent=0 // pred_region
    _
  $region17: #{net_forward.1} parent=0 // pred_fallthru
    _
  // Predicated region
  $region18: #{net_forward.1} parent=0 // pred_check
    _
  $region19: #{net_forward.1} parent=0 // pred_check_branch
    %23 = sbr.rel (0) target = $region21
  $region20: #{net_forward.1} parent=0 // pred_region
    _
  $region21: #{net_forward.1} parent=0 // pred_fallthru
    _
  // Predicated region
  $region22: #{net_forward.1} parent=0 // pred_check
    _
  $region23: #{net_forward.1} parent=0 // pred_check_branch
    %25 = sbr.rel (0) target = $region25
  $region24: #{net_forward.1} parent=0 // pred_region
    _
  $region25: #{net_forward.1} parent=0 // pred_fallthru
    _
  // Predicated region
  $region26: #{net_forward.1} parent=0 // pred_check
    _
  $region27: #{net_forward.1} parent=0 // pred_check_branch
    %27 = sbr.rel (0) target = $region29
  $region28: #{net_forward.1} parent=0 // pred_region
    _
  $region29: #{net_forward.1} parent=0 // pred_fallthru
    _
  // Predicated region
  $region30: #{net_forward.1} parent=0 // pred_check
    _
  $region31: #{net_forward.1} parent=0 // pred_check_branch
    %29 = sbr.rel (0) target = $region33
  $region32: #{net_forward.1} parent=0 // pred_region
    _
  $region33: #{net_forward.1} parent=0 // pred_fallthru
    _
  // Predicated region
  $region34: #{net_forward.1} parent=0 // pred_check
    _
  $region35: #{net_forward.1} parent=0 // pred_check_branch
    %31 = sbr.rel (0) target = $region37
  $region36: #{net_forward.1} parent=0 // pred_region
    _
  $region37: #{net_forward.1} parent=0 // pred_fallthru
    _
  %v32 = vld [vmem:[%s0] sm:$0xff]
  %v33 = vld [vmem:[%s0 + $0x8] sm:$0xff]
  %v34 = vld [vmem:[%s0 + $0x10] sm:$0xff]
  %v35 = vld [vmem:[%s0 + $0x18] sm:$0xff]
  %v36 = vld [vmem:[%s0 + $0x20] sm:$0xff]
  %v37 = vld [vmem:[%s0 + $0x28] sm:$0xff]
  %v38 = vld [vmem:[%s0 + $0x30] sm:$0xff]
  %v39 = vld [vmem:[%s0 + $0x38] sm:$0xff]
  %v40 = vld [vmem:[%s0 + $0x40] sm:$0xff]
  %v41 = vld [vmem:[%s0 + $0x48] sm:$0xff]
  %v42 = vld [vmem:[%s0 + $0x50] sm:$0xff]
  %v43 = vld [vmem:[%s0 + $0x58] sm:$0xff]
  %v44 = vld [vmem:[%s0 + $0x60] sm:$0xff]
  %v45 = vld [vmem:[%s0 + $0x68] sm:$0xff]
  %v46 = vld [vmem:[%s0 + $0x70] sm:$0xff]
  %v47 = vld [vmem:[%s0 + $0x78] sm:$0xff]
  %v48 = vld [vmem:[%s0 + $0x80] sm:$0xff]
  %v49 = vld [vmem:[%s0 + $0x88] sm:$0xff]
  %v50 = vld [vmem:[%s0 + $0x90] sm:$0xff]
  %v51 = vld [vmem:[%s0 + $0x98] sm:$0xff]
  %v52 = vld [vmem:[%s0 + $0xa0] sm:$0xff]
  %v53 = vld [vmem:[%s0 + $0xa8] sm:$0xff]
  %v54 = vld [vmem:[%s0 + $0xb0] sm:$0xff]
  %v55 = vld [vmem:[%s0 + $0xb8] sm:$0xff]
  %v56 = vld [vmem:[%s0 + $0xc0] sm:$0xff]
  %v57 = vld [vmem:[%s0 + $0xc8] sm:$0xff]
  %v58 = vld [vmem:[%s0 + $0xd0] sm:$0xff]
  %v59 = vld [vmem:[%s0 + $0xd8] sm:$0xff]
  %v60 = vld [vmem:[%s0 + $0xe0] sm:$0xff]
  %v61 = vld [vmem:[%s0 + $0xe8] sm:$0xff]
  %v62 = vld [vmem:[%s0 + $0xf0] sm:$0xff]
  %v63 = vld [vmem:[%s0 + $0xf8] sm:$0xff]
  %v64 = vld [vmem:[%s0 + $0x100] sm:$0xff]
  %v65 = vld [vmem:[%s0 + $0x108] sm:$0xff]
  %v66 = vld [vmem:[%s0 + $0x110] sm:$0xff]
  %v67 = vld [vmem:[%s0 + $0x118] sm:$0xff]
  %v68 = vld [vmem:[%s0 + $0x120] sm:$0xff]
  %v69 = vld [vmem:[%s0 + $0x128] sm:$0xff]
  %v70 = vld [vmem:[%s0 + $0x130] sm:$0xff]
  %v71 = vld [vmem:[%s0 + $0x138] sm:$0xff]
  %v72 = vld [vmem:[%s0 + $0x140] sm:$0xff]
  %v73 = vld [vmem:[%s0 + $0x148] sm:$0xff]
  %v74 = vld [vmem:[%s0 + $0x150] sm:$0xff]
  %v75 = vld [vmem:[%s0 + $0x158] sm:$0xff]
  %v76 = vld [vmem:[%s0 + $0x160] sm:$0xff]
  %v77 = vld [vmem:[%s0 + $0x168] sm:$0xff]
  %v78 = vld [vmem:[%s0 + $0x170] sm:$0xff]
  %v79 = vld [vmem:[%s0 + $0x178] sm:$0xff]
  %v80 = vld [vmem:[%s0 + $0x180] sm:$0xff]
  %v81 = vld [vmem:[%s0 + $0x188] sm:$0xff]
  %v82 = vld [vmem:[%s0 + $0x190] sm:$0xff]
  %v83 = vld [vmem:[%s0 + $0x198] sm:$0xff]
  %v84 = vld [vmem:[%s0 + $0x1a0] sm:$0xff]
  %v85 = vld [vmem:[%s0 + $0x1a8] sm:$0xff]
  %v86 = vld [vmem:[%s0 + $0x1b0] sm:$0xff]
  %v87 = vld [vmem:[%s0 + $0x1b8] sm:$0xff]
  %v88 = vld [vmem:[%s0 + $0x1c0] sm:$0xff]
  %v89 = vld [vmem:[%s0 + $0x1c8] sm:$0xff]
  %v90 = vld [vmem:[%s0 + $0x1d0] sm:$0xff]
  %v91 = vld [vmem:[%s0 + $0x1d8] sm:$0xff]
  %v92 = vld [vmem:[%s0 + $0x1e0] sm:$0xff]
  %v93 = vld [vmem:[%s0 + $0x1e8] sm:$0xff]
  %v94 = vld [vmem:[%s0 + $0x1f0] sm:$0xff]
  %v95 = vld [vmem:[%s0 + $0x1f8] sm:$0xff]
  %v96 = vld [vmem:[%s0 + $0x200] sm:$0xff]
  %v97 = vld [vmem:[%s0 + $0x208] sm:$0xff]
  %v98 = vld [vmem:[%s0 + $0x210] sm:$0xff]
  %v99 = vld [vmem:[%s0 + $0x218] sm:$0xff]
  %v100 = vld [vmem:[%s0 + $0x220] sm:$0xff]
  %v101 = vld [vmem:[%s0 + $0x228] sm:$0xff]
  %v102 = vld [vmem:[%s0 + $0x230] sm:$0xff]
  %v103 = vld [vmem:[%s0 + $0x238] sm:$0xff]
  %v104 = vld [vmem:[%s0 + $0x240] sm:$0xff]
  %v105 = vld [vmem:[%s0 + $0x248] sm:$0xff]
  %v106 = vld [vmem:[%s0 + $0x250] sm:$0xff]
  %v107 = vld [vmem:[%s0 + $0x258] sm:$0xff]
  %v108 = vld [vmem:[%s0 + $0x260] sm:$0xff]
  %v109 = vld [vmem:[%s0 + $0x268] sm:$0xff]
  %v110 = vld [vmem:[%s0 + $0x270] sm:$0xff]
  %v111 = vld [vmem:[%s0 + $0x278] sm:$0xff]
  %v112 = vld [vmem:[%s0 + $0x280] sm:$0xff]
  %v113 = vld [vmem:[%s0 + $0x288] sm:$0xff]
  %v114 = vld [vmem:[%s0 + $0x290] sm:$0xff]
  %v115 = vld [vmem:[%s0 + $0x298] sm:$0xff]
  %v116 = vld [vmem:[%s0 + $0x2a0] sm:$0xff]
  %v117 = vld [vmem:[%s0 + $0x2a8] sm:$0xff]
  %v118 = vld [vmem:[%s0 + $0x2b0] sm:$0xff]
  %v119 = vld [vmem:[%s0 + $0x2b8] sm:$0xff]
  %v120 = vld [vmem:[%s0 + $0x2c0] sm:$0xff]
  %v121 = vld [vmem:[%s0 + $0x2c8] sm:$0xff]
  %v122 = vld [vmem:[%s0 + $0x2d0] sm:$0xff]
  %v123 = vld [vmem:[%s0 + $0x2d8] sm:$0xff]
  %v124 = vld [vmem:[%s0 + $0x2e0] sm:$0xff]
  %v125 = vld [vmem:[%s0 + $0x2e8] sm:$0xff]
  %v126 = vld [vmem:[%s0 + $0x2f0] sm:$0xff]
  %v127 = vld [vmem:[%s0 + $0x2f8] sm:$0xff]
  %v128 = vld [vmem:[%s1] sm:$0xff]
  %v129 = vld [vmem:[%s1 + $0x8] sm:$0xff]
  %v130 = vld [vmem:[%s1 + $0x10] sm:$0xff]
  %v131 = vld [vmem:[%s1 + $0x18] sm:$0xff]
  %v132 = vld [vmem:[%s1 + $0x20] sm:$0xff]
  %v133 = vld [vmem:[%s1 + $0x28] sm:$0xff]
  %v134 = vld [vmem:[%s1 + $0x30] sm:$0xff]
  %v135 = vld [vmem:[%s1 + $0x38] sm:$0xff]
  %v136 = vld [vmem:[%s1 + $0x40] sm:$0xff]
  %v137 = vld [vmem:[%s1 + $0x48] sm:$0xff]
  %v138 = vld [vmem:[%s1 + $0x50] sm:$0xff]
  %v139 = vld [vmem:[%s1 + $0x58] sm:$0xff]
  %v140 = vld [vmem:[%s1 + $0x60] sm:$0xff]
  %v141 = vld [vmem:[%s1 + $0x68] sm:$0xff]
  %v142 = vld [vmem:[%s1 + $0x70] sm:$0xff]
  %v143 = vld [vmem:[%s1 + $0x78] sm:$0xff]
  %v144 = vld [vmem:[%s1 + $0x80] sm:$0xff]
  %v145 = vld [vmem:[%s1 + $0x88] sm:$0xff]
  %v146 = vld [vmem:[%s1 + $0x90] sm:$0xff]
  %v147 = vld [vmem:[%s1 + $0x98] sm:$0xff]
  %v148 = vld [vmem:[%s1 + $0xa0] sm:$0xff]
  %v149 = vld [vmem:[%s1 + $0xa8] sm:$0xff]
  %v150 = vld [vmem:[%s1 + $0xb0] sm:$0xff]
  %v151 = vld [vmem:[%s1 + $0xb8] sm:$0xff]
  %v152 = vld [vmem:[%s1 + $0xc0] sm:$0xff]
  %v153 = vld [vmem:[%s1 + $0xc8] sm:$0xff]
  %v154 = vld [vmem:[%s1 + $0xd0] sm:$0xff]
  %v155 = vld [vmem:[%s1 + $0xd8] sm:$0xff]
  %v156 = vld [vmem:[%s1 + $0xe0] sm:$0xff]
  %v157 = vld [vmem:[%s1 + $0xe8] sm:$0xff]
  %v158 = vld [vmem:[%s1 + $0xf0] sm:$0xff]
  %v159 = vld [vmem:[%s1 + $0xf8] sm:$0xff]
  %v160 = vld [vmem:[%s1 + $0x100] sm:$0xff]
  %v161 = vld [vmem:[%s1 + $0x108] sm:$0xff]
  %v162 = vld [vmem:[%s1 + $0x110] sm:$0xf]
  %v163 = vld [vmem:[%s1 + $0x118] sm:$0xf]
  %vm164 = vcmask 97280
  %v166 = vsel %vm164, %v33, 0
  %v169 = vsel %vm164, %v35, 0
  %v172 = vsel %vm164, %v37, 0
  %v175 = vsel %vm164, %v39, 0
  %v178 = vsel %vm164, %v41, 0
  %v181 = vsel %vm164, %v43, 0
  %v184 = vsel %vm164, %v45, 0
  %v187 = vsel %vm164, %v47, 0
  %v190 = vsel %vm164, %v49, 0
  %v193 = vsel %vm164, %v51, 0
  %v196 = vsel %vm164, %v53, 0
  %v199 = vsel %vm164, %v55, 0
  %v202 = vsel %vm164, %v57, 0
  %v205 = vsel %vm164, %v59, 0
  %v208 = vsel %vm164, %v61, 0
  %v211 = vsel %vm164, %v63, 0
  %v214 = vsel %vm164, %v65, 0
  %v217 = vsel %vm164, %v67, 0
  %v220 = vsel %vm164, %v69, 0
  %v223 = vsel %vm164, %v71, 0
  %v226 = vsel %vm164, %v73, 0
  %v229 = vsel %vm164, %v75, 0
  %v232 = vsel %vm164, %v77, 0
  %v235 = vsel %vm164, %v79, 0
  %v238 = vsel %vm164, %v81, 0
  %v241 = vsel %vm164, %v83, 0
  %v244 = vsel %vm164, %v85, 0
  %v247 = vsel %vm164, %v87, 0
  %v250 = vsel %vm164, %v89, 0
  %v253 = vsel %vm164, %v91, 0
  %v256 = vsel %vm164, %v93, 0
  %v259 = vsel %vm164, %v95, 0
  %v262 = vsel %vm164, %v97, 0
  %v265 = vsel %vm164, %v99, 0
  %v268 = vsel %vm164, %v101, 0
  %v271 = vsel %vm164, %v103, 0
  %v274 = vsel %vm164, %v105, 0
  %v277 = vsel %vm164, %v107, 0
  %v280 = vsel %vm164, %v109, 0
  %v283 = vsel %vm164, %v111, 0
  %v286 = vsel %vm164, %v113, 0
  %v289 = vsel %vm164, %v115, 0
  %v292 = vsel %vm164, %v117, 0
  %v295 = vsel %vm164, %v119, 0
  %v298 = vsel %vm164, %v121, 0
  %v301 = vsel %vm164, %v123, 0
  %v304 = vsel %vm164, %v125, 0
  %v307 = vsel %vm164, %v127, 0
  %vm309 = vcmask 1043456
  %v311 = vsel %vm309, %v162, 0
  %v314 = vsel %vm309, %v163, 0
  %316 = vmatprep.subr.mxu0 %v129
  %317 = vmatpush1.msra.mxu0 %v128
  %318 = vmatprep.subr.mxu0 %v131
  %319 = vmatpush1.msra.mxu0 %v130
  %320 = vmatprep.subr.mxu0 %v133
  %321 = vmatpush1.msra.mxu0 %v132
  %322 = vmatprep.subr.mxu0 %v135
  %323 = vmatpush1.msra.mxu0 %v134
  %324 = vmatprep.subr.mxu0 %v137
  %325 = vmatpush1.msra.mxu0 %v136
  %326 = vmatprep.subr.mxu0 %v139
  %327 = vmatpush1.msra.mxu0 %v138
  %328 = vmatprep.subr.mxu0 %v141
  %329 = vmatpush1.msra.mxu0 %v140
  %330 = vmatprep.subr.mxu0 %v143
  %331 = vmatpush1.msra.mxu0 %v142
  %332 = vmatprep.subr.mxu0 %v145
  %333 = vmatpush1.msra.mxu0 %v144
  %334 = vmatprep.subr.mxu0 %v147
  %335 = vmatpush1.msra.mxu0 %v146
  %336 = vmatprep.subr.mxu0 %v149
  %337 = vmatpush1.msra.mxu0 %v148
  %338 = vmatprep.subr.mxu0 %v151
  %339 = vmatpush1.msra.mxu0 %v150
  %340 = vmatprep.subr.mxu0 %v153
  %341 = vmatpush1.msra.mxu0 %v152
  %342 = vmatprep.subr.mxu0 %v155
  %343 = vmatpush1.msra.mxu0 %v154
  %344 = vmatprep.subr.mxu0 %v157
  %345 = vmatpush1.msra.mxu0 %v156
  %346 = vmatprep.subr.mxu0 %v159
  %347 = vmatpush1.msra.mxu0 %v158
  %348 = vmatprep.subr.mxu0 %v161
  %349 = vmatpush1.msra.mxu0 %v160
  %350 = vmatprep.subr.mxu0 %v314
  %351 = vmatpush1.msra.mxu0 %v311
  %352 = vmatprep.subr.mxu0 0.0
  %353 = vmatpush1.msra.mxu0 0.0
  %354 = vmatprep.subr.mxu0 0.0
  %355 = vmatpush1.msra.mxu0 0.0
  %356 = vmatprep.subr.mxu0 0.0
  %357 = vmatpush1.msra.mxu0 0.0
  %358 = vmatprep.subr.mxu0 0.0
  %359 = vmatpush1.msra.mxu0 0.0
  %360 = vmatprep.subr.mxu0 0.0
  %361 = vmatpush1.msra.mxu0 0.0
  %362 = vmatprep.subr.mxu0 0.0
  %363 = vmatpush1.msra.mxu0 0.0
  %364 = vmatprep.subr.mxu0 0.0
  %365 = vmatpush1.msra.mxu0 0.0
  %366 = vmatprep.subr.mxu0 0.0
  %367 = vmatpush1.msra.mxu0 0.0
  %368 = vmatprep.subr.mxu0 0.0
  %369 = vmatpush1.msra.mxu0 0.0
  %370 = vmatprep.subr.mxu0 0.0
  %371 = vmatpush1.msra.mxu0 0.0
  %372 = vmatprep.subr.mxu0 0.0
  %373 = vmatpush1.msra.mxu0 0.0
  %374 = vmatprep.subr.mxu0 0.0
  %375 = vmatpush1.msra.mxu0 0.0
  %376 = vmatprep.subr.mxu0 0.0
  %377 = vmatpush1.msra.mxu0 0.0
  %378 = vmatprep.subr.mxu0 0.0
  %379 = vmatpush1.msra.mxu0 0.0
  %380 = vmatprep.mubr.f32.mxu0 %v166
  %381 = vmatmul.mubr.f32.gmra.mrb[0].mxu0 %v32
  %v382 = vpop.f32.mrb[0].mxu0
  %v383 = vadd.f32 0.0, %v382
  %v384 = vpop.f32.mrb[0].mxu0
  %v385 = vadd.f32 0.0, %v384
  %386 = vmatprep.mubr.f32.mxu0 %v169
  %387 = vmatmul.mubr.f32.gmra.mrb[0].mxu0 %v34
  %v388 = vpop.f32.mrb[0].mxu0
  %v389 = vadd.f32 0.0, %v388
  %v390 = vpop.f32.mrb[0].mxu0
  %v391 = vadd.f32 0.0, %v390
  %392 = vmatprep.mubr.f32.mxu0 %v172
  %393 = vmatmul.mubr.f32.gmra.mrb[0].mxu0 %v36
  %v394 = vpop.f32.mrb[0].mxu0
  %v395 = vadd.f32 0.0, %v394
  %v396 = vpop.f32.mrb[0].mxu0
  %v397 = vadd.f32 0.0, %v396
  %398 = vmatprep.mubr.f32.mxu0 %v175
  %399 = vmatmul.mubr.f32.gmra.mrb[0].mxu0 %v38
  %v400 = vpop.f32.mrb[0].mxu0
  %v401 = vadd.f32 0.0, %v400
  %v402 = vpop.f32.mrb[0].mxu0
  %v403 = vadd.f32 0.0, %v402
  %404 = vmatprep.mubr.f32.mxu0 %v178
  %405 = vmatmul.mubr.f32.gmra.mrb[0].mxu0 %v40
  %v406 = vpop.f32.mrb[0].mxu0
  %v407 = vadd.f32 0.0, %v406
  %v408 = vpop.f32.mrb[0].mxu0
  %v409 = vadd.f32 0.0, %v408
  %410 = vmatprep.mubr.f32.mxu0 %v181
  %411 = vmatmul.mubr.f32.gmra.mrb[0].mxu0 %v42
  %v412 = vpop.f32.mrb[0].mxu0
  %v413 = vadd.f32 0.0, %v412
  %v414 = vpop.f32.mrb[0].mxu0
  %v415 = vadd.f32 0.0, %v414
  %416 = vmatprep.mubr.f32.mxu0 %v184
  %417 = vmatmul.mubr.f32.gmra.mrb[0].mxu0 %v44
  %v418 = vpop.f32.mrb[0].mxu0
  %v419 = vadd.f32 0.0, %v418
  %v420 = vpop.f32.mrb[0].mxu0
  %v421 = vadd.f32 0.0, %v420
  %422 = vmatprep.mubr.f32.mxu0 %v187
  %423 = vmatmul.mubr.f32.gmra.mrb[0].mxu0 %v46
  %v424 = vpop.f32.mrb[0].mxu0
  %v425 = vadd.f32 0.0, %v424
  %v426 = vpop.f32.mrb[0].mxu0
  %v427 = vadd.f32 0.0, %v426
  %428 = vmatprep.mubr.f32.mxu0 %v190
  %429 = vmatmul.mubr.f32.gmra.mrb[0].mxu0 %v48
  %v430 = vpop.f32.mrb[0].mxu0
  %v431 = vadd.f32 0.0, %v430
  %v432 = vpop.f32.mrb[0].mxu0
  %v433 = vadd.f32 0.0, %v432
  %434 = vmatprep.mubr.f32.mxu0 %v193
  %435 = vmatmul.mubr.f32.gmra.mrb[0].mxu0 %v50
  %v436 = vpop.f32.mrb[0].mxu0
  %v437 = vadd.f32 0.0, %v436
  %v438 = vpop.f32.mrb[0].mxu0
  %v439 = vadd.f32 0.0, %v438
  %440 = vmatprep.mubr.f32.mxu0 %v196
  %441 = vmatmul.mubr.f32.gmra.mrb[0].mxu0 %v52
  %v442 = vpop.f32.mrb[0].mxu0
  %v443 = vadd.f32 0.0, %v442
  %v444 = vpop.f32.mrb[0].mxu0
  %v445 = vadd.f32 0.0, %v444
  %446 = vmatprep.mubr.f32.mxu0 %v199
  %447 = vmatmul.mubr.f32.gmra.mrb[0].mxu0 %v54
  %v448 = vpop.f32.mrb[0].mxu0
  %v449 = vadd.f32 0.0, %v448
  %v450 = vpop.f32.mrb[0].mxu0
  %v451 = vadd.f32 0.0, %v450
  %452 = vmatprep.mubr.f32.mxu0 %v202
  %453 = vmatmul.mubr.f32.gmra.mrb[0].mxu0 %v56
  %v454 = vpop.f32.mrb[0].mxu0
  %v455 = vadd.f32 0.0, %v454
  %v456 = vpop.f32.mrb[0].mxu0
  %v457 = vadd.f32 0.0, %v456
  %458 = vmatprep.mubr.f32.mxu0 %v205
  %459 = vmatmul.mubr.f32.gmra.mrb[0].mxu0 %v58
  %v460 = vpop.f32.mrb[0].mxu0
  %v461 = vadd.f32 0.0, %v460
  %v462 = vpop.f32.mrb[0].mxu0
  %v463 = vadd.f32 0.0, %v462
  %464 = vmatprep.mubr.f32.mxu0 %v208
  %465 = vmatmul.mubr.f32.gmra.mrb[0].mxu0 %v60
  %v466 = vpop.f32.mrb[0].mxu0
  %v467 = vadd.f32 0.0, %v466
  %v468 = vpop.f32.mrb[0].mxu0
  %v469 = vadd.f32 0.0, %v468
  %470 = vmatprep.mubr.f32.mxu0 %v211
  %471 = vmatmul.mubr.f32.gmra.mrb[0].mxu0 %v62
  %v472 = vpop.f32.mrb[0].mxu0
  %v473 = vadd.f32 0.0, %v472
  %v474 = vpop.f32.mrb[0].mxu0
  %v475 = vadd.f32 0.0, %v474
  %476 = vmatprep.mubr.f32.mxu0 %v214
  %477 = vmatmul.mubr.f32.gmra.mrb[0].mxu0 %v64
  %v478 = vpop.f32.mrb[0].mxu0
  %v479 = vadd.f32 0.0, %v478
  %v480 = vpop.f32.mrb[0].mxu0
  %v481 = vadd.f32 0.0, %v480
  %482 = vmatprep.mubr.f32.mxu0 %v217
  %483 = vmatmul.mubr.f32.gmra.mrb[0].mxu0 %v66
  %v484 = vpop.f32.mrb[0].mxu0
  %v485 = vadd.f32 0.0, %v484
  %v486 = vpop.f32.mrb[0].mxu0
  %v487 = vadd.f32 0.0, %v486
  %488 = vmatprep.mubr.f32.mxu0 %v220
  %489 = vmatmul.mubr.f32.gmra.mrb[0].mxu0 %v68
  %v490 = vpop.f32.mrb[0].mxu0
  %v491 = vadd.f32 0.0, %v490
  %v492 = vpop.f32.mrb[0].mxu0
  %v493 = vadd.f32 0.0, %v492
  %494 = vmatprep.mubr.f32.mxu0 %v223
  %495 = vmatmul.mubr.f32.gmra.mrb[0].mxu0 %v70
  %v496 = vpop.f32.mrb[0].mxu0
  %v497 = vadd.f32 0.0, %v496
  %v498 = vpop.f32.mrb[0].mxu0
  %v499 = vadd.f32 0.0, %v498
  %500 = vmatprep.mubr.f32.mxu0 %v226
  %501 = vmatmul.mubr.f32.gmra.mrb[0].mxu0 %v72
  %v502 = vpop.f32.mrb[0].mxu0
  %v503 = vadd.f32 0.0, %v502
  %v504 = vpop.f32.mrb[0].mxu0
  %v505 = vadd.f32 0.0, %v504
  %506 = vmatprep.mubr.f32.mxu0 %v229
  %507 = vmatmul.mubr.f32.gmra.mrb[0].mxu0 %v74
  %v508 = vpop.f32.mrb[0].mxu0
  %v509 = vadd.f32 0.0, %v508
  %v510 = vpop.f32.mrb[0].mxu0
  %v511 = vadd.f32 0.0, %v510
  %512 = vmatprep.mubr.f32.mxu0 %v232
  %513 = vmatmul.mubr.f32.gmra.mrb[0].mxu0 %v76
  %v514 = vpop.f32.mrb[0].mxu0
  %v515 = vadd.f32 0.0, %v514
  %v516 = vpop.f32.mrb[0].mxu0
  %v517 = vadd.f32 0.0, %v516
  %518 = vmatprep.mubr.f32.mxu0 %v235
  %519 = vmatmul.mubr.f32.gmra.mrb[0].mxu0 %v78
  %v520 = vpop.f32.mrb[0].mxu0
  %v521 = vadd.f32 0.0, %v520
  %v522 = vpop.f32.mrb[0].mxu0
  %v523 = vadd.f32 0.0, %v522
  %524 = vmatprep.mubr.f32.mxu0 %v238
  %525 = vmatmul.mubr.f32.gmra.mrb[0].mxu0 %v80
  %v526 = vpop.f32.mrb[0].mxu0
  %v527 = vadd.f32 0.0, %v526
  %v528 = vpop.f32.mrb[0].mxu0
  %v529 = vadd.f32 0.0, %v528
  %530 = vmatprep.mubr.f32.mxu0 %v241
  %531 = vmatmul.mubr.f32.gmra.mrb[0].mxu0 %v82
  %v532 = vpop.f32.mrb[0].mxu0
  %v533 = vadd.f32 0.0, %v532
  %v534 = vpop.f32.mrb[0].mxu0
  %v535 = vadd.f32 0.0, %v534
  %536 = vmatprep.mubr.f32.mxu0 %v244
  %537 = vmatmul.mubr.f32.gmra.mrb[0].mxu0 %v84
  %v538 = vpop.f32.mrb[0].mxu0
  %v539 = vadd.f32 0.0, %v538
  %v540 = vpop.f32.mrb[0].mxu0
  %v541 = vadd.f32 0.0, %v540
  %542 = vmatprep.mubr.f32.mxu0 %v247
  %543 = vmatmul.mubr.f32.gmra.mrb[0].mxu0 %v86
  %v544 = vpop.f32.mrb[0].mxu0
  %v545 = vadd.f32 0.0, %v544
  %v546 = vpop.f32.mrb[0].mxu0
  %v547 = vadd.f32 0.0, %v546
  %548 = vmatprep.mubr.f32.mxu0 %v250
  %549 = vmatmul.mubr.f32.gmra.mrb[0].mxu0 %v88
  %v550 = vpop.f32.mrb[0].mxu0
  %v551 = vadd.f32 0.0, %v550
  %v552 = vpop.f32.mrb[0].mxu0
  %v553 = vadd.f32 0.0, %v552
  %554 = vmatprep.mubr.f32.mxu0 %v253
  %555 = vmatmul.mubr.f32.gmra.mrb[0].mxu0 %v90
  %v556 = vpop.f32.mrb[0].mxu0
  %v557 = vadd.f32 0.0, %v556
  %v558 = vpop.f32.mrb[0].mxu0
  %v559 = vadd.f32 0.0, %v558
  %560 = vmatprep.mubr.f32.mxu0 %v256
  %561 = vmatmul.mubr.f32.gmra.mrb[0].mxu0 %v92
  %v562 = vpop.f32.mrb[0].mxu0
  %v563 = vadd.f32 0.0, %v562
  %v564 = vpop.f32.mrb[0].mxu0
  %v565 = vadd.f32 0.0, %v564
  %566 = vmatprep.mubr.f32.mxu0 %v259
  %567 = vmatmul.mubr.f32.gmra.mrb[0].mxu0 %v94
  %v568 = vpop.f32.mrb[0].mxu0
  %v569 = vadd.f32 0.0, %v568
  %v570 = vpop.f32.mrb[0].mxu0
  %v571 = vadd.f32 0.0, %v570
  %572 = vmatprep.mubr.f32.mxu0 %v262
  %573 = vmatmul.mubr.f32.gmra.mrb[0].mxu0 %v96
  %v574 = vpop.f32.mrb[0].mxu0
  %v575 = vadd.f32 0.0, %v574
  %v576 = vpop.f32.mrb[0].mxu0
  %v577 = vadd.f32 0.0, %v576
  %578 = vmatprep.mubr.f32.mxu0 %v265
  %579 = vmatmul.mubr.f32.gmra.mrb[0].mxu0 %v98
  %v580 = vpop.f32.mrb[0].mxu0
  %v581 = vadd.f32 0.0, %v580
  %v582 = vpop.f32.mrb[0].mxu0
  %v583 = vadd.f32 0.0, %v582
  %584 = vmatprep.mubr.f32.mxu0 %v268
  %585 = vmatmul.mubr.f32.gmra.mrb[0].mxu0 %v100
  %v586 = vpop.f32.mrb[0].mxu0
  %v587 = vadd.f32 0.0, %v586
  %v588 = vpop.f32.mrb[0].mxu0
  %v589 = vadd.f32 0.0, %v588
  %590 = vmatprep.mubr.f32.mxu0 %v271
  %591 = vmatmul.mubr.f32.gmra.mrb[0].mxu0 %v102
  %v592 = vpop.f32.mrb[0].mxu0
  %v593 = vadd.f32 0.0, %v592
  %v594 = vpop.f32.mrb[0].mxu0
  %v595 = vadd.f32 0.0, %v594
  %596 = vmatprep.mubr.f32.mxu0 %v274
  %597 = vmatmul.mubr.f32.gmra.mrb[0].mxu0 %v104
  %v598 = vpop.f32.mrb[0].mxu0
  %v599 = vadd.f32 0.0, %v598
  %v600 = vpop.f32.mrb[0].mxu0
  %v601 = vadd.f32 0.0, %v600
  %602 = vmatprep.mubr.f32.mxu0 %v277
  %603 = vmatmul.mubr.f32.gmra.mrb[0].mxu0 %v106
  %v604 = vpop.f32.mrb[0].mxu0
  %v605 = vadd.f32 0.0, %v604
  %v606 = vpop.f32.mrb[0].mxu0
  %v607 = vadd.f32 0.0, %v606
  %608 = vmatprep.mubr.f32.mxu0 %v280
  %609 = vmatmul.mubr.f32.gmra.mrb[0].mxu0 %v108
  %v610 = vpop.f32.mrb[0].mxu0
  %v611 = vadd.f32 0.0, %v610
  %v612 = vpop.f32.mrb[0].mxu0
  %v613 = vadd.f32 0.0, %v612
  %614 = vmatprep.mubr.f32.mxu0 %v283
  %615 = vmatmul.mubr.f32.gmra.mrb[0].mxu0 %v110
  %v616 = vpop.f32.mrb[0].mxu0
  %v617 = vadd.f32 0.0, %v616
  %v618 = vpop.f32.mrb[0].mxu0
  %v619 = vadd.f32 0.0, %v618
  %620 = vmatprep.mubr.f32.mxu0 %v286
  %621 = vmatmul.mubr.f32.gmra.mrb[0].mxu0 %v112
  %v622 = vpop.f32.mrb[0].mxu0
  %v623 = vadd.f32 0.0, %v622
  %v624 = vpop.f32.mrb[0].mxu0
  %v625 = vadd.f32 0.0, %v624
  %626 = vmatprep.mubr.f32.mxu0 %v289
  %627 = vmatmul.mubr.f32.gmra.mrb[0].mxu0 %v114
  %v628 = vpop.f32.mrb[0].mxu0
  %v629 = vadd.f32 0.0, %v628
  %v630 = vpop.f32.mrb[0].mxu0
  %v631 = vadd.f32 0.0, %v630
  %632 = vmatprep.mubr.f32.mxu0 %v292
  %633 = vmatmul.mubr.f32.gmra.mrb[0].mxu0 %v116
  %v634 = vpop.f32.mrb[0].mxu0
  %v635 = vadd.f32 0.0, %v634
  %v636 = vpop.f32.mrb[0].mxu0
  %v637 = vadd.f32 0.0, %v636
  %638 = vmatprep.mubr.f32.mxu0 %v295
  %639 = vmatmul.mubr.f32.gmra.mrb[0].mxu0 %v118
  %v640 = vpop.f32.mrb[0].mxu0
  %v641 = vadd.f32 0.0, %v640
  %v642 = vpop.f32.mrb[0].mxu0
  %v643 = vadd.f32 0.0, %v642
  %644 = vmatprep.mubr.f32.mxu0 %v298
  %645 = vmatmul.mubr.f32.gmra.mrb[0].mxu0 %v120
  %v646 = vpop.f32.mrb[0].mxu0
  %v647 = vadd.f32 0.0, %v646
  %v648 = vpop.f32.mrb[0].mxu0
  %v649 = vadd.f32 0.0, %v648
  %650 = vmatprep.mubr.f32.mxu0 %v301
  %651 = vmatmul.mubr.f32.gmra.mrb[0].mxu0 %v122
  %v652 = vpop.f32.mrb[0].mxu0
  %v653 = vadd.f32 0.0, %v652
  %v654 = vpop.f32.mrb[0].mxu0
  %v655 = vadd.f32 0.0, %v654
  %656 = vmatprep.mubr.f32.mxu0 %v304
  %657 = vmatmul.mubr.f32.gmra.mrb[0].mxu0 %v124
  %v658 = vpop.f32.mrb[0].mxu0
  %v659 = vadd.f32 0.0, %v658
  %v660 = vpop.f32.mrb[0].mxu0
  %v661 = vadd.f32 0.0, %v660
  %662 = vmatprep.mubr.f32.mxu0 %v307
  %663 = vmatmul.mubr.f32.gmra.mrb[0].mxu0 %v126
  %v664 = vpop.f32.mrb[0].mxu0
  %v665 = vadd.f32 0.0, %v664
  %v666 = vpop.f32.mrb[0].mxu0
  %v667 = vadd.f32 0.0, %v666
  %668 = vdwg.mxu0
  %v669 = vmax.f32 %v383, %v385
  %v670 = vmax.f32 %v389, %v391
  %v671 = vmax.f32 %v395, %v397
  %v672 = vmax.f32 %v401, %v403
  %v673 = vmax.f32 %v407, %v409
  %v674 = vmax.f32 %v413, %v415
  %v675 = vmax.f32 %v419, %v421
  %v676 = vmax.f32 %v425, %v427
  %v677 = vmax.f32 %v431, %v433
  %v678 = vmax.f32 %v437, %v439
  %v679 = vmax.f32 %v443, %v445
  %v680 = vmax.f32 %v449, %v451
  %v681 = vmax.f32 %v455, %v457
  %v682 = vmax.f32 %v461, %v463
  %v683 = vmax.f32 %v467, %v469
  %v684 = vmax.f32 %v473, %v475
  %v685 = vmax.f32 %v479, %v481
  %v686 = vmax.f32 %v485, %v487
  %v687 = vmax.f32 %v491, %v493
  %v688 = vmax.f32 %v497, %v499
  %v689 = vmax.f32 %v503, %v505
  %v690 = vmax.f32 %v509, %v511
  %v691 = vmax.f32 %v515, %v517
  %v692 = vmax.f32 %v521, %v523
  %v693 = vmax.f32 %v527, %v529
  %v694 = vmax.f32 %v533, %v535
  %v695 = vmax.f32 %v539, %v541
  %v696 = vmax.f32 %v545, %v547
  %v697 = vmax.f32 %v551, %v553
  %v698 = vmax.f32 %v557, %v559
  %v699 = vmax.f32 %v563, %v565
  %v700 = vmax.f32 %v569, %v571
  %v701 = vmax.f32 %v575, %v577
  %v702 = vmax.f32 %v581, %v583
  %v703 = vmax.f32 %v587, %v589
  %v704 = vmax.f32 %v593, %v595
  %v705 = vmax.f32 %v599, %v601
  %v706 = vmax.f32 %v605, %v607
  %v707 = vmax.f32 %v611, %v613
  %v708 = vmax.f32 %v617, %v619
  %v709 = vmax.f32 %v623, %v625
  %v710 = vmax.f32 %v629, %v631
  %v711 = vmax.f32 %v635, %v637
  %v712 = vmax.f32 %v641, %v643
  %v713 = vmax.f32 %v647, %v649
  %v714 = vmax.f32 %v653, %v655
  %v715 = vmax.f32 %v659, %v661
  %v716 = vmax.f32 %v665, %v667
  %v717 = vld [vmem:[%s2] sm:$0x1]
  %v718 = vmax.f32 %v669, %v681
  %v719 = vmax.f32 %v670, %v682
  %v720 = vmax.f32 %v671, %v683
  %v721 = vmax.f32 %v672, %v684
  %v722 = vmax.f32 %v673, %v685
  %v723 = vmax.f32 %v674, %v686
  %v724 = vmax.f32 %v675, %v687
  %v725 = vmax.f32 %v676, %v688
  %v726 = vmax.f32 %v677, %v689
  %v727 = vmax.f32 %v678, %v690
  %v728 = vmax.f32 %v679, %v691
  %v729 = vmax.f32 %v680, %v692
  %v731 = vlaneseq
  %v732 = vshrl.u32 %v731, 7
  %v733 = vsub.s32 0, %v732
  %v734 = vrot.slane %v717, %v733
  %v736 = vadd.f32 %v718, %v734
  %v737 = vadd.f32 %v719, %v734
  %v738 = vadd.f32 %v720, %v734
  %v739 = vadd.f32 %v721, %v734
  %v740 = vadd.f32 %v722, %v734
  %v741 = vadd.f32 %v723, %v734
  %v742 = vadd.f32 %v724, %v734
  %v743 = vadd.f32 %v725, %v734
  %v744 = vadd.f32 %v726, %v734
  %v745 = vadd.f32 %v727, %v734
  %v746 = vadd.f32 %v728, %v734
  %v747 = vadd.f32 %v729, %v734
  %v748 = vmax.f32 %v736, 0.0
  %v749 = vmax.f32 %v737, 0.0
  %v750 = vmax.f32 %v738, 0.0
  %v751 = vmax.f32 %v739, 0.0
  %v752 = vmax.f32 %v740, 0.0
  %v753 = vmax.f32 %v741, 0.0
  %v754 = vmax.f32 %v742, 0.0
  %v755 = vmax.f32 %v743, 0.0
  %v756 = vmax.f32 %v744, 0.0
  %v757 = vmax.f32 %v745, 0.0
  %v758 = vmax.f32 %v746, 0.0
  %v759 = vmax.f32 %v747, 0.0
  %v760 = vmax.f32 %v693, %v705
  %v761 = vmax.f32 %v694, %v706
  %v762 = vmax.f32 %v695, %v707
  %v763 = vmax.f32 %v696, %v708
  %v764 = vmax.f32 %v697, %v709
  %v765 = vmax.f32 %v698, %v710
  %v766 = vmax.f32 %v699, %v711
  %v767 = vmax.f32 %v700, %v712
  %v768 = vmax.f32 %v701, %v713
  %v769 = vmax.f32 %v702, %v714
  %v770 = vmax.f32 %v703, %v715
  %v771 = vmax.f32 %v704, %v716
  %v772 = vadd.f32 %v760, %v734
  %v773 = vadd.f32 %v761, %v734
  %v774 = vadd.f32 %v762, %v734
  %v775 = vadd.f32 %v763, %v734
  %v776 = vadd.f32 %v764, %v734
  %v777 = vadd.f32 %v765, %v734
  %v778 = vadd.f32 %v766, %v734
  %v779 = vadd.f32 %v767, %v734
  %v780 = vadd.f32 %v768, %v734
  %v781 = vadd.f32 %v769, %v734
  %v782 = vadd.f32 %v770, %v734
  %v783 = vadd.f32 %v771, %v734
  %v784 = vmax.f32 %v772, 0.0
  %v785 = vmax.f32 %v773, 0.0
  %v786 = vmax.f32 %v774, 0.0
  %v787 = vmax.f32 %v775, 0.0
  %v788 = vmax.f32 %v776, 0.0
  %v789 = vmax.f32 %v777, 0.0
  %v790 = vmax.f32 %v778, 0.0
  %v791 = vmax.f32 %v779, 0.0
  %v792 = vmax.f32 %v780, 0.0
  %v793 = vmax.f32 %v781, 0.0
  %v794 = vmax.f32 %v782, 0.0
  %v795 = vmax.f32 %v783, 0.0
  %v796 = vld [vmem:[%s4] sm:$0x1]
  %v797 = vld [vmem:[%s3] sm:$0xff]
  %v798 = vld [vmem:[%s3 + $0x8] sm:$0xff]
  %v799 = vld [vmem:[%s3 + $0x10] sm:$0xff]
  %v800 = vld [vmem:[%s3 + $0x18] sm:$0xff]
  %v801 = vld [vmem:[%s3 + $0x20] sm:$0xff]
  %v802 = vld [vmem:[%s3 + $0x28] sm:$0xff]
  %v803 = vld [vmem:[%s3 + $0x30] sm:$0xff]
  %v804 = vld [vmem:[%s3 + $0x38] sm:$0xff]
  %v805 = vld [vmem:[%s3 + $0x40] sm:$0xff]
  %v806 = vld [vmem:[%s3 + $0x48] sm:$0xff]
  %v807 = vld [vmem:[%s3 + $0x50] sm:$0xff]
  %v808 = vld [vmem:[%s3 + $0x58] sm:$0xff]
  %v809 = vld [vmem:[%s3 + $0x60] sm:$0xff]
  %v810 = vld [vmem:[%s3 + $0x68] sm:$0xff]
  %v811 = vld [vmem:[%s3 + $0x70] sm:$0xff]
  %v812 = vld [vmem:[%s3 + $0x78] sm:$0xff]
  %v813 = vld [vmem:[%s3 + $0x80] sm:$0xff]
  %v814 = vld [vmem:[%s3 + $0x88] sm:$0xff]
  %v815 = vld [vmem:[%s3 + $0x90] sm:$0xff]
  %v816 = vld [vmem:[%s3 + $0x98] sm:$0xff]
  %v817 = vld [vmem:[%s3 + $0xa0] sm:$0xff]
  %v818 = vld [vmem:[%s3 + $0xa8] sm:$0xff]
  %v819 = vld [vmem:[%s3 + $0xb0] sm:$0xff]
  %v820 = vld [vmem:[%s3 + $0xb8] sm:$0xff]
  %v821 = vld [vmem:[%s3 + $0xc0] sm:$0xff]
  %v822 = vld [vmem:[%s3 + $0xc8] sm:$0xff]
  %v823 = vld [vmem:[%s3 + $0xd0] sm:$0xff]
  %v824 = vld [vmem:[%s3 + $0xd8] sm:$0xff]
  %v825 = vld [vmem:[%s3 + $0xe0] sm:$0xff]
  %v826 = vld [vmem:[%s3 + $0xe8] sm:$0xff]
  %v827 = vld [vmem:[%s3 + $0xf0] sm:$0xff]
  %v828 = vld [vmem:[%s3 + $0xf8] sm:$0xff]
  %s829 = scalar_lea.vmem %s3, 256
  %v830 = vld [vmem:[%s829] sm:$0xff]
  %v831 = vld [vmem:[%s829 + $0x8] sm:$0xff]
  %v832 = vld [vmem:[%s829 + $0x10] sm:$0xff]
  %v833 = vld [vmem:[%s829 + $0x18] sm:$0xff]
  %v834 = vld [vmem:[%s829 + $0x20] sm:$0xff]
  %v835 = vld [vmem:[%s829 + $0x28] sm:$0xff]
  %v836 = vld [vmem:[%s829 + $0x30] sm:$0xff]
  %v837 = vld [vmem:[%s829 + $0x38] sm:$0xff]
  %v838 = vld [vmem:[%s829 + $0x40] sm:$0xff]
  %v839 = vld [vmem:[%s829 + $0x48] sm:$0xff]
  %v840 = vld [vmem:[%s829 + $0x50] sm:$0xff]
  %v841 = vld [vmem:[%s829 + $0x58] sm:$0xff]
  %v842 = vld [vmem:[%s829 + $0x60] sm:$0xff]
  %v843 = vld [vmem:[%s829 + $0x68] sm:$0xff]
  %v844 = vld [vmem:[%s829 + $0x70] sm:$0xff]
  %v845 = vld [vmem:[%s829 + $0x78] sm:$0xff]
  %v846 = vld [vmem:[%s829 + $0x80] sm:$0xff]
  %v847 = vld [vmem:[%s829 + $0x88] sm:$0xff]
  %v848 = vld [vmem:[%s829 + $0x90] sm:$0xff]
  %v849 = vld [vmem:[%s829 + $0x98] sm:$0xff]
  %v850 = vld [vmem:[%s829 + $0xa0] sm:$0xff]
  %v851 = vld [vmem:[%s829 + $0xa8] sm:$0xff]
  %v852 = vld [vmem:[%s829 + $0xb0] sm:$0xff]
  %v853 = vld [vmem:[%s829 + $0xb8] sm:$0xff]
  %v854 = vld [vmem:[%s829 + $0xc0] sm:$0xff]
  %v855 = vld [vmem:[%s829 + $0xc8] sm:$0xff]
  %v856 = vld [vmem:[%s829 + $0xd0] sm:$0xff]
  %v857 = vld [vmem:[%s829 + $0xd8] sm:$0xff]
  %v858 = vld [vmem:[%s829 + $0xe0] sm:$0xff]
  %v859 = vld [vmem:[%s829 + $0xe8] sm:$0xff]
  %v860 = vld [vmem:[%s829 + $0xf0] sm:$0xff]
  %v861 = vld [vmem:[%s829 + $0xf8] sm:$0xff]
  %862 = vmatprep.subr.mxu0 %v831
  %863 = vmatpush1.msra.mxu0 %v830
  %864 = vmatprep.subr.mxu0 %v833
  %865 = vmatpush1.msra.mxu0 %v832
  %866 = vmatprep.subr.mxu0 %v835
  %867 = vmatpush1.msra.mxu0 %v834
  %868 = vmatprep.subr.mxu0 %v837
  %869 = vmatpush1.msra.mxu0 %v836
  %870 = vmatprep.subr.mxu0 %v839
  %871 = vmatpush1.msra.mxu0 %v838
  %872 = vmatprep.subr.mxu0 %v841
  %873 = vmatpush1.msra.mxu0 %v840
  %874 = vmatprep.subr.mxu0 %v843
  %875 = vmatpush1.msra.mxu0 %v842
  %876 = vmatprep.subr.mxu0 %v845
  %877 = vmatpush1.msra.mxu0 %v844
  %878 = vmatprep.subr.mxu0 %v847
  %879 = vmatpush1.msra.mxu0 %v846
  %880 = vmatprep.subr.mxu0 %v849
  %881 = vmatpush1.msra.mxu0 %v848
  %882 = vmatprep.subr.mxu0 %v851
  %883 = vmatpush1.msra.mxu0 %v850
  %884 = vmatprep.subr.mxu0 %v853
  %885 = vmatpush1.msra.mxu0 %v852
  %886 = vmatprep.subr.mxu0 %v855
  %887 = vmatpush1.msra.mxu0 %v854
  %888 = vmatprep.subr.mxu0 %v857
  %889 = vmatpush1.msra.mxu0 %v856
  %890 = vmatprep.subr.mxu0 %v859
  %891 = vmatpush1.msra.mxu0 %v858
  %892 = vmatprep.subr.mxu0 %v861
  %893 = vmatpush1.msra.mxu0 %v860
  %894 = vmatprep.subr.mxu0 0.0
  %895 = vmatpush1.msra.mxu0 0.0
  %896 = vmatprep.subr.mxu0 0.0
  %897 = vmatpush1.msra.mxu0 0.0
  %898 = vmatprep.subr.mxu0 0.0
  %899 = vmatpush1.msra.mxu0 0.0
  %900 = vmatprep.subr.mxu0 0.0
  %901 = vmatpush1.msra.mxu0 0.0
  %902 = vmatprep.subr.mxu0 0.0
  %903 = vmatpush1.msra.mxu0 0.0
  %904 = vmatprep.subr.mxu0 0.0
  %905 = vmatpush1.msra.mxu0 0.0
  %906 = vmatprep.subr.mxu0 0.0
  %907 = vmatpush1.msra.mxu0 0.0
  %908 = vmatprep.subr.mxu0 0.0
  %909 = vmatpush1.msra.mxu0 0.0
  %910 = vmatprep.subr.mxu0 0.0
  %911 = vmatpush1.msra.mxu0 0.0
  %912 = vmatprep.subr.mxu0 0.0
  %913 = vmatpush1.msra.mxu0 0.0
  %914 = vmatprep.subr.mxu0 0.0
  %915 = vmatpush1.msra.mxu0 0.0
  %916 = vmatprep.subr.mxu0 0.0
  %917 = vmatpush1.msra.mxu0 0.0
  %918 = vmatprep.subr.mxu0 0.0
  %919 = vmatpush1.msra.mxu0 0.0
  %920 = vmatprep.subr.mxu0 0.0
  %921 = vmatpush1.msra.mxu0 0.0
  %922 = vmatprep.subr.mxu0 0.0
  %923 = vmatpush1.msra.mxu0 0.0
  %924 = vmatprep.subr.mxu0 0.0
  %925 = vmatpush1.msra.mxu0 0.0
  %926 = vmatprep.mubr.f32.mxu0 0.0
  %927 = vmatmul.mubr.f32.gmra.mrb[0].mxu0 %v784
  %v928 = vpop.f32.mrb[0].mxu0
  %v929 = vadd.f32 0.0, %v928
  %v930 = vpop.f32.mrb[0].mxu0
  %v931 = vadd.f32 0.0, %v930
  %932 = vmatprep.mubr.f32.mxu0 0.0
  %933 = vmatmul.mubr.f32.gmra.mrb[0].mxu0 %v785
  %v934 = vpop.f32.mrb[0].mxu0
  %v935 = vadd.f32 0.0, %v934
  %v936 = vpop.f32.mrb[0].mxu0
  %v937 = vadd.f32 0.0, %v936
  %938 = vmatprep.mubr.f32.mxu0 0.0
  %939 = vmatmul.mubr.f32.gmra.mrb[0].mxu0 %v786
  %v940 = vpop.f32.mrb[0].mxu0
  %v941 = vadd.f32 0.0, %v940
  %v942 = vpop.f32.mrb[0].mxu0
  %v943 = vadd.f32 0.0, %v942
  %944 = vmatprep.mubr.f32.mxu0 0.0
  %945 = vmatmul.mubr.f32.gmra.mrb[0].mxu0 %v787
  %v946 = vpop.f32.mrb[0].mxu0
  %v947 = vadd.f32 0.0, %v946
  %v948 = vpop.f32.mrb[0].mxu0
  %v949 = vadd.f32 0.0, %v948
  %950 = vmatprep.mubr.f32.mxu0 0.0
  %951 = vmatmul.mubr.f32.gmra.mrb[0].mxu0 %v788
  %v952 = vpop.f32.mrb[0].mxu0
  %v953 = vadd.f32 0.0, %v952
  %v954 = vpop.f32.mrb[0].mxu0
  %v955 = vadd.f32 0.0, %v954
  %956 = vmatprep.mubr.f32.mxu0 0.0
  %957 = vmatmul.mubr.f32.gmra.mrb[0].mxu0 %v789
  %v958 = vpop.f32.mrb[0].mxu0
  %v959 = vadd.f32 0.0, %v958
  %v960 = vpop.f32.mrb[0].mxu0
  %v961 = vadd.f32 0.0, %v960
  %962 = vmatprep.mubr.f32.mxu0 0.0
  %963 = vmatmul.mubr.f32.gmra.mrb[0].mxu0 %v790
  %v964 = vpop.f32.mrb[0].mxu0
  %v965 = vadd.f32 0.0, %v964
  %v966 = vpop.f32.mrb[0].mxu0
  %v967 = vadd.f32 0.0, %v966
  %968 = vmatprep.mubr.f32.mxu0 0.0
  %969 = vmatmul.mubr.f32.gmra.mrb[0].mxu0 %v791
  %v970 = vpop.f32.mrb[0].mxu0
  %v971 = vadd.f32 0.0, %v970
  %v972 = vpop.f32.mrb[0].mxu0
  %v973 = vadd.f32 0.0, %v972
  %974 = vdwg.mxu0
  %975 = vmatprep.subr.mxu0 %v798
  %976 = vmatpush1.msra.mxu0 %v797
  %977 = vmatprep.subr.mxu0 %v800
  %978 = vmatpush1.msra.mxu0 %v799
  %979 = vmatprep.subr.mxu0 %v802
  %980 = vmatpush1.msra.mxu0 %v801
  %981 = vmatprep.subr.mxu0 %v804
  %982 = vmatpush1.msra.mxu0 %v803
  %983 = vmatprep.subr.mxu0 %v806
  %984 = vmatpush1.msra.mxu0 %v805
  %985 = vmatprep.subr.mxu0 %v808
  %986 = vmatpush1.msra.mxu0 %v807
  %987 = vmatprep.subr.mxu0 %v810
  %988 = vmatpush1.msra.mxu0 %v809
  %989 = vmatprep.subr.mxu0 %v812
  %990 = vmatpush1.msra.mxu0 %v811
  %991 = vmatprep.subr.mxu0 %v814
  %992 = vmatpush1.msra.mxu0 %v813
  %993 = vmatprep.subr.mxu0 %v816
  %994 = vmatpush1.msra.mxu0 %v815
  %995 = vmatprep.subr.mxu0 %v818
  %996 = vmatpush1.msra.mxu0 %v817
  %997 = vmatprep.subr.mxu0 %v820
  %998 = vmatpush1.msra.mxu0 %v819
  %999 = vmatprep.subr.mxu0 %v822
  %1000 = vmatpush1.msra.mxu0 %v821
  %1001 = vmatprep.subr.mxu0 %v824
  %1002 = vmatpush1.msra.mxu0 %v823
  %1003 = vmatprep.subr.mxu0 %v826
  %1004 = vmatpush1.msra.mxu0 %v825
  %1005 = vmatprep.subr.mxu0 %v828
  %1006 = vmatpush1.msra.mxu0 %v827
  %1007 = vmatprep.subr.mxu0 0.0
  %1008 = vmatpush1.msra.mxu0 0.0
  %1009 = vmatprep.subr.mxu0 0.0
  %1010 = vmatpush1.msra.mxu0 0.0
  %1011 = vmatprep.subr.mxu0 0.0
  %1012 = vmatpush1.msra.mxu0 0.0
  %1013 = vmatprep.subr.mxu0 0.0
  %1014 = vmatpush1.msra.mxu0 0.0
  %1015 = vmatprep.subr.mxu0 0.0
  %1016 = vmatpush1.msra.mxu0 0.0
  %1017 = vmatprep.subr.mxu0 0.0
  %1018 = vmatpush1.msra.mxu0 0.0
  %1019 = vmatprep.subr.mxu0 0.0
  %1020 = vmatpush1.msra.mxu0 0.0
  %1021 = vmatprep.subr.mxu0 0.0
  %1022 = vmatpush1.msra.mxu0 0.0
  %1023 = vmatprep.subr.mxu0 0.0
  %1024 = vmatpush1.msra.mxu0 0.0
  %1025 = vmatprep.subr.mxu0 0.0
  %1026 = vmatpush1.msra.mxu0 0.0
  %1027 = vmatprep.subr.mxu0 0.0
  %1028 = vmatpush1.msra.mxu0 0.0
  %1029 = vmatprep.subr.mxu0 0.0
  %1030 = vmatpush1.msra.mxu0 0.0
  %1031 = vmatprep.subr.mxu0 0.0
  %1032 = vmatpush1.msra.mxu0 0.0
  %1033 = vmatprep.subr.mxu0 0.0
  %1034 = vmatpush1.msra.mxu0 0.0
  %1035 = vmatprep.subr.mxu0 0.0
  %1036 = vmatpush1.msra.mxu0 0.0
  %1037 = vmatprep.subr.mxu0 0.0
  %1038 = vmatpush1.msra.mxu0 0.0
  %1039 = vmatprep.mubr.f32.mxu0 0.0
  %1040 = vmatmul.mubr.f32.gmra.mrb[0].mxu0 %v748
  %v1041 = vpop.f32.mrb[0].mxu0
  %v1042 = vadd.f32 %v929, %v1041
  %v1043 = vpop.f32.mrb[0].mxu0
  %v1044 = vadd.f32 %v931, %v1043
  %1045 = vmatprep.mubr.f32.mxu0 0.0
  %1046 = vmatmul.mubr.f32.gmra.mrb[0].mxu0 %v749
  %v1047 = vpop.f32.mrb[0].mxu0
  %v1048 = vadd.f32 %v935, %v1047
  %v1049 = vpop.f32.mrb[0].mxu0
  %v1050 = vadd.f32 %v937, %v1049
  %1051 = vmatprep.mubr.f32.mxu0 0.0
  %1052 = vmatmul.mubr.f32.gmra.mrb[0].mxu0 %v750
  %v1053 = vpop.f32.mrb[0].mxu0
  %v1054 = vadd.f32 %v941, %v1053
  %v1055 = vpop.f32.mrb[0].mxu0
  %v1056 = vadd.f32 %v943, %v1055
  %1057 = vmatprep.mubr.f32.mxu0 0.0
  %1058 = vmatmul.mubr.f32.gmra.mrb[0].mxu0 %v751
  %v1059 = vpop.f32.mrb[0].mxu0
  %v1060 = vadd.f32 %v947, %v1059
  %v1061 = vpop.f32.mrb[0].mxu0
  %v1062 = vadd.f32 %v949, %v1061
  %1063 = vmatprep.mubr.f32.mxu0 0.0
  %1064 = vmatmul.mubr.f32.gmra.mrb[0].mxu0 %v752
  %v1065 = vpop.f32.mrb[0].mxu0
  %v1066 = vadd.f32 %v953, %v1065
  %v1067 = vpop.f32.mrb[0].mxu0
  %v1068 = vadd.f32 %v955, %v1067
  %1069 = vmatprep.mubr.f32.mxu0 0.0
  %1070 = vmatmul.mubr.f32.gmra.mrb[0].mxu0 %v753
  %v1071 = vpop.f32.mrb[0].mxu0
  %v1072 = vadd.f32 %v959, %v1071
  %v1073 = vpop.f32.mrb[0].mxu0
  %v1074 = vadd.f32 %v961, %v1073
  %1075 = vmatprep.mubr.f32.mxu0 0.0
  %1076 = vmatmul.mubr.f32.gmra.mrb[0].mxu0 %v754
  %v1077 = vpop.f32.mrb[0].mxu0
  %v1078 = vadd.f32 %v965, %v1077
  %v1079 = vpop.f32.mrb[0].mxu0
  %v1080 = vadd.f32 %v967, %v1079
  %1081 = vmatprep.mubr.f32.mxu0 0.0
  %1082 = vmatmul.mubr.f32.gmra.mrb[0].mxu0 %v755
  %v1083 = vpop.f32.mrb[0].mxu0
  %v1084 = vadd.f32 %v971, %v1083
  %v1085 = vpop.f32.mrb[0].mxu0
  %v1086 = vadd.f32 %v973, %v1085
  %1087 = vdwg.mxu0
  %s1088 = scalar_lea.vmem %s3, 512
  %v1089 = vld [vmem:[%s1088] sm:$0xff]
  %v1090 = vld [vmem:[%s1088 + $0x8] sm:$0xff]
  %v1091 = vld [vmem:[%s1088 + $0x10] sm:$0xff]
  %v1092 = vld [vmem:[%s1088 + $0x18] sm:$0xff]
  %v1093 = vld [vmem:[%s1088 + $0x20] sm:$0xff]
  %v1094 = vld [vmem:[%s1088 + $0x28] sm:$0xff]
  %v1095 = vld [vmem:[%s1088 + $0x30] sm:$0xff]
  %v1096 = vld [vmem:[%s1088 + $0x38] sm:$0xff]
  %v1097 = vld [vmem:[%s1088 + $0x40] sm:$0xff]
  %v1098 = vld [vmem:[%s1088 + $0x48] sm:$0xff]
  %v1099 = vld [vmem:[%s1088 + $0x50] sm:$0xff]
  %v1100 = vld [vmem:[%s1088 + $0x58] sm:$0xff]
  %v1101 = vld [vmem:[%s1088 + $0x60] sm:$0xff]
  %v1102 = vld [vmem:[%s1088 + $0x68] sm:$0xff]
  %v1103 = vld [vmem:[%s1088 + $0x70] sm:$0xff]
  %v1104 = vld [vmem:[%s1088 + $0x78] sm:$0xff]
  %v1105 = vld [vmem:[%s1088 + $0x80] sm:$0xff]
  %v1106 = vld [vmem:[%s1088 + $0x88] sm:$0xff]
  %v1107 = vld [vmem:[%s1088 + $0x90] sm:$0xff]
  %v1108 = vld [vmem:[%s1088 + $0x98] sm:$0xff]
  %v1109 = vld [vmem:[%s1088 + $0xa0] sm:$0xff]
  %v1110 = vld [vmem:[%s1088 + $0xa8] sm:$0xff]
  %v1111 = vld [vmem:[%s1088 + $0xb0] sm:$0xff]
  %v1112 = vld [vmem:[%s1088 + $0xb8] sm:$0xff]
  %v1113 = vld [vmem:[%s1088 + $0xc0] sm:$0xff]
  %v1114 = vld [vmem:[%s1088 + $0xc8] sm:$0xff]
  %v1115 = vld [vmem:[%s1088 + $0xd0] sm:$0xff]
  %v1116 = vld [vmem:[%s1088 + $0xd8] sm:$0xff]
  %v1117 = vld [vmem:[%s1088 + $0xe0] sm:$0xff]
  %v1118 = vld [vmem:[%s1088 + $0xe8] sm:$0xff]
  %v1119 = vld [vmem:[%s1088 + $0xf0] sm:$0xff]
  %v1120 = vld [vmem:[%s1088 + $0xf8] sm:$0xff]
  %1121 = vmatprep.subr.mxu0 %v1090
  %1122 = vmatpush1.msra.mxu0 %v1089
  %1123 = vmatprep.subr.mxu0 %v1092
  %1124 = vmatpush1.msra.mxu0 %v1091
  %1125 = vmatprep.subr.mxu0 %v1094
  %1126 = vmatpush1.msra.mxu0 %v1093
  %1127 = vmatprep.subr.mxu0 %v1096
  %1128 = vmatpush1.msra.mxu0 %v1095
  %1129 = vmatprep.subr.mxu0 %v1098
  %1130 = vmatpush1.msra.mxu0 %v1097
  %1131 = vmatprep.subr.mxu0 %v1100
  %1132 = vmatpush1.msra.mxu0 %v1099
  %1133 = vmatprep.subr.mxu0 %v1102
  %1134 = vmatpush1.msra.mxu0 %v1101
  %1135 = vmatprep.subr.mxu0 %v1104
  %1136 = vmatpush1.msra.mxu0 %v1103
  %1137 = vmatprep.subr.mxu0 %v1106
  %1138 = vmatpush1.msra.mxu0 %v1105
  %1139 = vmatprep.subr.mxu0 %v1108
  %1140 = vmatpush1.msra.mxu0 %v1107
  %1141 = vmatprep.subr.mxu0 %v1110
  %1142 = vmatpush1.msra.mxu0 %v1109
  %1143 = vmatprep.subr.mxu0 %v1112
  %1144 = vmatpush1.msra.mxu0 %v1111
  %1145 = vmatprep.subr.mxu0 %v1114
  %1146 = vmatpush1.msra.mxu0 %v1113
  %1147 = vmatprep.subr.mxu0 %v1116
  %1148 = vmatpush1.msra.mxu0 %v1115
  %1149 = vmatprep.subr.mxu0 %v1118
  %1150 = vmatpush1.msra.mxu0 %v1117
  %1151 = vmatprep.subr.mxu0 %v1120
  %1152 = vmatpush1.msra.mxu0 %v1119
  %1153 = vmatprep.subr.mxu0 0.0
  %1154 = vmatpush1.msra.mxu0 0.0
  %1155 = vmatprep.subr.mxu0 0.0
  %1156 = vmatpush1.msra.mxu0 0.0
  %1157 = vmatprep.subr.mxu0 0.0
  %1158 = vmatpush1.msra.mxu0 0.0
  %1159 = vmatprep.subr.mxu0 0.0
  %1160 = vmatpush1.msra.mxu0 0.0
  %1161 = vmatprep.subr.mxu0 0.0
  %1162 = vmatpush1.msra.mxu0 0.0
  %1163 = vmatprep.subr.mxu0 0.0
  %1164 = vmatpush1.msra.mxu0 0.0
  %1165 = vmatprep.subr.mxu0 0.0
  %1166 = vmatpush1.msra.mxu0 0.0
  %1167 = vmatprep.subr.mxu0 0.0
  %1168 = vmatpush1.msra.mxu0 0.0
  %1169 = vmatprep.subr.mxu0 0.0
  %1170 = vmatpush1.msra.mxu0 0.0
  %1171 = vmatprep.subr.mxu0 0.0
  %1172 = vmatpush1.msra.mxu0 0.0
  %1173 = vmatprep.subr.mxu0 0.0
  %1174 = vmatpush1.msra.mxu0 0.0
  %1175 = vmatprep.subr.mxu0 0.0
  %1176 = vmatpush1.msra.mxu0 0.0
  %1177 = vmatprep.subr.mxu0 0.0
  %1178 = vmatpush1.msra.mxu0 0.0
  %1179 = vmatprep.subr.mxu0 0.0
  %1180 = vmatpush1.msra.mxu0 0.0
  %1181 = vmatprep.subr.mxu0 0.0
  %1182 = vmatpush1.msra.mxu0 0.0
  %1183 = vmatprep.subr.mxu0 0.0
  %1184 = vmatpush1.msra.mxu0 0.0
  %1185 = vmatprep.mubr.f32.mxu0 0.0
  %1186 = vmatmul.mubr.f32.gmra.mrb[0].mxu0 %v750
  %v1187 = vpop.f32.mrb[0].mxu0
  %v1188 = vadd.f32 0.0, %v1187
  %v1189 = vpop.f32.mrb[0].mxu0
  %v1190 = vadd.f32 0.0, %v1189
  %1191 = vmatprep.mubr.f32.mxu0 0.0
  %1192 = vmatmul.mubr.f32.gmra.mrb[0].mxu0 %v751
  %v1193 = vpop.f32.mrb[0].mxu0
  %v1194 = vadd.f32 0.0, %v1193
  %v1195 = vpop.f32.mrb[0].mxu0
  %v1196 = vadd.f32 0.0, %v1195
  %1197 = vmatprep.mubr.f32.mxu0 0.0
  %1198 = vmatmul.mubr.f32.gmra.mrb[0].mxu0 %v752
  %v1199 = vpop.f32.mrb[0].mxu0
  %v1200 = vadd.f32 0.0, %v1199
  %v1201 = vpop.f32.mrb[0].mxu0
  %v1202 = vadd.f32 0.0, %v1201
  %1203 = vmatprep.mubr.f32.mxu0 0.0
  %1204 = vmatmul.mubr.f32.gmra.mrb[0].mxu0 %v753
  %v1205 = vpop.f32.mrb[0].mxu0
  %v1206 = vadd.f32 0.0, %v1205
  %v1207 = vpop.f32.mrb[0].mxu0
  %v1208 = vadd.f32 0.0, %v1207
  %1209 = vmatprep.mubr.f32.mxu0 0.0
  %1210 = vmatmul.mubr.f32.gmra.mrb[0].mxu0 %v754
  %v1211 = vpop.f32.mrb[0].mxu0
  %v1212 = vadd.f32 0.0, %v1211
  %v1213 = vpop.f32.mrb[0].mxu0
  %v1214 = vadd.f32 0.0, %v1213
  %1215 = vmatprep.mubr.f32.mxu0 0.0
  %1216 = vmatmul.mubr.f32.gmra.mrb[0].mxu0 %v755
  %v1217 = vpop.f32.mrb[0].mxu0
  %v1218 = vadd.f32 0.0, %v1217
  %v1219 = vpop.f32.mrb[0].mxu0
  %v1220 = vadd.f32 0.0, %v1219
  %1221 = vmatprep.mubr.f32.mxu0 0.0
  %1222 = vmatmul.mubr.f32.gmra.mrb[0].mxu0 %v756
  %v1223 = vpop.f32.mrb[0].mxu0
  %v1224 = vadd.f32 0.0, %v1223
  %v1225 = vpop.f32.mrb[0].mxu0
  %v1226 = vadd.f32 0.0, %v1225
  %1227 = vmatprep.mubr.f32.mxu0 0.0
  %1228 = vmatmul.mubr.f32.gmra.mrb[0].mxu0 %v757
  %v1229 = vpop.f32.mrb[0].mxu0
  %v1230 = vadd.f32 0.0, %v1229
  %v1231 = vpop.f32.mrb[0].mxu0
  %v1232 = vadd.f32 0.0, %v1231
  %1233 = vdwg.mxu0
  %v1234 = vadd.f32 %v1042, %v1188
  %v1235 = vadd.f32 %v1044, %v1190
  %v1236 = vadd.f32 %v1048, %v1194
  %v1237 = vadd.f32 %v1050, %v1196
  %v1238 = vadd.f32 %v1054, %v1200
  %v1239 = vadd.f32 %v1056, %v1202
  %v1240 = vadd.f32 %v1060, %v1206
  %v1241 = vadd.f32 %v1062, %v1208
  %v1242 = vadd.f32 %v1066, %v1212
  %v1243 = vadd.f32 %v1068, %v1214
  %v1244 = vadd.f32 %v1072, %v1218
  %v1245 = vadd.f32 %v1074, %v1220
  %v1246 = vadd.f32 %v1078, %v1224
  %v1247 = vadd.f32 %v1080, %v1226
  %v1248 = vadd.f32 %v1084, %v1230
  %v1249 = vadd.f32 %v1086, %v1232
  %s1250 = scalar_lea.vmem %s3, 768
  %v1251 = vld [vmem:[%s1250] sm:$0xff]
  %v1252 = vld [vmem:[%s1250 + $0x8] sm:$0xff]
  %v1253 = vld [vmem:[%s1250 + $0x10] sm:$0xff]
  %v1254 = vld [vmem:[%s1250 + $0x18] sm:$0xff]
  %v1255 = vld [vmem:[%s1250 + $0x20] sm:$0xff]
  %v1256 = vld [vmem:[%s1250 + $0x28] sm:$0xff]
  %v1257 = vld [vmem:[%s1250 + $0x30] sm:$0xff]
  %v1258 = vld [vmem:[%s1250 + $0x38] sm:$0xff]
  %v1259 = vld [vmem:[%s1250 + $0x40] sm:$0xff]
  %v1260 = vld [vmem:[%s1250 + $0x48] sm:$0xff]
  %v1261 = vld [vmem:[%s1250 + $0x50] sm:$0xff]
  %v1262 = vld [vmem:[%s1250 + $0x58] sm:$0xff]
  %v1263 = vld [vmem:[%s1250 + $0x60] sm:$0xff]
  %v1264 = vld [vmem:[%s1250 + $0x68] sm:$0xff]
  %v1265 = vld [vmem:[%s1250 + $0x70] sm:$0xff]
  %v1266 = vld [vmem:[%s1250 + $0x78] sm:$0xff]
  %v1267 = vld [vmem:[%s1250 + $0x80] sm:$0xff]
  %v1268 = vld [vmem:[%s1250 + $0x88] sm:$0xff]
  %v1269 = vld [vmem:[%s1250 + $0x90] sm:$0xff]
  %v1270 = vld [vmem:[%s1250 + $0x98] sm:$0xff]
  %v1271 = vld [vmem:[%s1250 + $0xa0] sm:$0xff]
  %v1272 = vld [vmem:[%s1250 + $0xa8] sm:$0xff]
  %v1273 = vld [vmem:[%s1250 + $0xb0] sm:$0xff]
  %v1274 = vld [vmem:[%s1250 + $0xb8] sm:$0xff]
  %v1275 = vld [vmem:[%s1250 + $0xc0] sm:$0xff]
  %v1276 = vld [vmem:[%s1250 + $0xc8] sm:$0xff]
  %v1277 = vld [vmem:[%s1250 + $0xd0] sm:$0xff]
  %v1278 = vld [vmem:[%s1250 + $0xd8] sm:$0xff]
  %v1279 = vld [vmem:[%s1250 + $0xe0] sm:$0xff]
  %v1280 = vld [vmem:[%s1250 + $0xe8] sm:$0xff]
  %v1281 = vld [vmem:[%s1250 + $0xf0] sm:$0xff]
  %v1282 = vld [vmem:[%s1250 + $0xf8] sm:$0xff]
  %1283 = vmatprep.subr.mxu0 %v1252
  %1284 = vmatpush1.msra.mxu0 %v1251
  %1285 = vmatprep.subr.mxu0 %v1254
  %1286 = vmatpush1.msra.mxu0 %v1253
  %1287 = vmatprep.subr.mxu0 %v1256
  %1288 = vmatpush1.msra.mxu0 %v1255
  %1289 = vmatprep.subr.mxu0 %v1258
  %1290 = vmatpush1.msra.mxu0 %v1257
  %1291 = vmatprep.subr.mxu0 %v1260
  %1292 = vmatpush1.msra.mxu0 %v1259
  %1293 = vmatprep.subr.mxu0 %v1262
  %1294 = vmatpush1.msra.mxu0 %v1261
  %1295 = vmatprep.subr.mxu0 %v1264
  %1296 = vmatpush1.msra.mxu0 %v1263
  %1297 = vmatprep.subr.mxu0 %v1266
  %1298 = vmatpush1.msra.mxu0 %v1265
  %1299 = vmatprep.subr.mxu0 %v1268
  %1300 = vmatpush1.msra.mxu0 %v1267
  %1301 = vmatprep.subr.mxu0 %v1270
  %1302 = vmatpush1.msra.mxu0 %v1269
  %1303 = vmatprep.subr.mxu0 %v1272
  %1304 = vmatpush1.msra.mxu0 %v1271
  %1305 = vmatprep.subr.mxu0 %v1274
  %1306 = vmatpush1.msra.mxu0 %v1273
  %1307 = vmatprep.subr.mxu0 %v1276
  %1308 = vmatpush1.msra.mxu0 %v1275
  %1309 = vmatprep.subr.mxu0 %v1278
  %1310 = vmatpush1.msra.mxu0 %v1277
  %1311 = vmatprep.subr.mxu0 %v1280
  %1312 = vmatpush1.msra.mxu0 %v1279
  %1313 = vmatprep.subr.mxu0 %v1282
  %1314 = vmatpush1.msra.mxu0 %v1281
  %1315 = vmatprep.subr.mxu0 0.0
  %1316 = vmatpush1.msra.mxu0 0.0
  %1317 = vmatprep.subr.mxu0 0.0
  %1318 = vmatpush1.msra.mxu0 0.0
  %1319 = vmatprep.subr.mxu0 0.0
  %1320 = vmatpush1.msra.mxu0 0.0
  %1321 = vmatprep.subr.mxu0 0.0
  %1322 = vmatpush1.msra.mxu0 0.0
  %1323 = vmatprep.subr.mxu0 0.0
  %1324 = vmatpush1.msra.mxu0 0.0
  %1325 = vmatprep.subr.mxu0 0.0
  %1326 = vmatpush1.msra.mxu0 0.0
  %1327 = vmatprep.subr.mxu0 0.0
  %1328 = vmatpush1.msra.mxu0 0.0
  %1329 = vmatprep.subr.mxu0 0.0
  %1330 = vmatpush1.msra.mxu0 0.0
  %1331 = vmatprep.subr.mxu0 0.0
  %1332 = vmatpush1.msra.mxu0 0.0
  %1333 = vmatprep.subr.mxu0 0.0
  %1334 = vmatpush1.msra.mxu0 0.0
  %1335 = vmatprep.subr.mxu0 0.0
  %1336 = vmatpush1.msra.mxu0 0.0
  %1337 = vmatprep.subr.mxu0 0.0
  %1338 = vmatpush1.msra.mxu0 0.0
  %1339 = vmatprep.subr.mxu0 0.0
  %1340 = vmatpush1.msra.mxu0 0.0
  %1341 = vmatprep.subr.mxu0 0.0
  %1342 = vmatpush1.msra.mxu0 0.0
  %1343 = vmatprep.subr.mxu0 0.0
  %1344 = vmatpush1.msra.mxu0 0.0
  %1345 = vmatprep.subr.mxu0 0.0
  %1346 = vmatpush1.msra.mxu0 0.0
  %1347 = vmatprep.mubr.f32.mxu0 0.0
  %1348 = vmatmul.mubr.f32.gmra.mrb[0].mxu0 %v786
  %v1349 = vpop.f32.mrb[0].mxu0
  %v1350 = vadd.f32 0.0, %v1349
  %v1351 = vpop.f32.mrb[0].mxu0
  %v1352 = vadd.f32 0.0, %v1351
  %1353 = vmatprep.mubr.f32.mxu0 0.0
  %1354 = vmatmul.mubr.f32.gmra.mrb[0].mxu0 %v787
  %v1355 = vpop.f32.mrb[0].mxu0
  %v1356 = vadd.f32 0.0, %v1355
  %v1357 = vpop.f32.mrb[0].mxu0
  %v1358 = vadd.f32 0.0, %v1357
  %1359 = vmatprep.mubr.f32.mxu0 0.0
  %1360 = vmatmul.mubr.f32.gmra.mrb[0].mxu0 %v788
  %v1361 = vpop.f32.mrb[0].mxu0
  %v1362 = vadd.f32 0.0, %v1361
  %v1363 = vpop.f32.mrb[0].mxu0
  %v1364 = vadd.f32 0.0, %v1363
  %1365 = vmatprep.mubr.f32.mxu0 0.0
  %1366 = vmatmul.mubr.f32.gmra.mrb[0].mxu0 %v789
  %v1367 = vpop.f32.mrb[0].mxu0
  %v1368 = vadd.f32 0.0, %v1367
  %v1369 = vpop.f32.mrb[0].mxu0
  %v1370 = vadd.f32 0.0, %v1369
  %1371 = vmatprep.mubr.f32.mxu0 0.0
  %1372 = vmatmul.mubr.f32.gmra.mrb[0].mxu0 %v790
  %v1373 = vpop.f32.mrb[0].mxu0
  %v1374 = vadd.f32 0.0, %v1373
  %v1375 = vpop.f32.mrb[0].mxu0
  %v1376 = vadd.f32 0.0, %v1375
  %1377 = vmatprep.mubr.f32.mxu0 0.0
  %1378 = vmatmul.mubr.f32.gmra.mrb[0].mxu0 %v791
  %v1379 = vpop.f32.mrb[0].mxu0
  %v1380 = vadd.f32 0.0, %v1379
  %v1381 = vpop.f32.mrb[0].mxu0
  %v1382 = vadd.f32 0.0, %v1381
  %1383 = vmatprep.mubr.f32.mxu0 0.0
  %1384 = vmatmul.mubr.f32.gmra.mrb[0].mxu0 %v792
  %v1385 = vpop.f32.mrb[0].mxu0
  %v1386 = vadd.f32 0.0, %v1385
  %v1387 = vpop.f32.mrb[0].mxu0
  %v1388 = vadd.f32 0.0, %v1387
  %1389 = vmatprep.mubr.f32.mxu0 0.0
  %1390 = vmatmul.mubr.f32.gmra.mrb[0].mxu0 %v793
  %v1391 = vpop.f32.mrb[0].mxu0
  %v1392 = vadd.f32 0.0, %v1391
  %v1393 = vpop.f32.mrb[0].mxu0
  %v1394 = vadd.f32 0.0, %v1393
  %1395 = vdwg.mxu0
  %v1396 = vadd.f32 %v1234, %v1350
  %v1397 = vadd.f32 %v1235, %v1352
  %v1398 = vadd.f32 %v1236, %v1356
  %v1399 = vadd.f32 %v1237, %v1358
  %v1400 = vadd.f32 %v1238, %v1362
  %v1401 = vadd.f32 %v1239, %v1364
  %v1402 = vadd.f32 %v1240, %v1368
  %v1403 = vadd.f32 %v1241, %v1370
  %v1404 = vadd.f32 %v1242, %v1374
  %v1405 = vadd.f32 %v1243, %v1376
  %v1406 = vadd.f32 %v1244, %v1380
  %v1407 = vadd.f32 %v1245, %v1382
  %v1408 = vadd.f32 %v1246, %v1386
  %v1409 = vadd.f32 %v1247, %v1388
  %v1410 = vadd.f32 %v1248, %v1392
  %v1411 = vadd.f32 %v1249, %v1394
  %s1412 = scalar_lea.vmem %s3, 1024
  %v1413 = vld [vmem:[%s1412] sm:$0xff]
  %v1414 = vld [vmem:[%s1412 + $0x8] sm:$0xff]
  %v1415 = vld [vmem:[%s1412 + $0x10] sm:$0xff]
  %v1416 = vld [vmem:[%s1412 + $0x18] sm:$0xff]
  %v1417 = vld [vmem:[%s1412 + $0x20] sm:$0xff]
  %v1418 = vld [vmem:[%s1412 + $0x28] sm:$0xff]
  %v1419 = vld [vmem:[%s1412 + $0x30] sm:$0xff]
  %v1420 = vld [vmem:[%s1412 + $0x38] sm:$0xff]
  %v1421 = vld [vmem:[%s1412 + $0x40] sm:$0xff]
  %v1422 = vld [vmem:[%s1412 + $0x48] sm:$0xff]
  %v1423 = vld [vmem:[%s1412 + $0x50] sm:$0xff]
  %v1424 = vld [vmem:[%s1412 + $0x58] sm:$0xff]
  %v1425 = vld [vmem:[%s1412 + $0x60] sm:$0xff]
  %v1426 = vld [vmem:[%s1412 + $0x68] sm:$0xff]
  %v1427 = vld [vmem:[%s1412 + $0x70] sm:$0xff]
  %v1428 = vld [vmem:[%s1412 + $0x78] sm:$0xff]
  %v1429 = vld [vmem:[%s1412 + $0x80] sm:$0xff]
  %v1430 = vld [vmem:[%s1412 + $0x88] sm:$0xff]
  %v1431 = vld [vmem:[%s1412 + $0x90] sm:$0xff]
  %v1432 = vld [vmem:[%s1412 + $0x98] sm:$0xff]
  %v1433 = vld [vmem:[%s1412 + $0xa0] sm:$0xff]
  %v1434 = vld [vmem:[%s1412 + $0xa8] sm:$0xff]
  %v1435 = vld [vmem:[%s1412 + $0xb0] sm:$0xff]
  %v1436 = vld [vmem:[%s1412 + $0xb8] sm:$0xff]
  %v1437 = vld [vmem:[%s1412 + $0xc0] sm:$0xff]
  %v1438 = vld [vmem:[%s1412 + $0xc8] sm:$0xff]
  %v1439 = vld [vmem:[%s1412 + $0xd0] sm:$0xff]
  %v1440 = vld [vmem:[%s1412 + $0xd8] sm:$0xff]
  %v1441 = vld [vmem:[%s1412 + $0xe0] sm:$0xff]
  %v1442 = vld [vmem:[%s1412 + $0xe8] sm:$0xff]
  %v1443 = vld [vmem:[%s1412 + $0xf0] sm:$0xff]
  %v1444 = vld [vmem:[%s1412 + $0xf8] sm:$0xff]
  %1445 = vmatprep.subr.mxu0 %v1414
  %1446 = vmatpush1.msra.mxu0 %v1413
  %1447 = vmatprep.subr.mxu0 %v1416
  %1448 = vmatpush1.msra.mxu0 %v1415
  %1449 = vmatprep.subr.mxu0 %v1418
  %1450 = vmatpush1.msra.mxu0 %v1417
  %1451 = vmatprep.subr.mxu0 %v1420
  %1452 = vmatpush1.msra.mxu0 %v1419
  %1453 = vmatprep.subr.mxu0 %v1422
  %1454 = vmatpush1.msra.mxu0 %v1421
  %1455 = vmatprep.subr.mxu0 %v1424
  %1456 = vmatpush1.msra.mxu0 %v1423
  %1457 = vmatprep.subr.mxu0 %v1426
  %1458 = vmatpush1.msra.mxu0 %v1425
  %1459 = vmatprep.subr.mxu0 %v1428
  %1460 = vmatpush1.msra.mxu0 %v1427
  %1461 = vmatprep.subr.mxu0 %v1430
  %1462 = vmatpush1.msra.mxu0 %v1429
  %1463 = vmatprep.subr.mxu0 %v1432
  %1464 = vmatpush1.msra.mxu0 %v1431
  %1465 = vmatprep.subr.mxu0 %v1434
  %1466 = vmatpush1.msra.mxu0 %v1433
  %1467 = vmatprep.subr.mxu0 %v1436
  %1468 = vmatpush1.msra.mxu0 %v1435
  %1469 = vmatprep.subr.mxu0 %v1438
  %1470 = vmatpush1.msra.mxu0 %v1437
  %1471 = vmatprep.subr.mxu0 %v1440
  %1472 = vmatpush1.msra.mxu0 %v1439
  %1473 = vmatprep.subr.mxu0 %v1442
  %1474 = vmatpush1.msra.mxu0 %v1441
  %1475 = vmatprep.subr.mxu0 %v1444
  %1476 = vmatpush1.msra.mxu0 %v1443
  %1477 = vmatprep.subr.mxu0 0.0
  %1478 = vmatpush1.msra.mxu0 0.0
  %1479 = vmatprep.subr.mxu0 0.0
  %1480 = vmatpush1.msra.mxu0 0.0
  %1481 = vmatprep.subr.mxu0 0.0
  %1482 = vmatpush1.msra.mxu0 0.0
  %1483 = vmatprep.subr.mxu0 0.0
  %1484 = vmatpush1.msra.mxu0 0.0
  %1485 = vmatprep.subr.mxu0 0.0
  %1486 = vmatpush1.msra.mxu0 0.0
  %1487 = vmatprep.subr.mxu0 0.0
  %1488 = vmatpush1.msra.mxu0 0.0
  %1489 = vmatprep.subr.mxu0 0.0
  %1490 = vmatpush1.msra.mxu0 0.0
  %1491 = vmatprep.subr.mxu0 0.0
  %1492 = vmatpush1.msra.mxu0 0.0
  %1493 = vmatprep.subr.mxu0 0.0
  %1494 = vmatpush1.msra.mxu0 0.0
  %1495 = vmatprep.subr.mxu0 0.0
  %1496 = vmatpush1.msra.mxu0 0.0
  %1497 = vmatprep.subr.mxu0 0.0
  %1498 = vmatpush1.msra.mxu0 0.0
  %1499 = vmatprep.subr.mxu0 0.0
  %1500 = vmatpush1.msra.mxu0 0.0
  %1501 = vmatprep.subr.mxu0 0.0
  %1502 = vmatpush1.msra.mxu0 0.0
  %1503 = vmatprep.subr.mxu0 0.0
  %1504 = vmatpush1.msra.mxu0 0.0
  %1505 = vmatprep.subr.mxu0 0.0
  %1506 = vmatpush1.msra.mxu0 0.0
  %1507 = vmatprep.subr.mxu0 0.0
  %1508 = vmatpush1.msra.mxu0 0.0
  %1509 = vmatprep.mubr.f32.mxu0 0.0
  %1510 = vmatmul.mubr.f32.gmra.mrb[0].mxu0 %v752
  %v1511 = vpop.f32.mrb[0].mxu0
  %v1512 = vadd.f32 0.0, %v1511
  %v1513 = vpop.f32.mrb[0].mxu0
  %v1514 = vadd.f32 0.0, %v1513
  %1515 = vmatprep.mubr.f32.mxu0 0.0
  %1516 = vmatmul.mubr.f32.gmra.mrb[0].mxu0 %v753
  %v1517 = vpop.f32.mrb[0].mxu0
  %v1518 = vadd.f32 0.0, %v1517
  %v1519 = vpop.f32.mrb[0].mxu0
  %v1520 = vadd.f32 0.0, %v1519
  %1521 = vmatprep.mubr.f32.mxu0 0.0
  %1522 = vmatmul.mubr.f32.gmra.mrb[0].mxu0 %v754
  %v1523 = vpop.f32.mrb[0].mxu0
  %v1524 = vadd.f32 0.0, %v1523
  %v1525 = vpop.f32.mrb[0].mxu0
  %v1526 = vadd.f32 0.0, %v1525
  %1527 = vmatprep.mubr.f32.mxu0 0.0
  %1528 = vmatmul.mubr.f32.gmra.mrb[0].mxu0 %v755
  %v1529 = vpop.f32.mrb[0].mxu0
  %v1530 = vadd.f32 0.0, %v1529
  %v1531 = vpop.f32.mrb[0].mxu0
  %v1532 = vadd.f32 0.0, %v1531
  %1533 = vmatprep.mubr.f32.mxu0 0.0
  %1534 = vmatmul.mubr.f32.gmra.mrb[0].mxu0 %v756
  %v1535 = vpop.f32.mrb[0].mxu0
  %v1536 = vadd.f32 0.0, %v1535
  %v1537 = vpop.f32.mrb[0].mxu0
  %v1538 = vadd.f32 0.0, %v1537
  %1539 = vmatprep.mubr.f32.mxu0 0.0
  %1540 = vmatmul.mubr.f32.gmra.mrb[0].mxu0 %v757
  %v1541 = vpop.f32.mrb[0].mxu0
  %v1542 = vadd.f32 0.0, %v1541
  %v1543 = vpop.f32.mrb[0].mxu0
  %v1544 = vadd.f32 0.0, %v1543
  %1545 = vmatprep.mubr.f32.mxu0 0.0
  %1546 = vmatmul.mubr.f32.gmra.mrb[0].mxu0 %v758
  %v1547 = vpop.f32.mrb[0].mxu0
  %v1548 = vadd.f32 0.0, %v1547
  %v1549 = vpop.f32.mrb[0].mxu0
  %v1550 = vadd.f32 0.0, %v1549
  %1551 = vmatprep.mubr.f32.mxu0 0.0
  %1552 = vmatmul.mubr.f32.gmra.mrb[0].mxu0 %v759
  %v1553 = vpop.f32.mrb[0].mxu0
  %v1554 = vadd.f32 0.0, %v1553
  %v1555 = vpop.f32.mrb[0].mxu0
  %v1556 = vadd.f32 0.0, %v1555
  %1557 = vdwg.mxu0
  %v1558 = vadd.f32 %v1396, %v1512
  %v1559 = vadd.f32 %v1397, %v1514
  %v1560 = vadd.f32 %v1398, %v1518
  %v1561 = vadd.f32 %v1399, %v1520
  %v1562 = vadd.f32 %v1400, %v1524
  %v1563 = vadd.f32 %v1401, %v1526
  %v1564 = vadd.f32 %v1402, %v1530
  %v1565 = vadd.f32 %v1403, %v1532
  %v1566 = vadd.f32 %v1404, %v1536
  %v1567 = vadd.f32 %v1405, %v1538
  %v1568 = vadd.f32 %v1406, %v1542
  %v1569 = vadd.f32 %v1407, %v1544
  %v1570 = vadd.f32 %v1408, %v1548
  %v1571 = vadd.f32 %v1409, %v1550
  %v1572 = vadd.f32 %v1410, %v1554
  %v1573 = vadd.f32 %v1411, %v1556
  %v1574 = vmax.f32 %v1558, %v1559
  %v1575 = vmax.f32 %v1560, %v1561
  %v1576 = vmax.f32 %v1562, %v1563
  %v1577 = vmax.f32 %v1564, %v1565
  %v1578 = vmax.f32 %v1566, %v1567
  %v1579 = vmax.f32 %v1568, %v1569
  %v1580 = vmax.f32 %v1570, %v1571
  %v1581 = vmax.f32 %v1572, %v1573
  %1582 = vmatprep.subr.mxu0 %v831
  %1583 = vmatpush1.msra.mxu0 %v830
  %1584 = vmatprep.subr.mxu0 %v833
  %1585 = vmatpush1.msra.mxu0 %v832
  %1586 = vmatprep.subr.mxu0 %v835
  %1587 = vmatpush1.msra.mxu0 %v834
  %1588 = vmatprep.subr.mxu0 %v837
  %1589 = vmatpush1.msra.mxu0 %v836
  %1590 = vmatprep.subr.mxu0 %v839
  %1591 = vmatpush1.msra.mxu0 %v838
  %1592 = vmatprep.subr.mxu0 %v841
  %1593 = vmatpush1.msra.mxu0 %v840
  %1594 = vmatprep.subr.mxu0 %v843
  %1595 = vmatpush1.msra.mxu0 %v842
  %1596 = vmatprep.subr.mxu0 %v845
  %1597 = vmatpush1.msra.mxu0 %v844
  %1598 = vmatprep.subr.mxu0 %v847
  %1599 = vmatpush1.msra.mxu0 %v846
  %1600 = vmatprep.subr.mxu0 %v849
  %1601 = vmatpush1.msra.mxu0 %v848
  %1602 = vmatprep.subr.mxu0 %v851
  %1603 = vmatpush1.msra.mxu0 %v850
  %1604 = vmatprep.subr.mxu0 %v853
  %1605 = vmatpush1.msra.mxu0 %v852
  %1606 = vmatprep.subr.mxu0 %v855
  %1607 = vmatpush1.msra.mxu0 %v854
  %1608 = vmatprep.subr.mxu0 %v857
  %1609 = vmatpush1.msra.mxu0 %v856
  %1610 = vmatprep.subr.mxu0 %v859
  %1611 = vmatpush1.msra.mxu0 %v858
  %1612 = vmatprep.subr.mxu0 %v861
  %1613 = vmatpush1.msra.mxu0 %v860
  %1614 = vmatprep.subr.mxu0 0.0
  %1615 = vmatpush1.msra.mxu0 0.0
  %1616 = vmatprep.subr.mxu0 0.0
  %1617 = vmatpush1.msra.mxu0 0.0
  %1618 = vmatprep.subr.mxu0 0.0
  %1619 = vmatpush1.msra.mxu0 0.0
  %1620 = vmatprep.subr.mxu0 0.0
  %1621 = vmatpush1.msra.mxu0 0.0
  %1622 = vmatprep.subr.mxu0 0.0
  %1623 = vmatpush1.msra.mxu0 0.0
  %1624 = vmatprep.subr.mxu0 0.0
  %1625 = vmatpush1.msra.mxu0 0.0
  %1626 = vmatprep.subr.mxu0 0.0
  %1627 = vmatpush1.msra.mxu0 0.0
  %1628 = vmatprep.subr.mxu0 0.0
  %1629 = vmatpush1.msra.mxu0 0.0
  %1630 = vmatprep.subr.mxu0 0.0
  %1631 = vmatpush1.msra.mxu0 0.0
  %1632 = vmatprep.subr.mxu0 0.0
  %1633 = vmatpush1.msra.mxu0 0.0
  %1634 = vmatprep.subr.mxu0 0.0
  %1635 = vmatpush1.msra.mxu0 0.0
  %1636 = vmatprep.subr.mxu0 0.0
  %1637 = vmatpush1.msra.mxu0 0.0
  %1638 = vmatprep.subr.mxu0 0.0
  %1639 = vmatpush1.msra.mxu0 0.0
  %1640 = vmatprep.subr.mxu0 0.0
  %1641 = vmatpush1.msra.mxu0 0.0
  %1642 = vmatprep.subr.mxu0 0.0
  %1643 = vmatpush1.msra.mxu0 0.0
  %1644 = vmatprep.subr.mxu0 0.0
  %1645 = vmatpush1.msra.mxu0 0.0
  %1646 = vmatprep.mubr.f32.mxu0 0.0
  %1647 = vmatmul.mubr.f32.gmra.mrb[0].mxu0 %v750
  %v1648 = vpop.f32.mrb[0].mxu0
  %v1649 = vadd.f32 0.0, %v1648
  %v1650 = vpop.f32.mrb[0].mxu0
  %v1651 = vadd.f32 0.0, %v1650
  %1652 = vmatprep.mubr.f32.mxu0 0.0
  %1653 = vmatmul.mubr.f32.gmra.mrb[0].mxu0 %v751
  %v1654 = vpop.f32.mrb[0].mxu0
  %v1655 = vadd.f32 0.0, %v1654
  %v1656 = vpop.f32.mrb[0].mxu0
  %v1657 = vadd.f32 0.0, %v1656
  %1658 = vmatprep.mubr.f32.mxu0 0.0
  %1659 = vmatmul.mubr.f32.gmra.mrb[0].mxu0 %v752
  %v1660 = vpop.f32.mrb[0].mxu0
  %v1661 = vadd.f32 0.0, %v1660
  %v1662 = vpop.f32.mrb[0].mxu0
  %v1663 = vadd.f32 0.0, %v1662
  %1664 = vmatprep.mubr.f32.mxu0 0.0
  %1665 = vmatmul.mubr.f32.gmra.mrb[0].mxu0 %v753
  %v1666 = vpop.f32.mrb[0].mxu0
  %v1667 = vadd.f32 0.0, %v1666
  %v1668 = vpop.f32.mrb[0].mxu0
  %v1669 = vadd.f32 0.0, %v1668
  %1670 = vmatprep.mubr.f32.mxu0 0.0
  %1671 = vmatmul.mubr.f32.gmra.mrb[0].mxu0 %v754
  %v1672 = vpop.f32.mrb[0].mxu0
  %v1673 = vadd.f32 0.0, %v1672
  %v1674 = vpop.f32.mrb[0].mxu0
  %v1675 = vadd.f32 0.0, %v1674
  %1676 = vmatprep.mubr.f32.mxu0 0.0
  %1677 = vmatmul.mubr.f32.gmra.mrb[0].mxu0 %v755
  %v1678 = vpop.f32.mrb[0].mxu0
  %v1679 = vadd.f32 0.0, %v1678
  %v1680 = vpop.f32.mrb[0].mxu0
  %v1681 = vadd.f32 0.0, %v1680
  %1682 = vmatprep.mubr.f32.mxu0 0.0
  %1683 = vmatmul.mubr.f32.gmra.mrb[0].mxu0 %v756
  %v1684 = vpop.f32.mrb[0].mxu0
  %v1685 = vadd.f32 0.0, %v1684
  %v1686 = vpop.f32.mrb[0].mxu0
  %v1687 = vadd.f32 0.0, %v1686
  %1688 = vmatprep.mubr.f32.mxu0 0.0
  %1689 = vmatmul.mubr.f32.gmra.mrb[0].mxu0 %v757
  %v1690 = vpop.f32.mrb[0].mxu0
  %v1691 = vadd.f32 0.0, %v1690
  %v1692 = vpop.f32.mrb[0].mxu0
  %v1693 = vadd.f32 0.0, %v1692
  %1694 = vdwg.mxu0
  %1695 = vmatprep.subr.mxu0 %v798
  %1696 = vmatpush1.msra.mxu0 %v797
  %1697 = vmatprep.subr.mxu0 %v800
  %1698 = vmatpush1.msra.mxu0 %v799
  %1699 = vmatprep.subr.mxu0 %v802
  %1700 = vmatpush1.msra.mxu0 %v801
  %1701 = vmatprep.subr.mxu0 %v804
  %1702 = vmatpush1.msra.mxu0 %v803
  %1703 = vmatprep.subr.mxu0 %v806
  %1704 = vmatpush1.msra.mxu0 %v805
  %1705 = vmatprep.subr.mxu0 %v808
  %1706 = vmatpush1.msra.mxu0 %v807
  %1707 = vmatprep.subr.mxu0 %v810
  %1708 = vmatpush1.msra.mxu0 %v809
  %1709 = vmatprep.subr.mxu0 %v812
  %1710 = vmatpush1.msra.mxu0 %v811
  %1711 = vmatprep.subr.mxu0 %v814
  %1712 = vmatpush1.msra.mxu0 %v813
  %1713 = vmatprep.subr.mxu0 %v816
  %1714 = vmatpush1.msra.mxu0 %v815
  %1715 = vmatprep.subr.mxu0 %v818
  %1716 = vmatpush1.msra.mxu0 %v817
  %1717 = vmatprep.subr.mxu0 %v820
  %1718 = vmatpush1.msra.mxu0 %v819
  %1719 = vmatprep.subr.mxu0 %v822
  %1720 = vmatpush1.msra.mxu0 %v821
  %1721 = vmatprep.subr.mxu0 %v824
  %1722 = vmatpush1.msra.mxu0 %v823
  %1723 = vmatprep.subr.mxu0 %v826
  %1724 = vmatpush1.msra.mxu0 %v825
  %1725 = vmatprep.subr.mxu0 %v828
  %1726 = vmatpush1.msra.mxu0 %v827
  %1727 = vmatprep.subr.mxu0 0.0
  %1728 = vmatpush1.msra.mxu0 0.0
  %1729 = vmatprep.subr.mxu0 0.0
  %1730 = vmatpush1.msra.mxu0 0.0
  %1731 = vmatprep.subr.mxu0 0.0
  %1732 = vmatpush1.msra.mxu0 0.0
  %1733 = vmatprep.subr.mxu0 0.0
  %1734 = vmatpush1.msra.mxu0 0.0
  %1735 = vmatprep.subr.mxu0 0.0
  %1736 = vmatpush1.msra.mxu0 0.0
  %1737 = vmatprep.subr.mxu0 0.0
  %1738 = vmatpush1.msra.mxu0 0.0
  %1739 = vmatprep.subr.mxu0 0.0
  %1740 = vmatpush1.msra.mxu0 0.0
  %1741 = vmatprep.subr.mxu0 0.0
  %1742 = vmatpush1.msra.mxu0 0.0
  %1743 = vmatprep.subr.mxu0 0.0
  %1744 = vmatpush1.msra.mxu0 0.0
  %1745 = vmatprep.subr.mxu0 0.0
  %1746 = vmatpush1.msra.mxu0 0.0
  %1747 = vmatprep.subr.mxu0 0.0
  %1748 = vmatpush1.msra.mxu0 0.0
  %1749 = vmatprep.subr.mxu0 0.0
  %1750 = vmatpush1.msra.mxu0 0.0
  %1751 = vmatprep.subr.mxu0 0.0
  %1752 = vmatpush1.msra.mxu0 0.0
  %1753 = vmatprep.subr.mxu0 0.0
  %1754 = vmatpush1.msra.mxu0 0.0
  %1755 = vmatprep.subr.mxu0 0.0
  %1756 = vmatpush1.msra.mxu0 0.0
  %1757 = vmatprep.subr.mxu0 0.0
  %1758 = vmatpush1.msra.mxu0 0.0
  %1759 = vmatprep.mubr.f32.mxu0 0.0
  %1760 = vmatmul.mubr.f32.gmra.mrb[0].mxu0 %v784
  %v1761 = vpop.f32.mrb[0].mxu0
  %v1762 = vadd.f32 %v1649, %v1761
  %v1763 = vpop.f32.mrb[0].mxu0
  %v1764 = vadd.f32 %v1651, %v1763
  %1765 = vmatprep.mubr.f32.mxu0 0.0
  %1766 = vmatmul.mubr.f32.gmra.mrb[0].mxu0 %v785
  %v1767 = vpop.f32.mrb[0].mxu0
  %v1768 = vadd.f32 %v1655, %v1767
  %v1769 = vpop.f32.mrb[0].mxu0
  %v1770 = vadd.f32 %v1657, %v1769
  %1771 = vmatprep.mubr.f32.mxu0 0.0
  %1772 = vmatmul.mubr.f32.gmra.mrb[0].mxu0 %v786
  %v1773 = vpop.f32.mrb[0].mxu0
  %v1774 = vadd.f32 %v1661, %v1773
  %v1775 = vpop.f32.mrb[0].mxu0
  %v1776 = vadd.f32 %v1663, %v1775
  %1777 = vmatprep.mubr.f32.mxu0 0.0
  %1778 = vmatmul.mubr.f32.gmra.mrb[0].mxu0 %v787
  %v1779 = vpop.f32.mrb[0].mxu0
  %v1780 = vadd.f32 %v1667, %v1779
  %v1781 = vpop.f32.mrb[0].mxu0
  %v1782 = vadd.f32 %v1669, %v1781
  %1783 = vmatprep.mubr.f32.mxu0 0.0
  %1784 = vmatmul.mubr.f32.gmra.mrb[0].mxu0 %v788
  %v1785 = vpop.f32.mrb[0].mxu0
  %v1786 = vadd.f32 %v1673, %v1785
  %v1787 = vpop.f32.mrb[0].mxu0
  %v1788 = vadd.f32 %v1675, %v1787
  %1789 = vmatprep.mubr.f32.mxu0 0.0
  %1790 = vmatmul.mubr.f32.gmra.mrb[0].mxu0 %v789
  %v1791 = vpop.f32.mrb[0].mxu0
  %v1792 = vadd.f32 %v1679, %v1791
  %v1793 = vpop.f32.mrb[0].mxu0
  %v1794 = vadd.f32 %v1681, %v1793
  %1795 = vmatprep.mubr.f32.mxu0 0.0
  %1796 = vmatmul.mubr.f32.gmra.mrb[0].mxu0 %v790
  %v1797 = vpop.f32.mrb[0].mxu0
  %v1798 = vadd.f32 %v1685, %v1797
  %v1799 = vpop.f32.mrb[0].mxu0
  %v1800 = vadd.f32 %v1687, %v1799
  %1801 = vmatprep.mubr.f32.mxu0 0.0
  %1802 = vmatmul.mubr.f32.gmra.mrb[0].mxu0 %v791
  %v1803 = vpop.f32.mrb[0].mxu0
  %v1804 = vadd.f32 %v1691, %v1803
  %v1805 = vpop.f32.mrb[0].mxu0
  %v1806 = vadd.f32 %v1693, %v1805
  %1807 = vdwg.mxu0
  %1808 = vmatprep.subr.mxu0 %v1090
  %1809 = vmatpush1.msra.mxu0 %v1089
  %1810 = vmatprep.subr.mxu0 %v1092
  %1811 = vmatpush1.msra.mxu0 %v1091
  %1812 = vmatprep.subr.mxu0 %v1094
  %1813 = vmatpush1.msra.mxu0 %v1093
  %1814 = vmatprep.subr.mxu0 %v1096
  %1815 = vmatpush1.msra.mxu0 %v1095
  %1816 = vmatprep.subr.mxu0 %v1098
  %1817 = vmatpush1.msra.mxu0 %v1097
  %1818 = vmatprep.subr.mxu0 %v1100
  %1819 = vmatpush1.msra.mxu0 %v1099
  %1820 = vmatprep.subr.mxu0 %v1102
  %1821 = vmatpush1.msra.mxu0 %v1101
  %1822 = vmatprep.subr.mxu0 %v1104
  %1823 = vmatpush1.msra.mxu0 %v1103
  %1824 = vmatprep.subr.mxu0 %v1106
  %1825 = vmatpush1.msra.mxu0 %v1105
  %1826 = vmatprep.subr.mxu0 %v1108
  %1827 = vmatpush1.msra.mxu0 %v1107
  %1828 = vmatprep.subr.mxu0 %v1110
  %1829 = vmatpush1.msra.mxu0 %v1109
  %1830 = vmatprep.subr.mxu0 %v1112
  %1831 = vmatpush1.msra.mxu0 %v1111
  %1832 = vmatprep.subr.mxu0 %v1114
  %1833 = vmatpush1.msra.mxu0 %v1113
  %1834 = vmatprep.subr.mxu0 %v1116
  %1835 = vmatpush1.msra.mxu0 %v1115
  %1836 = vmatprep.subr.mxu0 %v1118
  %1837 = vmatpush1.msra.mxu0 %v1117
  %1838 = vmatprep.subr.mxu0 %v1120
  %1839 = vmatpush1.msra.mxu0 %v1119
  %1840 = vmatprep.subr.mxu0 0.0
  %1841 = vmatpush1.msra.mxu0 0.0
  %1842 = vmatprep.subr.mxu0 0.0
  %1843 = vmatpush1.msra.mxu0 0.0
  %1844 = vmatprep.subr.mxu0 0.0
  %1845 = vmatpush1.msra.mxu0 0.0
  %1846 = vmatprep.subr.mxu0 0.0
  %1847 = vmatpush1.msra.mxu0 0.0
  %1848 = vmatprep.subr.mxu0 0.0
  %1849 = vmatpush1.msra.mxu0 0.0
  %1850 = vmatprep.subr.mxu0 0.0
  %1851 = vmatpush1.msra.mxu0 0.0
  %1852 = vmatprep.subr.mxu0 0.0
  %1853 = vmatpush1.msra.mxu0 0.0
  %1854 = vmatprep.subr.mxu0 0.0
  %1855 = vmatpush1.msra.mxu0 0.0
  %1856 = vmatprep.subr.mxu0 0.0
  %1857 = vmatpush1.msra.mxu0 0.0
  %1858 = vmatprep.subr.mxu0 0.0
  %1859 = vmatpush1.msra.mxu0 0.0
  %1860 = vmatprep.subr.mxu0 0.0
  %1861 = vmatpush1.msra.mxu0 0.0
  %1862 = vmatprep.subr.mxu0 0.0
  %1863 = vmatpush1.msra.mxu0 0.0
  %1864 = vmatprep.subr.mxu0 0.0
  %1865 = vmatpush1.msra.mxu0 0.0
  %1866 = vmatprep.subr.mxu0 0.0
  %1867 = vmatpush1.msra.mxu0 0.0
  %1868 = vmatprep.subr.mxu0 0.0
  %1869 = vmatpush1.msra.mxu0 0.0
  %1870 = vmatprep.subr.mxu0 0.0
  %1871 = vmatpush1.msra.mxu0 0.0
  %1872 = vmatprep.mubr.f32.mxu0 0.0
  %1873 = vmatmul.mubr.f32.gmra.mrb[0].mxu0 %v786
  %v1874 = vpop.f32.mrb[0].mxu0
  %v1875 = vadd.f32 0.0, %v1874
  %v1876 = vpop.f32.mrb[0].mxu0
  %v1877 = vadd.f32 0.0, %v1876
  %1878 = vmatprep.mubr.f32.mxu0 0.0
  %1879 = vmatmul.mubr.f32.gmra.mrb[0].mxu0 %v787
  %v1880 = vpop.f32.mrb[0].mxu0
  %v1881 = vadd.f32 0.0, %v1880
  %v1882 = vpop.f32.mrb[0].mxu0
  %v1883 = vadd.f32 0.0, %v1882
  %1884 = vmatprep.mubr.f32.mxu0 0.0
  %1885 = vmatmul.mubr.f32.gmra.mrb[0].mxu0 %v788
  %v1886 = vpop.f32.mrb[0].mxu0
  %v1887 = vadd.f32 0.0, %v1886
  %v1888 = vpop.f32.mrb[0].mxu0
  %v1889 = vadd.f32 0.0, %v1888
  %1890 = vmatprep.mubr.f32.mxu0 0.0
  %1891 = vmatmul.mubr.f32.gmra.mrb[0].mxu0 %v789
  %v1892 = vpop.f32.mrb[0].mxu0
  %v1893 = vadd.f32 0.0, %v1892
  %v1894 = vpop.f32.mrb[0].mxu0
  %v1895 = vadd.f32 0.0, %v1894
  %1896 = vmatprep.mubr.f32.mxu0 0.0
  %1897 = vmatmul.mubr.f32.gmra.mrb[0].mxu0 %v790
  %v1898 = vpop.f32.mrb[0].mxu0
  %v1899 = vadd.f32 0.0, %v1898
  %v1900 = vpop.f32.mrb[0].mxu0
  %v1901 = vadd.f32 0.0, %v1900
  %1902 = vmatprep.mubr.f32.mxu0 0.0
  %1903 = vmatmul.mubr.f32.gmra.mrb[0].mxu0 %v791
  %v1904 = vpop.f32.mrb[0].mxu0
  %v1905 = vadd.f32 0.0, %v1904
  %v1906 = vpop.f32.mrb[0].mxu0
  %v1907 = vadd.f32 0.0, %v1906
  %1908 = vmatprep.mubr.f32.mxu0 0.0
  %1909 = vmatmul.mubr.f32.gmra.mrb[0].mxu0 %v792
  %v1910 = vpop.f32.mrb[0].mxu0
  %v1911 = vadd.f32 0.0, %v1910
  %v1912 = vpop.f32.mrb[0].mxu0
  %v1913 = vadd.f32 0.0, %v1912
  %1914 = vmatprep.mubr.f32.mxu0 0.0
  %1915 = vmatmul.mubr.f32.gmra.mrb[0].mxu0 %v793
  %v1916 = vpop.f32.mrb[0].mxu0
  %v1917 = vadd.f32 0.0, %v1916
  %v1918 = vpop.f32.mrb[0].mxu0
  %v1919 = vadd.f32 0.0, %v1918
  %1920 = vdwg.mxu0
  %v1921 = vadd.f32 %v1762, %v1875
  %v1922 = vadd.f32 %v1764, %v1877
  %v1923 = vadd.f32 %v1768, %v1881
  %v1924 = vadd.f32 %v1770, %v1883
  %v1925 = vadd.f32 %v1774, %v1887
  %v1926 = vadd.f32 %v1776, %v1889
  %v1927 = vadd.f32 %v1780, %v1893
  %v1928 = vadd.f32 %v1782, %v1895
  %v1929 = vadd.f32 %v1786, %v1899
  %v1930 = vadd.f32 %v1788, %v1901
  %v1931 = vadd.f32 %v1792, %v1905
  %v1932 = vadd.f32 %v1794, %v1907
  %v1933 = vadd.f32 %v1798, %v1911
  %v1934 = vadd.f32 %v1800, %v1913
  %v1935 = vadd.f32 %v1804, %v1917
  %v1936 = vadd.f32 %v1806, %v1919
  %1937 = vmatprep.subr.mxu0 %v1252
  %1938 = vmatpush1.msra.mxu0 %v1251
  %1939 = vmatprep.subr.mxu0 %v1254
  %1940 = vmatpush1.msra.mxu0 %v1253
  %1941 = vmatprep.subr.mxu0 %v1256
  %1942 = vmatpush1.msra.mxu0 %v1255
  %1943 = vmatprep.subr.mxu0 %v1258
  %1944 = vmatpush1.msra.mxu0 %v1257
  %1945 = vmatprep.subr.mxu0 %v1260
  %1946 = vmatpush1.msra.mxu0 %v1259
  %1947 = vmatprep.subr.mxu0 %v1262
  %1948 = vmatpush1.msra.mxu0 %v1261
  %1949 = vmatprep.subr.mxu0 %v1264
  %1950 = vmatpush1.msra.mxu0 %v1263
  %1951 = vmatprep.subr.mxu0 %v1266
  %1952 = vmatpush1.msra.mxu0 %v1265
  %1953 = vmatprep.subr.mxu0 %v1268
  %1954 = vmatpush1.msra.mxu0 %v1267
  %1955 = vmatprep.subr.mxu0 %v1270
  %1956 = vmatpush1.msra.mxu0 %v1269
  %1957 = vmatprep.subr.mxu0 %v1272
  %1958 = vmatpush1.msra.mxu0 %v1271
  %1959 = vmatprep.subr.mxu0 %v1274
  %1960 = vmatpush1.msra.mxu0 %v1273
  %1961 = vmatprep.subr.mxu0 %v1276
  %1962 = vmatpush1.msra.mxu0 %v1275
  %1963 = vmatprep.subr.mxu0 %v1278
  %1964 = vmatpush1.msra.mxu0 %v1277
  %1965 = vmatprep.subr.mxu0 %v1280
  %1966 = vmatpush1.msra.mxu0 %v1279
  %1967 = vmatprep.subr.mxu0 %v1282
  %1968 = vmatpush1.msra.mxu0 %v1281
  %1969 = vmatprep.subr.mxu0 0.0
  %1970 = vmatpush1.msra.mxu0 0.0
  %1971 = vmatprep.subr.mxu0 0.0
  %1972 = vmatpush1.msra.mxu0 0.0
  %1973 = vmatprep.subr.mxu0 0.0
  %1974 = vmatpush1.msra.mxu0 0.0
  %1975 = vmatprep.subr.mxu0 0.0
  %1976 = vmatpush1.msra.mxu0 0.0
  %1977 = vmatprep.subr.mxu0 0.0
  %1978 = vmatpush1.msra.mxu0 0.0
  %1979 = vmatprep.subr.mxu0 0.0
  %1980 = vmatpush1.msra.mxu0 0.0
  %1981 = vmatprep.subr.mxu0 0.0
  %1982 = vmatpush1.msra.mxu0 0.0
  %1983 = vmatprep.subr.mxu0 0.0
  %1984 = vmatpush1.msra.mxu0 0.0
  %1985 = vmatprep.subr.mxu0 0.0
  %1986 = vmatpush1.msra.mxu0 0.0
  %1987 = vmatprep.subr.mxu0 0.0
  %1988 = vmatpush1.msra.mxu0 0.0
  %1989 = vmatprep.subr.mxu0 0.0
  %1990 = vmatpush1.msra.mxu0 0.0
  %1991 = vmatprep.subr.mxu0 0.0
  %1992 = vmatpush1.msra.mxu0 0.0
  %1993 = vmatprep.subr.mxu0 0.0
  %1994 = vmatpush1.msra.mxu0 0.0
  %1995 = vmatprep.subr.mxu0 0.0
  %1996 = vmatpush1.msra.mxu0 0.0
  %1997 = vmatprep.subr.mxu0 0.0
  %1998 = vmatpush1.msra.mxu0 0.0
  %1999 = vmatprep.subr.mxu0 0.0
  %2000 = vmatpush1.msra.mxu0 0.0
  %2001 = vmatprep.mubr.f32.mxu0 0.0
  %2002 = vmatmul.mubr.f32.gmra.mrb[0].mxu0 %v752
  %v2003 = vpop.f32.mrb[0].mxu0
  %v2004 = vadd.f32 0.0, %v2003
  %v2005 = vpop.f32.mrb[0].mxu0
  %v2006 = vadd.f32 0.0, %v2005
  %2007 = vmatprep.mubr.f32.mxu0 0.0
  %2008 = vmatmul.mubr.f32.gmra.mrb[0].mxu0 %v753
  %v2009 = vpop.f32.mrb[0].mxu0
  %v2010 = vadd.f32 0.0, %v2009
  %v2011 = vpop.f32.mrb[0].mxu0
  %v2012 = vadd.f32 0.0, %v2011
  %2013 = vmatprep.mubr.f32.mxu0 0.0
  %2014 = vmatmul.mubr.f32.gmra.mrb[0].mxu0 %v754
  %v2015 = vpop.f32.mrb[0].mxu0
  %v2016 = vadd.f32 0.0, %v2015
  %v2017 = vpop.f32.mrb[0].mxu0
  %v2018 = vadd.f32 0.0, %v2017
  %2019 = vmatprep.mubr.f32.mxu0 0.0
  %2020 = vmatmul.mubr.f32.gmra.mrb[0].mxu0 %v755
  %v2021 = vpop.f32.mrb[0].mxu0
  %v2022 = vadd.f32 0.0, %v2021
  %v2023 = vpop.f32.mrb[0].mxu0
  %v2024 = vadd.f32 0.0, %v2023
  %2025 = vmatprep.mubr.f32.mxu0 0.0
  %2026 = vmatmul.mubr.f32.gmra.mrb[0].mxu0 %v756
  %v2027 = vpop.f32.mrb[0].mxu0
  %v2028 = vadd.f32 0.0, %v2027
  %v2029 = vpop.f32.mrb[0].mxu0
  %v2030 = vadd.f32 0.0, %v2029
  %2031 = vmatprep.mubr.f32.mxu0 0.0
  %2032 = vmatmul.mubr.f32.gmra.mrb[0].mxu0 %v757
  %v2033 = vpop.f32.mrb[0].mxu0
  %v2034 = vadd.f32 0.0, %v2033
  %v2035 = vpop.f32.mrb[0].mxu0
  %v2036 = vadd.f32 0.0, %v2035
  %2037 = vmatprep.mubr.f32.mxu0 0.0
  %2038 = vmatmul.mubr.f32.gmra.mrb[0].mxu0 %v758
  %v2039 = vpop.f32.mrb[0].mxu0
  %v2040 = vadd.f32 0.0, %v2039
  %v2041 = vpop.f32.mrb[0].mxu0
  %v2042 = vadd.f32 0.0, %v2041
  %2043 = vmatprep.mubr.f32.mxu0 0.0
  %2044 = vmatmul.mubr.f32.gmra.mrb[0].mxu0 %v759
  %v2045 = vpop.f32.mrb[0].mxu0
  %v2046 = vadd.f32 0.0, %v2045
  %v2047 = vpop.f32.mrb[0].mxu0
  %v2048 = vadd.f32 0.0, %v2047
  %2049 = vdwg.mxu0
  %v2050 = vadd.f32 %v1921, %v2004
  %v2051 = vadd.f32 %v1922, %v2006
  %v2052 = vadd.f32 %v1923, %v2010
  %v2053 = vadd.f32 %v1924, %v2012
  %v2054 = vadd.f32 %v1925, %v2016
  %v2055 = vadd.f32 %v1926, %v2018
  %v2056 = vadd.f32 %v1927, %v2022
  %v2057 = vadd.f32 %v1928, %v2024
  %v2058 = vadd.f32 %v1929, %v2028
  %v2059 = vadd.f32 %v1930, %v2030
  %v2060 = vadd.f32 %v1931, %v2034
  %v2061 = vadd.f32 %v1932, %v2036
  %v2062 = vadd.f32 %v1933, %v2040
  %v2063 = vadd.f32 %v1934, %v2042
  %v2064 = vadd.f32 %v1935, %v2046
  %v2065 = vadd.f32 %v1936, %v2048
  %2066 = vmatprep.subr.mxu0 %v1414
  %2067 = vmatpush1.msra.mxu0 %v1413
  %2068 = vmatprep.subr.mxu0 %v1416
  %2069 = vmatpush1.msra.mxu0 %v1415
  %2070 = vmatprep.subr.mxu0 %v1418
  %2071 = vmatpush1.msra.mxu0 %v1417
  %2072 = vmatprep.subr.mxu0 %v1420
  %2073 = vmatpush1.msra.mxu0 %v1419
  %2074 = vmatprep.subr.mxu0 %v1422
  %2075 = vmatpush1.msra.mxu0 %v1421
  %2076 = vmatprep.subr.mxu0 %v1424
  %2077 = vmatpush1.msra.mxu0 %v1423
  %2078 = vmatprep.subr.mxu0 %v1426
  %2079 = vmatpush1.msra.mxu0 %v1425
  %2080 = vmatprep.subr.mxu0 %v1428
  %2081 = vmatpush1.msra.mxu0 %v1427
  %2082 = vmatprep.subr.mxu0 %v1430
  %2083 = vmatpush1.msra.mxu0 %v1429
  %2084 = vmatprep.subr.mxu0 %v1432
  %2085 = vmatpush1.msra.mxu0 %v1431
  %2086 = vmatprep.subr.mxu0 %v1434
  %2087 = vmatpush1.msra.mxu0 %v1433
  %2088 = vmatprep.subr.mxu0 %v1436
  %2089 = vmatpush1.msra.mxu0 %v1435
  %2090 = vmatprep.subr.mxu0 %v1438
  %2091 = vmatpush1.msra.mxu0 %v1437
  %2092 = vmatprep.subr.mxu0 %v1440
  %2093 = vmatpush1.msra.mxu0 %v1439
  %2094 = vmatprep.subr.mxu0 %v1442
  %2095 = vmatpush1.msra.mxu0 %v1441
  %2096 = vmatprep.subr.mxu0 %v1444
  %2097 = vmatpush1.msra.mxu0 %v1443
  %2098 = vmatprep.subr.mxu0 0.0
  %2099 = vmatpush1.msra.mxu0 0.0
  %2100 = vmatprep.subr.mxu0 0.0
  %2101 = vmatpush1.msra.mxu0 0.0
  %2102 = vmatprep.subr.mxu0 0.0
  %2103 = vmatpush1.msra.mxu0 0.0
  %2104 = vmatprep.subr.mxu0 0.0
  %2105 = vmatpush1.msra.mxu0 0.0
  %2106 = vmatprep.subr.mxu0 0.0
  %2107 = vmatpush1.msra.mxu0 0.0
  %2108 = vmatprep.subr.mxu0 0.0
  %2109 = vmatpush1.msra.mxu0 0.0
  %2110 = vmatprep.subr.mxu0 0.0
  %2111 = vmatpush1.msra.mxu0 0.0
  %2112 = vmatprep.subr.mxu0 0.0
  %2113 = vmatpush1.msra.mxu0 0.0
  %2114 = vmatprep.subr.mxu0 0.0
  %2115 = vmatpush1.msra.mxu0 0.0
  %2116 = vmatprep.subr.mxu0 0.0
  %2117 = vmatpush1.msra.mxu0 0.0
  %2118 = vmatprep.subr.mxu0 0.0
  %2119 = vmatpush1.msra.mxu0 0.0
  %2120 = vmatprep.subr.mxu0 0.0
  %2121 = vmatpush1.msra.mxu0 0.0
  %2122 = vmatprep.subr.mxu0 0.0
  %2123 = vmatpush1.msra.mxu0 0.0
  %2124 = vmatprep.subr.mxu0 0.0
  %2125 = vmatpush1.msra.mxu0 0.0
  %2126 = vmatprep.subr.mxu0 0.0
  %2127 = vmatpush1.msra.mxu0 0.0
  %2128 = vmatprep.subr.mxu0 0.0
  %2129 = vmatpush1.msra.mxu0 0.0
  %2130 = vmatprep.mubr.f32.mxu0 0.0
  %2131 = vmatmul.mubr.f32.gmra.mrb[0].mxu0 %v788
  %v2132 = vpop.f32.mrb[0].mxu0
  %v2133 = vadd.f32 0.0, %v2132
  %v2134 = vpop.f32.mrb[0].mxu0
  %v2135 = vadd.f32 0.0, %v2134
  %2136 = vmatprep.mubr.f32.mxu0 0.0
  %2137 = vmatmul.mubr.f32.gmra.mrb[0].mxu0 %v789
  %v2138 = vpop.f32.mrb[0].mxu0
  %v2139 = vadd.f32 0.0, %v2138
  %v2140 = vpop.f32.mrb[0].mxu0
  %v2141 = vadd.f32 0.0, %v2140
  %2142 = vmatprep.mubr.f32.mxu0 0.0
  %2143 = vmatmul.mubr.f32.gmra.mrb[0].mxu0 %v790
  %v2144 = vpop.f32.mrb[0].mxu0
  %v2145 = vadd.f32 0.0, %v2144
  %v2146 = vpop.f32.mrb[0].mxu0
  %v2147 = vadd.f32 0.0, %v2146
  %2148 = vmatprep.mubr.f32.mxu0 0.0
  %2149 = vmatmul.mubr.f32.gmra.mrb[0].mxu0 %v791
  %v2150 = vpop.f32.mrb[0].mxu0
  %v2151 = vadd.f32 0.0, %v2150
  %v2152 = vpop.f32.mrb[0].mxu0
  %v2153 = vadd.f32 0.0, %v2152
  %2154 = vmatprep.mubr.f32.mxu0 0.0
  %2155 = vmatmul.mubr.f32.gmra.mrb[0].mxu0 %v792
  %v2156 = vpop.f32.mrb[0].mxu0
  %v2157 = vadd.f32 0.0, %v2156
  %v2158 = vpop.f32.mrb[0].mxu0
  %v2159 = vadd.f32 0.0, %v2158
  %2160 = vmatprep.mubr.f32.mxu0 0.0
  %2161 = vmatmul.mubr.f32.gmra.mrb[0].mxu0 %v793
  %v2162 = vpop.f32.mrb[0].mxu0
  %v2163 = vadd.f32 0.0, %v2162
  %v2164 = vpop.f32.mrb[0].mxu0
  %v2165 = vadd.f32 0.0, %v2164
  %2166 = vmatprep.mubr.f32.mxu0 0.0
  %2167 = vmatmul.mubr.f32.gmra.mrb[0].mxu0 %v794
  %v2168 = vpop.f32.mrb[0].mxu0
  %v2169 = vadd.f32 0.0, %v2168
  %v2170 = vpop.f32.mrb[0].mxu0
  %v2171 = vadd.f32 0.0, %v2170
  %2172 = vmatprep.mubr.f32.mxu0 0.0
  %2173 = vmatmul.mubr.f32.gmra.mrb[0].mxu0 %v795
  %v2174 = vpop.f32.mrb[0].mxu0
  %v2175 = vadd.f32 0.0, %v2174
  %v2176 = vpop.f32.mrb[0].mxu0
  %v2177 = vadd.f32 0.0, %v2176
  %2178 = vdwg.mxu0
  %v2179 = vadd.f32 %v2050, %v2133
  %v2180 = vadd.f32 %v2051, %v2135
  %v2181 = vadd.f32 %v2052, %v2139
  %v2182 = vadd.f32 %v2053, %v2141
  %v2183 = vadd.f32 %v2054, %v2145
  %v2184 = vadd.f32 %v2055, %v2147
  %v2185 = vadd.f32 %v2056, %v2151
  %v2186 = vadd.f32 %v2057, %v2153
  %v2187 = vadd.f32 %v2058, %v2157
  %v2188 = vadd.f32 %v2059, %v2159
  %v2189 = vadd.f32 %v2060, %v2163
  %v2190 = vadd.f32 %v2061, %v2165
  %v2191 = vadd.f32 %v2062, %v2169
  %v2192 = vadd.f32 %v2063, %v2171
  %v2193 = vadd.f32 %v2064, %v2175
  %v2194 = vadd.f32 %v2065, %v2177
  %v2195 = vmax.f32 %v2179, %v2180
  %v2196 = vmax.f32 %v2181, %v2182
  %v2197 = vmax.f32 %v2183, %v2184
  %v2198 = vmax.f32 %v2185, %v2186
  %v2199 = vmax.f32 %v2187, %v2188
  %v2200 = vmax.f32 %v2189, %v2190
  %v2201 = vmax.f32 %v2191, %v2192
  %v2202 = vmax.f32 %v2193, %v2194
  %v2203 = vmax.f32 %v1574, %v2195
  %v2204 = vmax.f32 %v1575, %v2196
  %v2205 = vmax.f32 %v1576, %v2197
  %v2206 = vmax.f32 %v1577, %v2198
  %v2207 = vmax.f32 %v1578, %v2199
  %v2208 = vmax.f32 %v1579, %v2200
  %v2209 = vmax.f32 %v1580, %v2201
  %v2210 = vmax.f32 %v1581, %v2202
  %v2212 = vlaneseq
  %v2213 = vshrl.u32 %v2212, 7
  %v2214 = vsub.s32 0, %v2213
  %v2215 = vrot.slane %v796, %v2214
  %v2217 = vadd.f32 %v2203, %v2215
  %v2218 = vadd.f32 %v2204, %v2215
  %v2219 = vadd.f32 %v2205, %v2215
  %v2220 = vadd.f32 %v2206, %v2215
  %v2221 = vadd.f32 %v2207, %v2215
  %v2222 = vadd.f32 %v2208, %v2215
  %v2223 = vadd.f32 %v2209, %v2215
  %v2224 = vadd.f32 %v2210, %v2215
  %v2225 = vmax.f32 %v2217, 0.0
  %v2226 = vmax.f32 %v2218, 0.0
  %v2227 = vmax.f32 %v2219, 0.0
  %v2228 = vmax.f32 %v2220, 0.0
  %v2229 = vmax.f32 %v2221, 0.0
  %v2230 = vmax.f32 %v2222, 0.0
  %v2231 = vmax.f32 %v2223, 0.0
  %v2232 = vmax.f32 %v2224, 0.0
  %v2233 = vld [vmem:[%s5] sm:$0xff]
  %v2234 = vld [vmem:[%s5 + $0x8] sm:$0xff]
  %v2235 = vld [vmem:[%s5 + $0x10] sm:$0xff]
  %v2236 = vld [vmem:[%s5 + $0x18] sm:$0xff]
  %v2237 = vld [vmem:[%s5 + $0x20] sm:$0xff]
  %v2238 = vld [vmem:[%s5 + $0x28] sm:$0xff]
  %v2239 = vld [vmem:[%s5 + $0x30] sm:$0xff]
  %v2240 = vld [vmem:[%s5 + $0x38] sm:$0xff]
  %v2241 = vld [vmem:[%s5 + $0x40] sm:$0xff]
  %v2242 = vld [vmem:[%s5 + $0x48] sm:$0xff]
  %v2243 = vld [vmem:[%s5 + $0x50] sm:$0xff]
  %v2244 = vld [vmem:[%s5 + $0x58] sm:$0xff]
  %v2245 = vld [vmem:[%s5 + $0x60] sm:$0xff]
  %v2246 = vld [vmem:[%s5 + $0x68] sm:$0xff]
  %v2247 = vld [vmem:[%s5 + $0x70] sm:$0xff]
  %v2248 = vld [vmem:[%s5 + $0x78] sm:$0xff]
  %s2249 = scalar_lea.vmem %s5, 128
  %v2250 = vld [vmem:[%s2249] sm:$0xff]
  %v2251 = vld [vmem:[%s2249 + $0x8] sm:$0xff]
  %v2252 = vld [vmem:[%s2249 + $0x10] sm:$0xff]
  %v2253 = vld [vmem:[%s2249 + $0x18] sm:$0xff]
  %v2254 = vld [vmem:[%s2249 + $0x20] sm:$0xff]
  %v2255 = vld [vmem:[%s2249 + $0x28] sm:$0xff]
  %v2256 = vld [vmem:[%s2249 + $0x30] sm:$0xff]
  %v2257 = vld [vmem:[%s2249 + $0x38] sm:$0xff]
  %v2258 = vld [vmem:[%s2249 + $0x40] sm:$0xff]
  %v2259 = vld [vmem:[%s2249 + $0x48] sm:$0xff]
  %v2260 = vld [vmem:[%s2249 + $0x50] sm:$0xff]
  %v2261 = vld [vmem:[%s2249 + $0x58] sm:$0xff]
  %v2262 = vld [vmem:[%s2249 + $0x60] sm:$0xff]
  %v2263 = vld [vmem:[%s2249 + $0x68] sm:$0xff]
  %v2264 = vld [vmem:[%s2249 + $0x70] sm:$0xff]
  %v2265 = vld [vmem:[%s2249 + $0x78] sm:$0xff]
  %2266 = vmatprep.subr.mxu0 0.0
  %2267 = vmatpush1.msra.mxu0 %v2250
  %2268 = vmatprep.subr.mxu0 0.0
  %2269 = vmatpush1.msra.mxu0 %v2251
  %2270 = vmatprep.subr.mxu0 0.0
  %2271 = vmatpush1.msra.mxu0 %v2252
  %2272 = vmatprep.subr.mxu0 0.0
  %2273 = vmatpush1.msra.mxu0 %v2253
  %2274 = vmatprep.subr.mxu0 0.0
  %2275 = vmatpush1.msra.mxu0 %v2254
  %2276 = vmatprep.subr.mxu0 0.0
  %2277 = vmatpush1.msra.mxu0 %v2255
  %2278 = vmatprep.subr.mxu0 0.0
  %2279 = vmatpush1.msra.mxu0 %v2256
  %2280 = vmatprep.subr.mxu0 0.0
  %2281 = vmatpush1.msra.mxu0 %v2257
  %2282 = vmatprep.subr.mxu0 0.0
  %2283 = vmatpush1.msra.mxu0 %v2258
  %2284 = vmatprep.subr.mxu0 0.0
  %2285 = vmatpush1.msra.mxu0 %v2259
  %2286 = vmatprep.subr.mxu0 0.0
  %2287 = vmatpush1.msra.mxu0 %v2260
  %2288 = vmatprep.subr.mxu0 0.0
  %2289 = vmatpush1.msra.mxu0 %v2261
  %2290 = vmatprep.subr.mxu0 0.0
  %2291 = vmatpush1.msra.mxu0 %v2262
  %2292 = vmatprep.subr.mxu0 0.0
  %2293 = vmatpush1.msra.mxu0 %v2263
  %2294 = vmatprep.subr.mxu0 0.0
  %2295 = vmatpush1.msra.mxu0 %v2264
  %2296 = vmatprep.subr.mxu0 0.0
  %2297 = vmatpush1.msra.mxu0 %v2265
  %2298 = vmatprep.subr.mxu0 0.0
  %2299 = vmatpush1.msra.mxu0 0.0
  %2300 = vmatprep.subr.mxu0 0.0
  %2301 = vmatpush1.msra.mxu0 0.0
  %2302 = vmatprep.subr.mxu0 0.0
  %2303 = vmatpush1.msra.mxu0 0.0
  %2304 = vmatprep.subr.mxu0 0.0
  %2305 = vmatpush1.msra.mxu0 0.0
  %2306 = vmatprep.subr.mxu0 0.0
  %2307 = vmatpush1.msra.mxu0 0.0
  %2308 = vmatprep.subr.mxu0 0.0
  %2309 = vmatpush1.msra.mxu0 0.0
  %2310 = vmatprep.subr.mxu0 0.0
  %2311 = vmatpush1.msra.mxu0 0.0
  %2312 = vmatprep.subr.mxu0 0.0
  %2313 = vmatpush1.msra.mxu0 0.0
  %2314 = vmatprep.subr.mxu0 0.0
  %2315 = vmatpush1.msra.mxu0 0.0
  %2316 = vmatprep.subr.mxu0 0.0
  %2317 = vmatpush1.msra.mxu0 0.0
  %2318 = vmatprep.subr.mxu0 0.0
  %2319 = vmatpush1.msra.mxu0 0.0
  %2320 = vmatprep.subr.mxu0 0.0
  %2321 = vmatpush1.msra.mxu0 0.0
  %2322 = vmatprep.subr.mxu0 0.0
  %2323 = vmatpush1.msra.mxu0 0.0
  %2324 = vmatprep.subr.mxu0 0.0
  %2325 = vmatpush1.msra.mxu0 0.0
  %2326 = vmatprep.subr.mxu0 0.0
  %2327 = vmatpush1.msra.mxu0 0.0
  %2328 = vmatprep.subr.mxu0 0.0
  %2329 = vmatpush1.msra.mxu0 0.0
  %2330 = vmatprep.mubr.f32.mxu0 0.0
  %2331 = vmatmul.mubr.f32.gmra.mrb[0].mxu0 %v2227
  %v2332 = vpop.f32.mrb[0].mxu0
  %v2333 = vadd.f32 0.0, %v2332
  %v2334 = vpop.f32.mrb[0].mxu0
  %2335 = vmatprep.mubr.f32.mxu0 0.0
  %2336 = vmatmul.mubr.f32.gmra.mrb[0].mxu0 %v2228
  %v2337 = vpop.f32.mrb[0].mxu0
  %v2338 = vadd.f32 0.0, %v2337
  %v2339 = vpop.f32.mrb[0].mxu0
  %2340 = vdwg.mxu0
  %2341 = vmatprep.subr.mxu0 0.0
  %2342 = vmatpush1.msra.mxu0 %v2233
  %2343 = vmatprep.subr.mxu0 0.0
  %2344 = vmatpush1.msra.mxu0 %v2234
  %2345 = vmatprep.subr.mxu0 0.0
  %2346 = vmatpush1.msra.mxu0 %v2235
  %2347 = vmatprep.subr.mxu0 0.0
  %2348 = vmatpush1.msra.mxu0 %v2236
  %2349 = vmatprep.subr.mxu0 0.0
  %2350 = vmatpush1.msra.mxu0 %v2237
  %2351 = vmatprep.subr.mxu0 0.0
  %2352 = vmatpush1.msra.mxu0 %v2238
  %2353 = vmatprep.subr.mxu0 0.0
  %2354 = vmatpush1.msra.mxu0 %v2239
  %2355 = vmatprep.subr.mxu0 0.0
  %2356 = vmatpush1.msra.mxu0 %v2240
  %2357 = vmatprep.subr.mxu0 0.0
  %2358 = vmatpush1.msra.mxu0 %v2241
  %2359 = vmatprep.subr.mxu0 0.0
  %2360 = vmatpush1.msra.mxu0 %v2242
  %2361 = vmatprep.subr.mxu0 0.0
  %2362 = vmatpush1.msra.mxu0 %v2243
  %2363 = vmatprep.subr.mxu0 0.0
  %2364 = vmatpush1.msra.mxu0 %v2244
  %2365 = vmatprep.subr.mxu0 0.0
  %2366 = vmatpush1.msra.mxu0 %v2245
  %2367 = vmatprep.subr.mxu0 0.0
  %2368 = vmatpush1.msra.mxu0 %v2246
  %2369 = vmatprep.subr.mxu0 0.0
  %2370 = vmatpush1.msra.mxu0 %v2247
  %2371 = vmatprep.subr.mxu0 0.0
  %2372 = vmatpush1.msra.mxu0 %v2248
  %2373 = vmatprep.subr.mxu0 0.0
  %2374 = vmatpush1.msra.mxu0 0.0
  %2375 = vmatprep.subr.mxu0 0.0
  %2376 = vmatpush1.msra.mxu0 0.0
  %2377 = vmatprep.subr.mxu0 0.0
  %2378 = vmatpush1.msra.mxu0 0.0
  %2379 = vmatprep.subr.mxu0 0.0
  %2380 = vmatpush1.msra.mxu0 0.0
  %2381 = vmatprep.subr.mxu0 0.0
  %2382 = vmatpush1.msra.mxu0 0.0
  %2383 = vmatprep.subr.mxu0 0.0
  %2384 = vmatpush1.msra.mxu0 0.0
  %2385 = vmatprep.subr.mxu0 0.0
  %2386 = vmatpush1.msra.mxu0 0.0
  %2387 = vmatprep.subr.mxu0 0.0
  %2388 = vmatpush1.msra.mxu0 0.0
  %2389 = vmatprep.subr.mxu0 0.0
  %2390 = vmatpush1.msra.mxu0 0.0
  %2391 = vmatprep.subr.mxu0 0.0
  %2392 = vmatpush1.msra.mxu0 0.0
  %2393 = vmatprep.subr.mxu0 0.0
  %2394 = vmatpush1.msra.mxu0 0.0
  %2395 = vmatprep.subr.mxu0 0.0
  %2396 = vmatpush1.msra.mxu0 0.0
  %2397 = vmatprep.subr.mxu0 0.0
  %2398 = vmatpush1.msra.mxu0 0.0
  %2399 = vmatprep.subr.mxu0 0.0
  %2400 = vmatpush1.msra.mxu0 0.0
  %2401 = vmatprep.subr.mxu0 0.0
  %2402 = vmatpush1.msra.mxu0 0.0
  %2403 = vmatprep.subr.mxu0 0.0
  %2404 = vmatpush1.msra.mxu0 0.0
  %2405 = vmatprep.mubr.f32.mxu0 0.0
  %2406 = vmatmul.mubr.f32.gmra.mrb[0].mxu0 %v2225
  %v2407 = vpop.f32.mrb[0].mxu0
  %v2408 = vadd.f32 %v2333, %v2407
  %v2409 = vpop.f32.mrb[0].mxu0
  %2410 = vmatprep.mubr.f32.mxu0 0.0
  %2411 = vmatmul.mubr.f32.gmra.mrb[0].mxu0 %v2226
  %v2412 = vpop.f32.mrb[0].mxu0
  %v2413 = vadd.f32 %v2338, %v2412
  %v2414 = vpop.f32.mrb[0].mxu0
  %2415 = vdwg.mxu0
  %s2416 = scalar_lea.vmem %s5, 256
  %v2417 = vld [vmem:[%s2416] sm:$0xff]
  %v2418 = vld [vmem:[%s2416 + $0x8] sm:$0xff]
  %v2419 = vld [vmem:[%s2416 + $0x10] sm:$0xff]
  %v2420 = vld [vmem:[%s2416 + $0x18] sm:$0xff]
  %v2421 = vld [vmem:[%s2416 + $0x20] sm:$0xff]
  %v2422 = vld [vmem:[%s2416 + $0x28] sm:$0xff]
  %v2423 = vld [vmem:[%s2416 + $0x30] sm:$0xff]
  %v2424 = vld [vmem:[%s2416 + $0x38] sm:$0xff]
  %v2425 = vld [vmem:[%s2416 + $0x40] sm:$0xff]
  %v2426 = vld [vmem:[%s2416 + $0x48] sm:$0xff]
  %v2427 = vld [vmem:[%s2416 + $0x50] sm:$0xff]
  %v2428 = vld [vmem:[%s2416 + $0x58] sm:$0xff]
  %v2429 = vld [vmem:[%s2416 + $0x60] sm:$0xff]
  %v2430 = vld [vmem:[%s2416 + $0x68] sm:$0xff]
  %v2431 = vld [vmem:[%s2416 + $0x70] sm:$0xff]
  %v2432 = vld [vmem:[%s2416 + $0x78] sm:$0xff]
  %2433 = vmatprep.subr.mxu0 0.0
  %2434 = vmatpush1.msra.mxu0 %v2417
  %2435 = vmatprep.subr.mxu0 0.0
  %2436 = vmatpush1.msra.mxu0 %v2418
  %2437 = vmatprep.subr.mxu0 0.0
  %2438 = vmatpush1.msra.mxu0 %v2419
  %2439 = vmatprep.subr.mxu0 0.0
  %2440 = vmatpush1.msra.mxu0 %v2420
  %2441 = vmatprep.subr.mxu0 0.0
  %2442 = vmatpush1.msra.mxu0 %v2421
  %2443 = vmatprep.subr.mxu0 0.0
  %2444 = vmatpush1.msra.mxu0 %v2422
  %2445 = vmatprep.subr.mxu0 0.0
  %2446 = vmatpush1.msra.mxu0 %v2423
  %2447 = vmatprep.subr.mxu0 0.0
  %2448 = vmatpush1.msra.mxu0 %v2424
  %2449 = vmatprep.subr.mxu0 0.0
  %2450 = vmatpush1.msra.mxu0 %v2425
  %2451 = vmatprep.subr.mxu0 0.0
  %2452 = vmatpush1.msra.mxu0 %v2426
  %2453 = vmatprep.subr.mxu0 0.0
  %2454 = vmatpush1.msra.mxu0 %v2427
  %2455 = vmatprep.subr.mxu0 0.0
  %2456 = vmatpush1.msra.mxu0 %v2428
  %2457 = vmatprep.subr.mxu0 0.0
  %2458 = vmatpush1.msra.mxu0 %v2429
  %2459 = vmatprep.subr.mxu0 0.0
  %2460 = vmatpush1.msra.mxu0 %v2430
  %2461 = vmatprep.subr.mxu0 0.0
  %2462 = vmatpush1.msra.mxu0 %v2431
  %2463 = vmatprep.subr.mxu0 0.0
  %2464 = vmatpush1.msra.mxu0 %v2432
  %2465 = vmatprep.subr.mxu0 0.0
  %2466 = vmatpush1.msra.mxu0 0.0
  %2467 = vmatprep.subr.mxu0 0.0
  %2468 = vmatpush1.msra.mxu0 0.0
  %2469 = vmatprep.subr.mxu0 0.0
  %2470 = vmatpush1.msra.mxu0 0.0
  %2471 = vmatprep.subr.mxu0 0.0
  %2472 = vmatpush1.msra.mxu0 0.0
  %2473 = vmatprep.subr.mxu0 0.0
  %2474 = vmatpush1.msra.mxu0 0.0
  %2475 = vmatprep.subr.mxu0 0.0
  %2476 = vmatpush1.msra.mxu0 0.0
  %2477 = vmatprep.subr.mxu0 0.0
  %2478 = vmatpush1.msra.mxu0 0.0
  %2479 = vmatprep.subr.mxu0 0.0
  %2480 = vmatpush1.msra.mxu0 0.0
  %2481 = vmatprep.subr.mxu0 0.0
  %2482 = vmatpush1.msra.mxu0 0.0
  %2483 = vmatprep.subr.mxu0 0.0
  %2484 = vmatpush1.msra.mxu0 0.0
  %2485 = vmatprep.subr.mxu0 0.0
  %2486 = vmatpush1.msra.mxu0 0.0
  %2487 = vmatprep.subr.mxu0 0.0
  %2488 = vmatpush1.msra.mxu0 0.0
  %2489 = vmatprep.subr.mxu0 0.0
  %2490 = vmatpush1.msra.mxu0 0.0
  %2491 = vmatprep.subr.mxu0 0.0
  %2492 = vmatpush1.msra.mxu0 0.0
  %2493 = vmatprep.subr.mxu0 0.0
  %2494 = vmatpush1.msra.mxu0 0.0
  %2495 = vmatprep.subr.mxu0 0.0
  %2496 = vmatpush1.msra.mxu0 0.0
  %2497 = vmatprep.mubr.f32.mxu0 0.0
  %2498 = vmatmul.mubr.f32.gmra.mrb[0].mxu0 %v2229
  %v2499 = vpop.f32.mrb[0].mxu0
  %v2500 = vadd.f32 0.0, %v2499
  %v2501 = vpop.f32.mrb[0].mxu0
  %2502 = vmatprep.mubr.f32.mxu0 0.0
  %2503 = vmatmul.mubr.f32.gmra.mrb[0].mxu0 %v2230
  %v2504 = vpop.f32.mrb[0].mxu0
  %v2505 = vadd.f32 0.0, %v2504
  %v2506 = vpop.f32.mrb[0].mxu0
  %2507 = vdwg.mxu0
  %v2508 = vadd.f32 %v2408, %v2500
  %v2509 = vadd.f32 %v2413, %v2505
  %s2510 = scalar_lea.vmem %s5, 384
  %v2511 = vld [vmem:[%s2510] sm:$0xff]
  %v2512 = vld [vmem:[%s2510 + $0x8] sm:$0xff]
  %v2513 = vld [vmem:[%s2510 + $0x10] sm:$0xff]
  %v2514 = vld [vmem:[%s2510 + $0x18] sm:$0xff]
  %v2515 = vld [vmem:[%s2510 + $0x20] sm:$0xff]
  %v2516 = vld [vmem:[%s2510 + $0x28] sm:$0xff]
  %v2517 = vld [vmem:[%s2510 + $0x30] sm:$0xff]
  %v2518 = vld [vmem:[%s2510 + $0x38] sm:$0xff]
  %v2519 = vld [vmem:[%s2510 + $0x40] sm:$0xff]
  %v2520 = vld [vmem:[%s2510 + $0x48] sm:$0xff]
  %v2521 = vld [vmem:[%s2510 + $0x50] sm:$0xff]
  %v2522 = vld [vmem:[%s2510 + $0x58] sm:$0xff]
  %v2523 = vld [vmem:[%s2510 + $0x60] sm:$0xff]
  %v2524 = vld [vmem:[%s2510 + $0x68] sm:$0xff]
  %v2525 = vld [vmem:[%s2510 + $0x70] sm:$0xff]
  %v2526 = vld [vmem:[%s2510 + $0x78] sm:$0xff]
  %2527 = vmatprep.subr.mxu0 0.0
  %2528 = vmatpush1.msra.mxu0 %v2511
  %2529 = vmatprep.subr.mxu0 0.0
  %2530 = vmatpush1.msra.mxu0 %v2512
  %2531 = vmatprep.subr.mxu0 0.0
  %2532 = vmatpush1.msra.mxu0 %v2513
  %2533 = vmatprep.subr.mxu0 0.0
  %2534 = vmatpush1.msra.mxu0 %v2514
  %2535 = vmatprep.subr.mxu0 0.0
  %2536 = vmatpush1.msra.mxu0 %v2515
  %2537 = vmatprep.subr.mxu0 0.0
  %2538 = vmatpush1.msra.mxu0 %v2516
  %2539 = vmatprep.subr.mxu0 0.0
  %2540 = vmatpush1.msra.mxu0 %v2517
  %2541 = vmatprep.subr.mxu0 0.0
  %2542 = vmatpush1.msra.mxu0 %v2518
  %2543 = vmatprep.subr.mxu0 0.0
  %2544 = vmatpush1.msra.mxu0 %v2519
  %2545 = vmatprep.subr.mxu0 0.0
  %2546 = vmatpush1.msra.mxu0 %v2520
  %2547 = vmatprep.subr.mxu0 0.0
  %2548 = vmatpush1.msra.mxu0 %v2521
  %2549 = vmatprep.subr.mxu0 0.0
  %2550 = vmatpush1.msra.mxu0 %v2522
  %2551 = vmatprep.subr.mxu0 0.0
  %2552 = vmatpush1.msra.mxu0 %v2523
  %2553 = vmatprep.subr.mxu0 0.0
  %2554 = vmatpush1.msra.mxu0 %v2524
  %2555 = vmatprep.subr.mxu0 0.0
  %2556 = vmatpush1.msra.mxu0 %v2525
  %2557 = vmatprep.subr.mxu0 0.0
  %2558 = vmatpush1.msra.mxu0 %v2526
  %2559 = vmatprep.subr.mxu0 0.0
  %2560 = vmatpush1.msra.mxu0 0.0
  %2561 = vmatprep.subr.mxu0 0.0
  %2562 = vmatpush1.msra.mxu0 0.0
  %2563 = vmatprep.subr.mxu0 0.0
  %2564 = vmatpush1.msra.mxu0 0.0
  %2565 = vmatprep.subr.mxu0 0.0
  %2566 = vmatpush1.msra.mxu0 0.0
  %2567 = vmatprep.subr.mxu0 0.0
  %2568 = vmatpush1.msra.mxu0 0.0
  %2569 = vmatprep.subr.mxu0 0.0
  %2570 = vmatpush1.msra.mxu0 0.0
  %2571 = vmatprep.subr.mxu0 0.0
  %2572 = vmatpush1.msra.mxu0 0.0
  %2573 = vmatprep.subr.mxu0 0.0
  %2574 = vmatpush1.msra.mxu0 0.0
  %2575 = vmatprep.subr.mxu0 0.0
  %2576 = vmatpush1.msra.mxu0 0.0
  %2577 = vmatprep.subr.mxu0 0.0
  %2578 = vmatpush1.msra.mxu0 0.0
  %2579 = vmatprep.subr.mxu0 0.0
  %2580 = vmatpush1.msra.mxu0 0.0
  %2581 = vmatprep.subr.mxu0 0.0
  %2582 = vmatpush1.msra.mxu0 0.0
  %2583 = vmatprep.subr.mxu0 0.0
  %2584 = vmatpush1.msra.mxu0 0.0
  %2585 = vmatprep.subr.mxu0 0.0
  %2586 = vmatpush1.msra.mxu0 0.0
  %2587 = vmatprep.subr.mxu0 0.0
  %2588 = vmatpush1.msra.mxu0 0.0
  %2589 = vmatprep.subr.mxu0 0.0
  %2590 = vmatpush1.msra.mxu0 0.0
  %2591 = vmatprep.mubr.f32.mxu0 0.0
  %2592 = vmatmul.mubr.f32.gmra.mrb[0].mxu0 %v2231
  %v2593 = vpop.f32.mrb[0].mxu0
  %v2594 = vadd.f32 0.0, %v2593
  %v2595 = vpop.f32.mrb[0].mxu0
  %2596 = vmatprep.mubr.f32.mxu0 0.0
  %2597 = vmatmul.mubr.f32.gmra.mrb[0].mxu0 %v2232
  %v2598 = vpop.f32.mrb[0].mxu0
  %v2599 = vadd.f32 0.0, %v2598
  %v2600 = vpop.f32.mrb[0].mxu0
  %2601 = vdwg.mxu0
  %v2602 = vadd.f32 %v2508, %v2594
  %v2603 = vadd.f32 %v2509, %v2599
  %v2604 = vld [vmem:[%s6] sm:$0x1]
  %v2606 = vlaneseq
  %v2607 = vshrl.u32 %v2606, 7
  %v2608 = vsub.s32 0, %v2607
  %v2609 = vrot.slane %v2604, %v2608
  %v2611 = vadd.f32 %v2602, %v2609
  %v2612 = vadd.f32 %v2603, %v2609
  %v2613 = vmax.f32 %v2611, 0.0
  %v2614 = vmax.f32 %v2612, 0.0
  %v2615 = vld [vmem:[%s7] sm:$0xff]
  %v2616 = vld [vmem:[%s7 + $0x8] sm:$0xff]
  %v2617 = vld [vmem:[%s7 + $0x10] sm:$0xff]
  %v2618 = vld [vmem:[%s7 + $0x18] sm:$0xff]
  %v2619 = vld [vmem:[%s7 + $0x20] sm:$0xff]
  %v2620 = vld [vmem:[%s7 + $0x28] sm:$0xff]
  %v2621 = vld [vmem:[%s7 + $0x30] sm:$0x3]
  %v2622 = vld [vmem:[%s8] sm:$0x1]
  %v2624 = vlaneseq
  %v2625 = vshrl.u32 %v2624, 7
  %v2626 = vsub.s32 0, %v2625
  %v2627 = vrot.slane %v2622, %v2626
  %vm2629 = vcmask 408576
  %v2631 = vsel %vm2629, %v2613, 0
  %v2634 = vsel %vm2629, %v2614, 0
  %vm2636 = vcmask 1041408
  %v2638 = vsel %vm2636, %v2621, 0
  %2640 = vmatprep.subr.mxu0 0.0
  %2641 = vmatpush1.msra.mxu0 %v2615
  %2642 = vmatprep.subr.mxu0 0.0
  %2643 = vmatpush1.msra.mxu0 %v2616
  %2644 = vmatprep.subr.mxu0 0.0
  %2645 = vmatpush1.msra.mxu0 %v2617
  %2646 = vmatprep.subr.mxu0 0.0
  %2647 = vmatpush1.msra.mxu0 %v2618
  %2648 = vmatprep.subr.mxu0 0.0
  %2649 = vmatpush1.msra.mxu0 %v2619
  %2650 = vmatprep.subr.mxu0 0.0
  %2651 = vmatpush1.msra.mxu0 %v2620
  %2652 = vmatprep.subr.mxu0 0.0
  %2653 = vmatpush1.msra.mxu0 %v2638
  %2654 = vmatprep.subr.mxu0 0.0
  %2655 = vmatpush1.msra.mxu0 0.0
  %2656 = vmatprep.subr.mxu0 0.0
  %2657 = vmatpush1.msra.mxu0 0.0
  %2658 = vmatprep.subr.mxu0 0.0
  %2659 = vmatpush1.msra.mxu0 0.0
  %2660 = vmatprep.subr.mxu0 0.0
  %2661 = vmatpush1.msra.mxu0 0.0
  %2662 = vmatprep.subr.mxu0 0.0
  %2663 = vmatpush1.msra.mxu0 0.0
  %2664 = vmatprep.subr.mxu0 0.0
  %2665 = vmatpush1.msra.mxu0 0.0
  %2666 = vmatprep.subr.mxu0 0.0
  %2667 = vmatpush1.msra.mxu0 0.0
  %2668 = vmatprep.subr.mxu0 0.0
  %2669 = vmatpush1.msra.mxu0 0.0
  %2670 = vmatprep.subr.mxu0 0.0
  %2671 = vmatpush1.msra.mxu0 0.0
  %2672 = vmatprep.subr.mxu0 0.0
  %2673 = vmatpush1.msra.mxu0 0.0
  %2674 = vmatprep.subr.mxu0 0.0
  %2675 = vmatpush1.msra.mxu0 0.0
  %2676 = vmatprep.subr.mxu0 0.0
  %2677 = vmatpush1.msra.mxu0 0.0
  %2678 = vmatprep.subr.mxu0 0.0
  %2679 = vmatpush1.msra.mxu0 0.0
  %2680 = vmatprep.subr.mxu0 0.0
  %2681 = vmatpush1.msra.mxu0 0.0
  %2682 = vmatprep.subr.mxu0 0.0
  %2683 = vmatpush1.msra.mxu0 0.0
  %2684 = vmatprep.subr.mxu0 0.0
  %2685 = vmatpush1.msra.mxu0 0.0
  %2686 = vmatprep.subr.mxu0 0.0
  %2687 = vmatpush1.msra.mxu0 0.0
  %2688 = vmatprep.subr.mxu0 0.0
  %2689 = vmatpush1.msra.mxu0 0.0
  %2690 = vmatprep.subr.mxu0 0.0
  %2691 = vmatpush1.msra.mxu0 0.0
  %2692 = vmatprep.subr.mxu0 0.0
  %2693 = vmatpush1.msra.mxu0 0.0
  %2694 = vmatprep.subr.mxu0 0.0
  %2695 = vmatpush1.msra.mxu0 0.0
  %2696 = vmatprep.subr.mxu0 0.0
  %2697 = vmatpush1.msra.mxu0 0.0
  %2698 = vmatprep.subr.mxu0 0.0
  %2699 = vmatpush1.msra.mxu0 0.0
  %2700 = vmatprep.subr.mxu0 0.0
  %2701 = vmatpush1.msra.mxu0 0.0
  %2702 = vmatprep.subr.mxu0 0.0
  %2703 = vmatpush1.msra.mxu0 0.0
  %2704 = vmatprep.mubr.f32.mxu0 0.0
  %2705 = vmatmul.mubr.f32.gmra.mrb[0].mxu0 %v2631
  %v2706 = vpop.f32.mrb[0].mxu0
  %v2707 = vadd.f32 %v2627, %v2706
  %v2708 = vpop.f32.mrb[0].mxu0
  %2709 = vmatprep.mubr.f32.mxu0 0.0
  %2710 = vmatmul.mubr.f32.gmra.mrb[0].mxu0 %v2634
  %v2711 = vpop.f32.mrb[0].mxu0
  %v2712 = vadd.f32 %v2627, %v2711
  %v2713 = vpop.f32.mrb[0].mxu0
  %2714 = vdwg.mxu0
  %vm2715 = vcmask 80896
  %v2716 = vsel %vm2715, %v2707, -inf
  %2717 = vmax.xlane.f32.xlu0 %v2716
  %v2718 = vpop.xlane.xlu0 %2717
  %v2719 = vsel %vm2715, %v2712, -inf
  %2720 = vmax.xlane.f32.xlu0 %v2719
  %v2721 = vpop.xlane.xlu0 %2720
  %v2722 = vsub.f32 %v2707, %v2718
  %v2723 = vsub.f32 %v2712, %v2721
  %v2724 = vmul.f32 %v2722, 1.442695
  %v2725 = vpow.pop %v2724
  %v2726 = vmul.f32 %v2723, 1.442695
  %v2727 = vpow.pop %v2726
  %v2728 = vsel %vm2715, %v2725, 0.0
  %2729 = vadd.xlane.f32.xlu0 %v2728
  %v2730 = vpop.xlane.xlu0 %2729
  %v2731 = vsel %vm2715, %v2727, 0.0
  %2732 = vadd.xlane.f32.xlu0 %v2731
  %v2733 = vpop.xlane.xlu0 %2732
  %v2734 = vlog2.pop %v2730
  %v2735 = vmul.f32 %v2734, 0.6931472
  %v2736 = vlog2.pop %v2733
  %v2737 = vmul.f32 %v2736, 0.6931472
  %v2738 = vadd.f32 %v2718, %v2735
  %v2739 = vadd.f32 %v2721, %v2737
  %v2740 = vsub.f32 %v2707, %v2738
  %v2741 = vsub.f32 %v2712, %v2739
  %2742 = vst.msk [vmem:[%s9] sm:$0xff] %vm2715, %v2740
  %2743 = vst.msk [vmem:[%s9 + $0x8] sm:$0xff] %vm2715, %v2741
  // Predicated region
  $region38: #{net_forward.1} parent=0 // pred_check
    _
  $region39: #{net_forward.1} parent=0 // pred_check_branch
    %2745 = sbr.rel (0) target = $region41
  $region40: #{net_forward.1} parent=0 // pred_region
    _
  $region41: #{net_forward.1} parent=0 // pred_fallthru
    _
  // Predicated region
  $region42: #{net_forward.1} parent=0 // pred_check
    _
  $region43: #{net_forward.1} parent=0 // pred_check_branch
    %2747 = sbr.rel (0) target = $region45
  $region44: #{net_forward.1} parent=0 // pred_region
    _
  $region45: #{net_forward.1} parent=0 // pred_fallthru
    _

</llo_original>
